<compile_context>
chip_gen: v7x
topology: tpu7x:2x2x1
jax: 0.10.0
libtpu: 0.0.40
codegen_flags: <defaults>
</compile_context>

<pallas_src>
import functools

import jax
import jax.numpy as jnp
from jax.experimental import pallas as pl
from jax.experimental.pallas import tpu as pltpu


def _round_up(x, m):
    return (x + m - 1) // m * m


def _pick_row_tile(m, target=512):
    """Largest power-of-two tile (<= target) that divides m; else full m."""
    for tm in (1024, 512, 256, 128, 64, 32, 16, 8):
        if tm <= target and tm <= m and m % tm == 0:
            return tm
    return m


# ---------------------------------------------------------------------------
# Kernel A: Conv1d (as K shifted matmuls) + bias + ReLU + GRU input projection
# ---------------------------------------------------------------------------
def _enc_gi_kernel(xpad_ref, wc_ref, bc_ref, wi_ref, bgi_ref, gi_ref,
                   *, K, Bp, TM):
    i = pl.program_id(0)
    base = pl.multiple_of(i * TM, TM)

    # Conv as K shifted matmuls over the resident time-major padded input.
    # Output row (t, b) = flat row r needs input rows r + k*Bp (k = 0..K-1).
    acc = jnp.dot(xpad_ref[pl.ds(base, TM), :], wc_ref[0],
                  preferred_element_type=jnp.float32)
    for k in range(1, K):
        acc += jnp.dot(xpad_ref[pl.ds(base + k * Bp, TM), :], wc_ref[k],
                       preferred_element_type=jnp.float32)
    feats = jnp.maximum(acc + bc_ref[...], 0.0)                    # (TM, C_enc)

    # Hoisted GRU input projection; b_i (+ b_hr, b_hz) already folded into bgi.
    gi = jnp.dot(feats, wi_ref[...], preferred_element_type=jnp.float32)
    gi_ref[...] = (gi + bgi_ref[...]).astype(gi_ref.dtype)


# ---------------------------------------------------------------------------
# Kernel B: GRU recurrence over the whole sequence (in-kernel fori_loop).
# Gate order follows PyTorch nn.GRU: [r, z, n].
# ---------------------------------------------------------------------------
def _gru_kernel(gi_ref, wh_ref, bhn_ref, out_ref, *, T, H):
    wh = wh_ref[...]                 # (H, Gp)   fused [W_hr | W_hz | W_hn] (padded)
    bhn = bhn_ref[...]               # (1, H)    b_hn (must stay inside recurrence)
    h0 = jnp.zeros(out_ref.shape, jnp.float32)

    def step(t, h):
        gi = gi_ref[t]               # (Bp, Gp)  precomputed input gates
        gh = jnp.dot(h, wh, preferred_element_type=jnp.float32)   # (Bp, Gp)
        r = jax.nn.sigmoid(gi[:, 0:H] + gh[:, 0:H])
        z = jax.nn.sigmoid(gi[:, H:2 * H] + gh[:, H:2 * H])
        n = jnp.tanh(gi[:, 2 * H:3 * H] + r * (gh[:, 2 * H:3 * H] + bhn))
        return (1.0 - z) * n + z * h

    h_last = jax.lax.fori_loop(0, T, step, h0,
                               unroll=True if T <= 32 else None)
    out_ref[...] = h_last.astype(out_ref.dtype)


# ---------------------------------------------------------------------------
# Genc_Gar forward
# ---------------------------------------------------------------------------
@jax.jit
def genc_gar_forward(x, params):
    conv_w = params["conv_w"]        # (C_enc, C_in, K)
    conv_b = params["conv_b"]        # (C_enc,)
    wi = params["gru_wi"]            # (3, C_enc, H)  gate order [r, z, n]
    wh = params["gru_wh"]            # (3, H, H)
    bi = params["gru_bi"]            # (3, 1, H)
    bh = params["gru_bh"]            # (3, 1, H)

    B, C_in, T = x.shape
    C_enc, _, K = conv_w.shape
    H = wh.shape[-1]
    pad = (K - 1) // 2

    Bp = _round_up(B, 8)             # sublane pad: free, keeps slices aligned
    G = 3 * H
    Gp = _round_up(G, 128)           # lane-dense fused-gate width

    # ---- host-side layout prep (tiny: parameter reshapes + one input transpose)
    x_tm = jnp.transpose(x, (2, 0, 1))                             # (T, B, C_in)
    x_tm = jnp.pad(x_tm, ((pad, pad), (0, Bp - B), (0, 0)))        # (T+2p, Bp, C_in)
    x_rows = x_tm.reshape((T + 2 * pad) * Bp, C_in)                # time-major rows

    wc = jnp.transpose(conv_w, (2, 1, 0))                          # (K, C_in, C_enc)
    bc = conv_b.reshape(1, C_enc)

    # fused GRU weights: [r | z | n] along the lane dim, padded to Gp
    wi_cat = jnp.concatenate([wi[0], wi[1], wi[2]], axis=1)        # (C_enc, 3H)
    wh_cat = jnp.concatenate([wh[0], wh[1], wh[2]], axis=1)        # (H, 3H)
    # fold b_i (all gates) and b_h (r, z) into the GI bias; keep b_hn separate
    bgi = jnp.concatenate([bi[0] + bh[0], bi[1] + bh[1], bi[2]], axis=1)  # (1, 3H)
    wi_p = jnp.pad(wi_cat, ((0, 0), (0, Gp - G)))
    wh_p = jnp.pad(wh_cat, ((0, 0), (0, Gp - G)))
    bgi_p = jnp.pad(bgi, ((0, 0), (0, Gp - G)))
    bhn = bh[2]                                                    # (1, H)

    # ---- kernel A: conv + relu + input projection, tiled over M = T*Bp rows
    M = T * Bp
    TM = _pick_row_tile(M)
    n_rows_in = (T + 2 * pad) * Bp

    gi_flat = pl.pallas_call(
        functools.partial(_enc_gi_kernel, K=K, Bp=Bp, TM=TM),
        out_shape=jax.ShapeDtypeStruct((M, Gp), jnp.float32),
        grid_spec=pltpu.PrefetchScalarGridSpec(
            num_scalar_prefetch=0,
            grid=(M // TM,),
            in_specs=[
                pl.BlockSpec((n_rows_in, C_in), lambda i: (0, 0)),    # resident
                pl.BlockSpec((K, C_in, C_enc), lambda i: (0, 0, 0)),  # resident
                pl.BlockSpec((1, C_enc), lambda i: (0, 0)),
                pl.BlockSpec((C_enc, Gp), lambda i: (0, 0)),
                pl.BlockSpec((1, Gp), lambda i: (0, 0)),
            ],
            out_specs=pl.BlockSpec((TM, Gp), lambda i: (i, 0)),
        ),
        compiler_params=pltpu.CompilerParams(
            dimension_semantics=("parallel",),        # shards across TCs on v7x
            vmem_limit_bytes=32 * 1024 * 1024),       # safe on v5e/v6e/v7x
    )(x_rows, wc, bc, wi_p, bgi_p)

    gi_tbg = gi_flat.reshape(T, Bp, Gp)               # contiguous: free reshape

    # ---- kernel B: GRU recurrence, whole sequence resident, one grid step
    h_last = pl.pallas_call(
        functools.partial(_gru_kernel, T=T, H=H),
        out_shape=jax.ShapeDtypeStruct((Bp, H), jnp.float32),
        grid_spec=pltpu.PrefetchScalarGridSpec(
            num_scalar_prefetch=0,
            grid=(1,),
            in_specs=[
                pl.BlockSpec((T, Bp, Gp), lambda i: (0, 0, 0)),
                pl.BlockSpec((H, Gp), lambda i: (0, 0)),
                pl.BlockSpec((1, H), lambda i: (0, 0)),
            ],
            out_specs=pl.BlockSpec((Bp, H), lambda i: (0, 0)),
        ),
        compiler_params=pltpu.CompilerParams(
            dimension_semantics=("arbitrary",),
            vmem_limit_bytes=32 * 1024 * 1024),
    )(gi_tbg, wh_p, bhn)

    # x = x[:, -1, :]  -> last-timestep GRU output == final hidden state
    return h_last[:B]


# ---------------------------------------------------------------------------
# Pure-JAX reference (for correctness check)
# ---------------------------------------------------------------------------
def reference_forward(x, params):
    B, C_in, T = x.shape
    w, b = params["conv_w"], params["conv_b"]
    C_out, _, K = w.shape
    pad = (K - 1) // 2
    x_pad = jnp.pad(x, ((0, 0), (0, 0), (pad, pad)))
    patches = jnp.stack([x_pad[:, :, k:k + T] for k in range(K)], axis=-1)
    patches = jnp.transpose(patches, (0, 2, 1, 3)).reshape(B * T, C_in * K)
    feats = jnp.maximum(patches @ w.reshape(C_out, C_in * K).T + b, 0.0)
    feats = feats.reshape(B, T, C_out)

    Wi, Wh, bi, bh = (params["gru_wi"], params["gru_wh"],
                      params["gru_bi"], params["gru_bh"])
    H = Wh.shape[-1]

    def step(h, x_t):
        r = jax.nn.sigmoid(x_t @ Wi[0] + bi[0] + h @ Wh[0] + bh[0])
        z = jax.nn.sigmoid(x_t @ Wi[1] + bi[1] + h @ Wh[1] + bh[1])
        n = jnp.tanh(x_t @ Wi[2] + bi[2] + r * (h @ Wh[2] + bh[2]))
        return (1.0 - z) * n + z * h, None

    h0 = jnp.zeros((B, H), jnp.float32)
    h_last, _ = jax.lax.scan(step, h0, jnp.transpose(feats, (1, 0, 2)))
    return h_last


if __name__ == "__main__":
    # Small shapes: batch=2, in-channels=6, seq=16, encoder channels=32, hidden=32
    B, C_in, T = 2, 6, 16
    C_enc, H, K = 32, 32, 3

    key = jax.random.PRNGKey(0)
    k_x, k_cw, k_cb, k_wi, k_wh, k_bi, k_bh = jax.random.split(key, 7)

    x = jax.random.normal(k_x, (B, C_in, T), dtype=jnp.float32)

    params = {
        "conv_w": 0.1 * jax.random.normal(k_cw, (C_enc, C_in, K), dtype=jnp.float32),
        "conv_b": 0.1 * jax.random.normal(k_cb, (C_enc,), dtype=jnp.float32),
        # gate order [r, z, n]; stored pre-transposed as (in_dim, H) per gate
        "gru_wi": 0.1 * jax.random.normal(k_wi, (3, C_enc, H), dtype=jnp.float32),
        "gru_wh": 0.1 * jax.random.normal(k_wh, (3, H, H), dtype=jnp.float32),
        "gru_bi": 0.1 * jax.random.normal(k_bi, (3, 1, H), dtype=jnp.float32),
        "gru_bh": 0.1 * jax.random.normal(k_bh, (3, 1, H), dtype=jnp.float32),
    }

    out = genc_gar_forward(x, params)
    out = jax.block_until_ready(out)

    ref = jax.block_until_ready(reference_forward(x, params))
    assert out.shape == (B, H), out.shape
    assert jnp.allclose(out, ref, rtol=1e-3, atol=1e-3), "mismatch vs reference"

    print("KERNEL_OK")
</pallas_src>

<mosaic_0001>
module attributes {stable_mosaic.version = 11 : i64} {
  func.func @_enc_gi_kernel(%arg0: i32, %arg1: memref<144x6xf32, #tpu.memory_space<vmem>>, %arg2: memref<3x6x32xf32, #tpu.memory_space<vmem>>, %arg3: memref<1x32xf32, #tpu.memory_space<vmem>>, %arg4: memref<32x128xf32, #tpu.memory_space<vmem>>, %arg5: memref<1x128xf32, #tpu.memory_space<vmem>>, %arg6: memref<128x128xf32, #tpu.memory_space<vmem>>) attributes {dimension_semantics = [#tpu.dimension_semantics<parallel>], iteration_bounds = array<i64: 1>, scalar_prefetch = 0 : i64, scratch_operands = 0 : i64, tpu.core_type = #tpu.core_type<tc>, window_params = [{pipeline_mode = #tpu.pipeline_mode<synchronous>, transform_indices = @transform_0, window_bounds = array<i64: 144, 6>}, {pipeline_mode = #tpu.pipeline_mode<synchronous>, transform_indices = @transform_1, window_bounds = array<i64: 3, 6, 32>}, {pipeline_mode = #tpu.pipeline_mode<synchronous>, transform_indices = @transform_2, window_bounds = array<i64: 1, 32>}, {pipeline_mode = #tpu.pipeline_mode<synchronous>, transform_indices = @transform_3, window_bounds = array<i64: 32, 128>}, {pipeline_mode = #tpu.pipeline_mode<synchronous>, transform_indices = @transform_4, window_bounds = array<i64: 1, 128>}, {transform_indices = @transform_5, window_bounds = array<i64: 128, 128>}]} {
    %c128_i32 = arith.constant 128 : i32
    %0 = arith.muli %arg0, %c128_i32 : i32
    %1 = tpu.assume_multiple %0, 128 : i32
    %2 = arith.index_cast %1 : i32 to index
    %c0 = arith.constant 0 : index
    %3 = vector.load %arg1[%2, %c0] : memref<144x6xf32, #tpu.memory_space<vmem>>, vector<128x6xf32>
    %c0_0 = arith.constant 0 : index
    %c0_1 = arith.constant 0 : index
    %c0_2 = arith.constant 0 : index
    %4 = vector.load %arg2[%c0_0, %c0_1, %c0_2] : memref<3x6x32xf32, #tpu.memory_space<vmem>>, vector<1x6x32xf32>
    %5 = vector.shape_cast %4 : vector<1x6x32xf32> to vector<6x32xf32>
    %cst = arith.constant dense<0.000000e+00> : vector<128x32xf32>
    %6 = tpu.matmul %3, %5, %cst {dimension_numbers = #tpu.dot_dimension_numbers<[1], [0], [0], [1], [0, 0, 1, 1], [], []>} : vector<128x6xf32>, vector<6x32xf32>, vector<128x32xf32> -> vector<128x32xf32>
    %c8_i32 = arith.constant 8 : i32
    %7 = arith.addi %1, %c8_i32 : i32
    %8 = arith.index_cast %7 : i32 to index
    %c0_3 = arith.constant 0 : index
    %9 = vector.load %arg1[%8, %c0_3] : memref<144x6xf32, #tpu.memory_space<vmem>>, vector<128x6xf32>
    %c1 = arith.constant 1 : index
    %c0_4 = arith.constant 0 : index
    %c0_5 = arith.constant 0 : index
    %10 = vector.load %arg2[%c1, %c0_4, %c0_5] : memref<3x6x32xf32, #tpu.memory_space<vmem>>, vector<1x6x32xf32>
    %11 = vector.shape_cast %10 : vector<1x6x32xf32> to vector<6x32xf32>
    %cst_6 = arith.constant dense<0.000000e+00> : vector<128x32xf32>
    %12 = tpu.matmul %9, %11, %cst_6 {dimension_numbers = #tpu.dot_dimension_numbers<[1], [0], [0], [1], [0, 0, 1, 1], [], []>} : vector<128x6xf32>, vector<6x32xf32>, vector<128x32xf32> -> vector<128x32xf32>
    %13 = arith.addf %6, %12 : vector<128x32xf32>
    %c16_i32 = arith.constant 16 : i32
    %14 = arith.addi %1, %c16_i32 : i32
    %15 = arith.index_cast %14 : i32 to index
    %c0_7 = arith.constant 0 : index
    %16 = vector.load %arg1[%15, %c0_7] : memref<144x6xf32, #tpu.memory_space<vmem>>, vector<128x6xf32>
    %c2 = arith.constant 2 : index
    %c0_8 = arith.constant 0 : index
    %c0_9 = arith.constant 0 : index
    %17 = vector.load %arg2[%c2, %c0_8, %c0_9] : memref<3x6x32xf32, #tpu.memory_space<vmem>>, vector<1x6x32xf32>
    %18 = vector.shape_cast %17 : vector<1x6x32xf32> to vector<6x32xf32>
    %cst_10 = arith.constant dense<0.000000e+00> : vector<128x32xf32>
    %19 = tpu.matmul %16, %18, %cst_10 {dimension_numbers = #tpu.dot_dimension_numbers<[1], [0], [0], [1], [0, 0, 1, 1], [], []>} : vector<128x6xf32>, vector<6x32xf32>, vector<128x32xf32> -> vector<128x32xf32>
    %20 = arith.addf %13, %19 : vector<128x32xf32>
    %c0_11 = arith.constant 0 : index
    %c0_12 = arith.constant 0 : index
    %21 = vector.load %arg3[%c0_11, %c0_12] : memref<1x32xf32, #tpu.memory_space<vmem>>, vector<1x32xf32>
    %22 = vector.broadcast %21 : vector<1x32xf32> to vector<128x32xf32>
    %23 = arith.addf %20, %22 : vector<128x32xf32>
    %cst_13 = arith.constant 0.000000e+00 : f32
    %24 = vector.broadcast %cst_13 : f32 to vector<128x32xf32>
    %25 = arith.maximumf %23, %24 : vector<128x32xf32>
    %c0_14 = arith.constant 0 : index
    %c0_15 = arith.constant 0 : index
    %26 = vector.load %arg4[%c0_14, %c0_15] : memref<32x128xf32, #tpu.memory_space<vmem>>, vector<32x128xf32>
    %cst_16 = arith.constant dense<0.000000e+00> : vector<128x128xf32>
    %27 = tpu.matmul %25, %26, %cst_16 {dimension_numbers = #tpu.dot_dimension_numbers<[1], [0], [0], [1], [0, 0, 1, 1], [], []>} : vector<128x32xf32>, vector<32x128xf32>, vector<128x128xf32> -> vector<128x128xf32>
    %c0_17 = arith.constant 0 : index
    %c0_18 = arith.constant 0 : index
    %28 = vector.load %arg5[%c0_17, %c0_18] : memref<1x128xf32, #tpu.memory_space<vmem>>, vector<1x128xf32>
    %29 = vector.broadcast %28 : vector<1x128xf32> to vector<128x128xf32>
    %30 = arith.addf %27, %29 : vector<128x128xf32>
    %c0_19 = arith.constant 0 : index
    %c0_20 = arith.constant 0 : index
    %31 = vector.load %arg6[%c0_19, %c0_20] : memref<128x128xf32, #tpu.memory_space<vmem>>, vector<128x128xf32>
    tpu.vector_store %arg6[%c0_19, %c0_20], %30 {strides = array<i32>} : memref<128x128xf32, #tpu.memory_space<vmem>>, vector<128x128xf32>,
    return
  }
  func.func @transform_0(%arg0: i32) -> (i32, i32) {
    %c0_i32 = arith.constant 0 : i32
    %c0_i32_0 = arith.constant 0 : i32
    %c0_i32_1 = arith.constant 0 : i32
    return %c0_i32, %c0_i32_0 : i32, i32
  }
  func.func @transform_1(%arg0: i32) -> (i32, i32, i32) {
    %c0_i32 = arith.constant 0 : i32
    %c0_i32_0 = arith.constant 0 : i32
    %c0_i32_1 = arith.constant 0 : i32
    %c0_i32_2 = arith.constant 0 : i32
    return %c0_i32, %c0_i32_0, %c0_i32_1 : i32, i32, i32
  }
  func.func @transform_2(%arg0: i32) -> (i32, i32) {
    %c0_i32 = arith.constant 0 : i32
    %c0_i32_0 = arith.constant 0 : i32
    %c0_i32_1 = arith.constant 0 : i32
    return %c0_i32, %c0_i32_0 : i32, i32
  }
  func.func @transform_3(%arg0: i32) -> (i32, i32) {
    %c0_i32 = arith.constant 0 : i32
    %c0_i32_0 = arith.constant 0 : i32
    %c0_i32_1 = arith.constant 0 : i32
    return %c0_i32, %c0_i32_0 : i32, i32
  }
  func.func @transform_4(%arg0: i32) -> (i32, i32) {
    %c0_i32 = arith.constant 0 : i32
    %c0_i32_0 = arith.constant 0 : i32
    %c0_i32_1 = arith.constant 0 : i32
    return %c0_i32, %c0_i32_0 : i32, i32
  }
  func.func @transform_5(%arg0: i32) -> (i32, i32) {
    %c0_i32 = arith.constant 0 : i32
    %c0_i32_0 = arith.constant 0 : i32
    return %arg0, %c0_i32 : i32, i32
  }
}

module attributes {stable_mosaic.version = 11 : i64} {
  func.func @_gru_kernel(%arg0: i32, %arg1: memref<16x8x128xf32, #tpu.memory_space<vmem>>, %arg2: memref<32x128xf32, #tpu.memory_space<vmem>>, %arg3: memref<1x32xf32, #tpu.memory_space<vmem>>, %arg4: memref<8x32xf32, #tpu.memory_space<vmem>>) attributes {dimension_semantics = [#tpu.dimension_semantics<arbitrary>], iteration_bounds = array<i64: 1>, scalar_prefetch = 0 : i64, scratch_operands = 0 : i64, tpu.core_type = #tpu.core_type<tc>, window_params = [{pipeline_mode = #tpu.pipeline_mode<synchronous>, transform_indices = @transform_0, window_bounds = array<i64: 16, 8, 128>}, {pipeline_mode = #tpu.pipeline_mode<synchronous>, transform_indices = @transform_1, window_bounds = array<i64: 32, 128>}, {pipeline_mode = #tpu.pipeline_mode<synchronous>, transform_indices = @transform_2, window_bounds = array<i64: 1, 32>}, {pipeline_mode = #tpu.pipeline_mode<synchronous>, transform_indices = @transform_3, window_bounds = array<i64: 8, 32>}]} {
    %c0 = arith.constant 0 : index
    %c0_0 = arith.constant 0 : index
    %0 = vector.load %arg2[%c0, %c0_0] : memref<32x128xf32, #tpu.memory_space<vmem>>, vector<32x128xf32>
    %c0_1 = arith.constant 0 : index
    %c0_2 = arith.constant 0 : index
    %1 = vector.load %arg3[%c0_1, %c0_2] : memref<1x32xf32, #tpu.memory_space<vmem>>, vector<1x32xf32>
    %cst = arith.constant 0.000000e+00 : f32
    %2 = vector.broadcast %cst : f32 to vector<8x32xf32>
    %c0_i32 = arith.constant 0 : i32
    %3 = arith.index_cast %c0_i32 : i32 to index
    %c0_3 = arith.constant 0 : index
    %c0_4 = arith.constant 0 : index
    %4 = vector.load %arg1[%3, %c0_3, %c0_4] : memref<16x8x128xf32, #tpu.memory_space<vmem>>, vector<1x8x128xf32>
    %5 = vector.shape_cast %4 : vector<1x8x128xf32> to vector<8x128xf32>
    %cst_5 = arith.constant dense<0.000000e+00> : vector<8x128xf32>
    %6 = tpu.matmul %2, %0, %cst_5 {dimension_numbers = #tpu.dot_dimension_numbers<[1], [0], [0], [1], [0, 0, 1, 1], [], []>} : vector<8x32xf32>, vector<32x128xf32>, vector<8x128xf32> -> vector<8x128xf32>
    %7 = vector.extract_strided_slice %5 {offsets = [0, 0], sizes = [8, 32], strides = [1, 1]} : vector<8x128xf32> to vector<8x32xf32>
    %8 = vector.extract_strided_slice %6 {offsets = [0, 0], sizes = [8, 32], strides = [1, 1]} : vector<8x128xf32> to vector<8x32xf32>
    %9 = arith.addf %7, %8 : vector<8x32xf32>
    %10 = arith.negf %9 : vector<8x32xf32>
    %11 = math.exp %10 : vector<8x32xf32>
    %cst_6 = arith.constant 1.000000e+00 : f32
    %12 = vector.broadcast %cst_6 : f32 to vector<8x32xf32>
    %13 = arith.addf %12, %11 : vector<8x32xf32>
    %14 = arith.divf %12, %13 : vector<8x32xf32>
    %15 = vector.extract_strided_slice %5 {offsets = [0, 32], sizes = [8, 32], strides = [1, 1]} : vector<8x128xf32> to vector<8x32xf32>
    %16 = vector.extract_strided_slice %6 {offsets = [0, 32], sizes = [8, 32], strides = [1, 1]} : vector<8x128xf32> to vector<8x32xf32>
    %17 = arith.addf %15, %16 : vector<8x32xf32>
    %18 = arith.negf %17 : vector<8x32xf32>
    %19 = math.exp %18 : vector<8x32xf32>
    %cst_7 = arith.constant 1.000000e+00 : f32
    %20 = vector.broadcast %cst_7 : f32 to vector<8x32xf32>
    %21 = arith.addf %20, %19 : vector<8x32xf32>
    %22 = arith.divf %20, %21 : vector<8x32xf32>
    %23 = vector.extract_strided_slice %5 {offsets = [0, 64], sizes = [8, 32], strides = [1, 1]} : vector<8x128xf32> to vector<8x32xf32>
    %24 = vector.extract_strided_slice %6 {offsets = [0, 64], sizes = [8, 32], strides = [1, 1]} : vector<8x128xf32> to vector<8x32xf32>
    %25 = vector.broadcast %1 : vector<1x32xf32> to vector<8x32xf32>
    %26 = arith.addf %24, %25 : vector<8x32xf32>
    %27 = arith.mulf %14, %26 : vector<8x32xf32>
    %28 = arith.addf %23, %27 : vector<8x32xf32>
    %29 = math.tanh %28 : vector<8x32xf32>
    %cst_8 = arith.constant 1.000000e+00 : f32
    %30 = vector.broadcast %cst_8 : f32 to vector<8x32xf32>
    %31 = arith.subf %30, %22 : vector<8x32xf32>
    %32 = arith.mulf %31, %29 : vector<8x32xf32>
    %33 = arith.mulf %22, %2 : vector<8x32xf32>
    %34 = arith.addf %32, %33 : vector<8x32xf32>
    %c1_i32 = arith.constant 1 : i32
    %35 = arith.index_cast %c1_i32 : i32 to index
    %c0_9 = arith.constant 0 : index
    %c0_10 = arith.constant 0 : index
    %36 = vector.load %arg1[%35, %c0_9, %c0_10] : memref<16x8x128xf32, #tpu.memory_space<vmem>>, vector<1x8x128xf32>
    %37 = vector.shape_cast %36 : vector<1x8x128xf32> to vector<8x128xf32>
    %cst_11 = arith.constant dense<0.000000e+00> : vector<8x128xf32>
    %38 = tpu.matmul %34, %0, %cst_11 {dimension_numbers = #tpu.dot_dimension_numbers<[1], [0], [0], [1], [0, 0, 1, 1], [], []>} : vector<8x32xf32>, vector<32x128xf32>, vector<8x128xf32> -> vector<8x128xf32>
    %39 = vector.extract_strided_slice %37 {offsets = [0, 0], sizes = [8, 32], strides = [1, 1]} : vector<8x128xf32> to vector<8x32xf32>
    %40 = vector.extract_strided_slice %38 {offsets = [0, 0], sizes = [8, 32], strides = [1, 1]} : vector<8x128xf32> to vector<8x32xf32>
    %41 = arith.addf %39, %40 : vector<8x32xf32>
    %42 = arith.negf %41 : vector<8x32xf32>
    %43 = math.exp %42 : vector<8x32xf32>
    %cst_12 = arith.constant 1.000000e+00 : f32
    %44 = vector.broadcast %cst_12 : f32 to vector<8x32xf32>
    %45 = arith.addf %44, %43 : vector<8x32xf32>
    %46 = arith.divf %44, %45 : vector<8x32xf32>
    %47 = vector.extract_strided_slice %37 {offsets = [0, 32], sizes = [8, 32], strides = [1, 1]} : vector<8x128xf32> to vector<8x32xf32>
    %48 = vector.extract_strided_slice %38 {offsets = [0, 32], sizes = [8, 32], strides = [1, 1]} : vector<8x128xf32> to vector<8x32xf32>
    %49 = arith.addf %47, %48 : vector<8x32xf32>
    %50 = arith.negf %49 : vector<8x32xf32>
    %51 = math.exp %50 : vector<8x32xf32>
    %cst_13 = arith.constant 1.000000e+00 : f32
    %52 = vector.broadcast %cst_13 : f32 to vector<8x32xf32>
    %53 = arith.addf %52, %51 : vector<8x32xf32>
    %54 = arith.divf %52, %53 : vector<8x32xf32>
    %55 = vector.extract_strided_slice %37 {offsets = [0, 64], sizes = [8, 32], strides = [1, 1]} : vector<8x128xf32> to vector<8x32xf32>
    %56 = vector.extract_strided_slice %38 {offsets = [0, 64], sizes = [8, 32], strides = [1, 1]} : vector<8x128xf32> to vector<8x32xf32>
    %57 = vector.broadcast %1 : vector<1x32xf32> to vector<8x32xf32>
    %58 = arith.addf %56, %57 : vector<8x32xf32>
    %59 = arith.mulf %46, %58 : vector<8x32xf32>
    %60 = arith.addf %55, %59 : vector<8x32xf32>
    %61 = math.tanh %60 : vector<8x32xf32>
    %cst_14 = arith.constant 1.000000e+00 : f32
    %62 = vector.broadcast %cst_14 : f32 to vector<8x32xf32>
    %63 = arith.subf %62, %54 : vector<8x32xf32>
    %64 = arith.mulf %63, %61 : vector<8x32xf32>
    %65 = arith.mulf %54, %34 : vector<8x32xf32>
    %66 = arith.addf %64, %65 : vector<8x32xf32>
    %c2_i32 = arith.constant 2 : i32
    %67 = arith.index_cast %c2_i32 : i32 to index
    %c0_15 = arith.constant 0 : index
    %c0_16 = arith.constant 0 : index
    %68 = vector.load %arg1[%67, %c0_15, %c0_16] : memref<16x8x128xf32, #tpu.memory_space<vmem>>, vector<1x8x128xf32>
    %69 = vector.shape_cast %68 : vector<1x8x128xf32> to vector<8x128xf32>
    %cst_17 = arith.constant dense<0.000000e+00> : vector<8x128xf32>
    %70 = tpu.matmul %66, %0, %cst_17 {dimension_numbers = #tpu.dot_dimension_numbers<[1], [0], [0], [1], [0, 0, 1, 1], [], []>} : vector<8x32xf32>, vector<32x128xf32>, vector<8x128xf32> -> vector<8x128xf32>
    %71 = vector.extract_strided_slice %69 {offsets = [0, 0], sizes = [8, 32], strides = [1, 1]} : vector<8x128xf32> to vector<8x32xf32>
    %72 = vector.extract_strided_slice %70 {offsets = [0, 0], sizes = [8, 32], strides = [1, 1]} : vector<8x128xf32> to vector<8x32xf32>
    %73 = arith.addf %71, %72 : vector<8x32xf32>
    %74 = arith.negf %73 : vector<8x32xf32>
    %75 = math.exp %74 : vector<8x32xf32>
    %cst_18 = arith.constant 1.000000e+00 : f32
    %76 = vector.broadcast %cst_18 : f32 to vector<8x32xf32>
    %77 = arith.addf %76, %75 : vector<8x32xf32>
    %78 = arith.divf %76, %77 : vector<8x32xf32>
    %79 = vector.extract_strided_slice %69 {offsets = [0, 32], sizes = [8, 32], strides = [1, 1]} : vector<8x128xf32> to vector<8x32xf32>
    %80 = vector.extract_strided_slice %70 {offsets = [0, 32], sizes = [8, 32], strides = [1, 1]} : vector<8x128xf32> to vector<8x32xf32>
    %81 = arith.addf %79, %80 : vector<8x32xf32>
    %82 = arith.negf %81 : vector<8x32xf32>
    %83 = math.exp %82 : vector<8x32xf32>
    %cst_19 = arith.constant 1.000000e+00 : f32
    %84 = vector.broadcast %cst_19 : f32 to vector<8x32xf32>
    %85 = arith.addf %84, %83 : vector<8x32xf32>
    %86 = arith.divf %84, %85 : vector<8x32xf32>
    %87 = vector.extract_strided_slice %69 {offsets = [0, 64], sizes = [8, 32], strides = [1, 1]} : vector<8x128xf32> to vector<8x32xf32>
    %88 = vector.extract_strided_slice %70 {offsets = [0, 64], sizes = [8, 32], strides = [1, 1]} : vector<8x128xf32> to vector<8x32xf32>
    %89 = vector.broadcast %1 : vector<1x32xf32> to vector<8x32xf32>
    %90 = arith.addf %88, %89 : vector<8x32xf32>
    %91 = arith.mulf %78, %90 : vector<8x32xf32>
    %92 = arith.addf %87, %91 : vector<8x32xf32>
    %93 = math.tanh %92 : vector<8x32xf32>
    %cst_20 = arith.constant 1.000000e+00 : f32
    %94 = vector.broadcast %cst_20 : f32 to vector<8x32xf32>
    %95 = arith.subf %94, %86 : vector<8x32xf32>
    %96 = arith.mulf %95, %93 : vector<8x32xf32>
    %97 = arith.mulf %86, %66 : vector<8x32xf32>
    %98 = arith.addf %96, %97 : vector<8x32xf32>
    %c3_i32 = arith.constant 3 : i32
    %99 = arith.index_cast %c3_i32 : i32 to index
    %c0_21 = arith.constant 0 : index
    %c0_22 = arith.constant 0 : index
    %100 = vector.load %arg1[%99, %c0_21, %c0_22] : memref<16x8x128xf32, #tpu.memory_space<vmem>>, vector<1x8x128xf32>
    %101 = vector.shape_cast %100 : vector<1x8x128xf32> to vector<8x128xf32>
    %cst_23 = arith.constant dense<0.000000e+00> : vector<8x128xf32>
    %102 = tpu.matmul %98, %0, %cst_23 {dimension_numbers = #tpu.dot_dimension_numbers<[1], [0], [0], [1], [0, 0, 1, 1], [], []>} : vector<8x32xf32>, vector<32x128xf32>, vector<8x128xf32> -> vector<8x128xf32>
    %103 = vector.extract_strided_slice %101 {offsets = [0, 0], sizes = [8, 32], strides = [1, 1]} : vector<8x128xf32> to vector<8x32xf32>
    %104 = vector.extract_strided_slice %102 {offsets = [0, 0], sizes = [8, 32], strides = [1, 1]} : vector<8x128xf32> to vector<8x32xf32>
    %105 = arith.addf %103, %104 : vector<8x32xf32>
    %106 = arith.negf %105 : vector<8x32xf32>
    %107 = math.exp %106 : vector<8x32xf32>
    %cst_24 = arith.constant 1.000000e+00 : f32
    %108 = vector.broadcast %cst_24 : f32 to vector<8x32xf32>
    %109 = arith.addf %108, %107 : vector<8x32xf32>
    %110 = arith.divf %108, %109 : vector<8x32xf32>
    %111 = vector.extract_strided_slice %101 {offsets = [0, 32], sizes = [8, 32], strides = [1, 1]} : vector<8x128xf32> to vector<8x32xf32>
    %112 = vector.extract_strided_slice %102 {offsets = [0, 32], sizes = [8, 32], strides = [1, 1]} : vector<8x128xf32> to vector<8x32xf32>
    %113 = arith.addf %111, %112 : vector<8x32xf32>
    %114 = arith.negf %113 : vector<8x32xf32>
    %115 = math.exp %114 : vector<8x32xf32>
    %cst_25 = arith.constant 1.000000e+00 : f32
    %116 = vector.broadcast %cst_25 : f32 to vector<8x32xf32>
    %117 = arith.addf %116, %115 : vector<8x32xf32>
    %118 = arith.divf %116, %117 : vector<8x32xf32>
    %119 = vector.extract_strided_slice %101 {offsets = [0, 64], sizes = [8, 32], strides = [1, 1]} : vector<8x128xf32> to vector<8x32xf32>
    %120 = vector.extract_strided_slice %102 {offsets = [0, 64], sizes = [8, 32], strides = [1, 1]} : vector<8x128xf32> to vector<8x32xf32>
    %121 = vector.broadcast %1 : vector<1x32xf32> to vector<8x32xf32>
    %122 = arith.addf %120, %121 : vector<8x32xf32>
    %123 = arith.mulf %110, %122 : vector<8x32xf32>
    %124 = arith.addf %119, %123 : vector<8x32xf32>
    %125 = math.tanh %124 : vector<8x32xf32>
    %cst_26 = arith.constant 1.000000e+00 : f32
    %126 = vector.broadcast %cst_26 : f32 to vector<8x32xf32>
    %127 = arith.subf %126, %118 : vector<8x32xf32>
    %128 = arith.mulf %127, %125 : vector<8x32xf32>
    %129 = arith.mulf %118, %98 : vector<8x32xf32>
    %130 = arith.addf %128, %129 : vector<8x32xf32>
    %c4_i32 = arith.constant 4 : i32
    %131 = arith.index_cast %c4_i32 : i32 to index
    %c0_27 = arith.constant 0 : index
    %c0_28 = arith.constant 0 : index
    %132 = vector.load %arg1[%131, %c0_27, %c0_28] : memref<16x8x128xf32, #tpu.memory_space<vmem>>, vector<1x8x128xf32>
    %133 = vector.shape_cast %132 : vector<1x8x128xf32> to vector<8x128xf32>
    %cst_29 = arith.constant dense<0.000000e+00> : vector<8x128xf32>
    %134 = tpu.matmul %130, %0, %cst_29 {dimension_numbers = #tpu.dot_dimension_numbers<[1], [0], [0], [1], [0, 0, 1, 1], [], []>} : vector<8x32xf32>, vector<32x128xf32>, vector<8x128xf32> -> vector<8x128xf32>
    %135 = vector.extract_strided_slice %133 {offsets = [0, 0], sizes = [8, 32], strides = [1, 1]} : vector<8x128xf32> to vector<8x32xf32>
    %136 = vector.extract_strided_slice %134 {offsets = [0, 0], sizes = [8, 32], strides = [1, 1]} : vector<8x128xf32> to vector<8x32xf32>
    %137 = arith.addf %135, %136 : vector<8x32xf32>
    %138 = arith.negf %137 : vector<8x32xf32>
    %139 = math.exp %138 : vector<8x32xf32>
    %cst_30 = arith.constant 1.000000e+00 : f32
    %140 = vector.broadcast %cst_30 : f32 to vector<8x32xf32>
    %141 = arith.addf %140, %139 : vector<8x32xf32>
    %142 = arith.divf %140, %141 : vector<8x32xf32>
    %143 = vector.extract_strided_slice %133 {offsets = [0, 32], sizes = [8, 32], strides = [1, 1]} : vector<8x128xf32> to vector<8x32xf32>
    %144 = vector.extract_strided_slice %134 {offsets = [0, 32], sizes = [8, 32], strides = [1, 1]} : vector<8x128xf32> to vector<8x32xf32>
    %145 = arith.addf %143, %144 : vector<8x32xf32>
    %146 = arith.negf %145 : vector<8x32xf32>
    %147 = math.exp %146 : vector<8x32xf32>
    %cst_31 = arith.constant 1.000000e+00 : f32
    %148 = vector.broadcast %cst_31 : f32 to vector<8x32xf32>
    %149 = arith.addf %148, %147 : vector<8x32xf32>
    %150 = arith.divf %148, %149 : vector<8x32xf32>
    %151 = vector.extract_strided_slice %133 {offsets = [0, 64], sizes = [8, 32], strides = [1, 1]} : vector<8x128xf32> to vector<8x32xf32>
    %152 = vector.extract_strided_slice %134 {offsets = [0, 64], sizes = [8, 32], strides = [1, 1]} : vector<8x128xf32> to vector<8x32xf32>
    %153 = vector.broadcast %1 : vector<1x32xf32> to vector<8x32xf32>
    %154 = arith.addf %152, %153 : vector<8x32xf32>
    %155 = arith.mulf %142, %154 : vector<8x32xf32>
    %156 = arith.addf %151, %155 : vector<8x32xf32>
    %157 = math.tanh %156 : vector<8x32xf32>
    %cst_32 = arith.constant 1.000000e+00 : f32
    %158 = vector.broadcast %cst_32 : f32 to vector<8x32xf32>
    %159 = arith.subf %158, %150 : vector<8x32xf32>
    %160 = arith.mulf %159, %157 : vector<8x32xf32>
    %161 = arith.mulf %150, %130 : vector<8x32xf32>
    %162 = arith.addf %160, %161 : vector<8x32xf32>
    %c5_i32 = arith.constant 5 : i32
    %163 = arith.index_cast %c5_i32 : i32 to index
    %c0_33 = arith.constant 0 : index
    %c0_34 = arith.constant 0 : index
    %164 = vector.load %arg1[%163, %c0_33, %c0_34] : memref<16x8x128xf32, #tpu.memory_space<vmem>>, vector<1x8x128xf32>
    %165 = vector.shape_cast %164 : vector<1x8x128xf32> to vector<8x128xf32>
    %cst_35 = arith.constant dense<0.000000e+00> : vector<8x128xf32>
    %166 = tpu.matmul %162, %0, %cst_35 {dimension_numbers = #tpu.dot_dimension_numbers<[1], [0], [0], [1], [0, 0, 1, 1], [], []>} : vector<8x32xf32>, vector<32x128xf32>, vector<8x128xf32> -> vector<8x128xf32>
    %167 = vector.extract_strided_slice %165 {offsets = [0, 0], sizes = [8, 32], strides = [1, 1]} : vector<8x128xf32> to vector<8x32xf32>
    %168 = vector.extract_strided_slice %166 {offsets = [0, 0], sizes = [8, 32], strides = [1, 1]} : vector<8x128xf32> to vector<8x32xf32>
    %169 = arith.addf %167, %168 : vector<8x32xf32>
    %170 = arith.negf %169 : vector<8x32xf32>
    %171 = math.exp %170 : vector<8x32xf32>
    %cst_36 = arith.constant 1.000000e+00 : f32
    %172 = vector.broadcast %cst_36 : f32 to vector<8x32xf32>
    %173 = arith.addf %172, %171 : vector<8x32xf32>
    %174 = arith.divf %172, %173 : vector<8x32xf32>
    %175 = vector.extract_strided_slice %165 {offsets = [0, 32], sizes = [8, 32], strides = [1, 1]} : vector<8x128xf32> to vector<8x32xf32>
    %176 = vector.extract_strided_slice %166 {offsets = [0, 32], sizes = [8, 32], strides = [1, 1]} : vector<8x128xf32> to vector<8x32xf32>
    %177 = arith.addf %175, %176 : vector<8x32xf32>
    %178 = arith.negf %177 : vector<8x32xf32>
    %179 = math.exp %178 : vector<8x32xf32>
    %cst_37 = arith.constant 1.000000e+00 : f32
    %180 = vector.broadcast %cst_37 : f32 to vector<8x32xf32>
    %181 = arith.addf %180, %179 : vector<8x32xf32>
    %182 = arith.divf %180, %181 : vector<8x32xf32>
    %183 = vector.extract_strided_slice %165 {offsets = [0, 64], sizes = [8, 32], strides = [1, 1]} : vector<8x128xf32> to vector<8x32xf32>
    %184 = vector.extract_strided_slice %166 {offsets = [0, 64], sizes = [8, 32], strides = [1, 1]} : vector<8x128xf32> to vector<8x32xf32>
    %185 = vector.broadcast %1 : vector<1x32xf32> to vector<8x32xf32>
    %186 = arith.addf %184, %185 : vector<8x32xf32>
    %187 = arith.mulf %174, %186 : vector<8x32xf32>
    %188 = arith.addf %183, %187 : vector<8x32xf32>
    %189 = math.tanh %188 : vector<8x32xf32>
    %cst_38 = arith.constant 1.000000e+00 : f32
    %190 = vector.broadcast %cst_38 : f32 to vector<8x32xf32>
    %191 = arith.subf %190, %182 : vector<8x32xf32>
    %192 = arith.mulf %191, %189 : vector<8x32xf32>
    %193 = arith.mulf %182, %162 : vector<8x32xf32>
    %194 = arith.addf %192, %193 : vector<8x32xf32>
    %c6_i32 = arith.constant 6 : i32
    %195 = arith.index_cast %c6_i32 : i32 to index
    %c0_39 = arith.constant 0 : index
    %c0_40 = arith.constant 0 : index
    %196 = vector.load %arg1[%195, %c0_39, %c0_40] : memref<16x8x128xf32, #tpu.memory_space<vmem>>, vector<1x8x128xf32>
    %197 = vector.shape_cast %196 : vector<1x8x128xf32> to vector<8x128xf32>
    %cst_41 = arith.constant dense<0.000000e+00> : vector<8x128xf32>
    %198 = tpu.matmul %194, %0, %cst_41 {dimension_numbers = #tpu.dot_dimension_numbers<[1], [0], [0], [1], [0, 0, 1, 1], [], []>} : vector<8x32xf32>, vector<32x128xf32>, vector<8x128xf32> -> vector<8x128xf32>
    %199 = vector.extract_strided_slice %197 {offsets = [0, 0], sizes = [8, 32], strides = [1, 1]} : vector<8x128xf32> to vector<8x32xf32>
    %200 = vector.extract_strided_slice %198 {offsets = [0, 0], sizes = [8, 32], strides = [1, 1]} : vector<8x128xf32> to vector<8x32xf32>
    %201 = arith.addf %199, %200 : vector<8x32xf32>
    %202 = arith.negf %201 : vector<8x32xf32>
    %203 = math.exp %202 : vector<8x32xf32>
    %cst_42 = arith.constant 1.000000e+00 : f32
    %204 = vector.broadcast %cst_42 : f32 to vector<8x32xf32>
    %205 = arith.addf %204, %203 : vector<8x32xf32>
    %206 = arith.divf %204, %205 : vector<8x32xf32>
    %207 = vector.extract_strided_slice %197 {offsets = [0, 32], sizes = [8, 32], strides = [1, 1]} : vector<8x128xf32> to vector<8x32xf32>
    %208 = vector.extract_strided_slice %198 {offsets = [0, 32], sizes = [8, 32], strides = [1, 1]} : vector<8x128xf32> to vector<8x32xf32>
    %209 = arith.addf %207, %208 : vector<8x32xf32>
    %210 = arith.negf %209 : vector<8x32xf32>
    %211 = math.exp %210 : vector<8x32xf32>
    %cst_43 = arith.constant 1.000000e+00 : f32
    %212 = vector.broadcast %cst_43 : f32 to vector<8x32xf32>
    %213 = arith.addf %212, %211 : vector<8x32xf32>
    %214 = arith.divf %212, %213 : vector<8x32xf32>
    %215 = vector.extract_strided_slice %197 {offsets = [0, 64], sizes = [8, 32], strides = [1, 1]} : vector<8x128xf32> to vector<8x32xf32>
    %216 = vector.extract_strided_slice %198 {offsets = [0, 64], sizes = [8, 32], strides = [1, 1]} : vector<8x128xf32> to vector<8x32xf32>
    %217 = vector.broadcast %1 : vector<1x32xf32> to vector<8x32xf32>
    %218 = arith.addf %216, %217 : vector<8x32xf32>
    %219 = arith.mulf %206, %218 : vector<8x32xf32>
    %220 = arith.addf %215, %219 : vector<8x32xf32>
    %221 = math.tanh %220 : vector<8x32xf32>
    %cst_44 = arith.constant 1.000000e+00 : f32
    %222 = vector.broadcast %cst_44 : f32 to vector<8x32xf32>
    %223 = arith.subf %222, %214 : vector<8x32xf32>
    %224 = arith.mulf %223, %221 : vector<8x32xf32>
    %225 = arith.mulf %214, %194 : vector<8x32xf32>
    %226 = arith.addf %224, %225 : vector<8x32xf32>
    %c7_i32 = arith.constant 7 : i32
    %227 = arith.index_cast %c7_i32 : i32 to index
    %c0_45 = arith.constant 0 : index
    %c0_46 = arith.constant 0 : index
    %228 = vector.load %arg1[%227, %c0_45, %c0_46] : memref<16x8x128xf32, #tpu.memory_space<vmem>>, vector<1x8x128xf32>
    %229 = vector.shape_cast %228 : vector<1x8x128xf32> to vector<8x128xf32>
    %cst_47 = arith.constant dense<0.000000e+00> : vector<8x128xf32>
    %230 = tpu.matmul %226, %0, %cst_47 {dimension_numbers = #tpu.dot_dimension_numbers<[1], [0], [0], [1], [0, 0, 1, 1], [], []>} : vector<8x32xf32>, vector<32x128xf32>, vector<8x128xf32> -> vector<8x128xf32>
    %231 = vector.extract_strided_slice %229 {offsets = [0, 0], sizes = [8, 32], strides = [1, 1]} : vector<8x128xf32> to vector<8x32xf32>
    %232 = vector.extract_strided_slice %230 {offsets = [0, 0], sizes = [8, 32], strides = [1, 1]} : vector<8x128xf32> to vector<8x32xf32>
    %233 = arith.addf %231, %232 : vector<8x32xf32>
    %234 = arith.negf %233 : vector<8x32xf32>
    %235 = math.exp %234 : vector<8x32xf32>
    %cst_48 = arith.constant 1.000000e+00 : f32
    %236 = vector.broadcast %cst_48 : f32 to vector<8x32xf32>
    %237 = arith.addf %236, %235 : vector<8x32xf32>
    %238 = arith.divf %236, %237 : vector<8x32xf32>
    %239 = vector.extract_strided_slice %229 {offsets = [0, 32], sizes = [8, 32], strides = [1, 1]} : vector<8x128xf32> to vector<8x32xf32>
    %240 = vector.extract_strided_slice %230 {offsets = [0, 32], sizes = [8, 32], strides = [1, 1]} : vector<8x128xf32> to vector<8x32xf32>
    %241 = arith.addf %239, %240 : vector<8x32xf32>
    %242 = arith.negf %241 : vector<8x32xf32>
    %243 = math.exp %242 : vector<8x32xf32>
    %cst_49 = arith.constant 1.000000e+00 : f32
    %244 = vector.broadcast %cst_49 : f32 to vector<8x32xf32>
    %245 = arith.addf %244, %243 : vector<8x32xf32>
    %246 = arith.divf %244, %245 : vector<8x32xf32>
    %247 = vector.extract_strided_slice %229 {offsets = [0, 64], sizes = [8, 32], strides = [1, 1]} : vector<8x128xf32> to vector<8x32xf32>
    %248 = vector.extract_strided_slice %230 {offsets = [0, 64], sizes = [8, 32], strides = [1, 1]} : vector<8x128xf32> to vector<8x32xf32>
    %249 = vector.broadcast %1 : vector<1x32xf32> to vector<8x32xf32>
    %250 = arith.addf %248, %249 : vector<8x32xf32>
    %251 = arith.mulf %238, %250 : vector<8x32xf32>
    %252 = arith.addf %247, %251 : vector<8x32xf32>
    %253 = math.tanh %252 : vector<8x32xf32>
    %cst_50 = arith.constant 1.000000e+00 : f32
    %254 = vector.broadcast %cst_50 : f32 to vector<8x32xf32>
    %255 = arith.subf %254, %246 : vector<8x32xf32>
    %256 = arith.mulf %255, %253 : vector<8x32xf32>
    %257 = arith.mulf %246, %226 : vector<8x32xf32>
    %258 = arith.addf %256, %257 : vector<8x32xf32>
    %c8_i32 = arith.constant 8 : i32
    %259 = arith.index_cast %c8_i32 : i32 to index
    %c0_51 = arith.constant 0 : index
    %c0_52 = arith.constant 0 : index
    %260 = vector.load %arg1[%259, %c0_51, %c0_52] : memref<16x8x128xf32, #tpu.memory_space<vmem>>, vector<1x8x128xf32>
    %261 = vector.shape_cast %260 : vector<1x8x128xf32> to vector<8x128xf32>
    %cst_53 = arith.constant dense<0.000000e+00> : vector<8x128xf32>
    %262 = tpu.matmul %258, %0, %cst_53 {dimension_numbers = #tpu.dot_dimension_numbers<[1], [0], [0], [1], [0, 0, 1, 1], [], []>} : vector<8x32xf32>, vector<32x128xf32>, vector<8x128xf32> -> vector<8x128xf32>
    %263 = vector.extract_strided_slice %261 {offsets = [0, 0], sizes = [8, 32], strides = [1, 1]} : vector<8x128xf32> to vector<8x32xf32>
    %264 = vector.extract_strided_slice %262 {offsets = [0, 0], sizes = [8, 32], strides = [1, 1]} : vector<8x128xf32> to vector<8x32xf32>
    %265 = arith.addf %263, %264 : vector<8x32xf32>
    %266 = arith.negf %265 : vector<8x32xf32>
    %267 = math.exp %266 : vector<8x32xf32>
    %cst_54 = arith.constant 1.000000e+00 : f32
    %268 = vector.broadcast %cst_54 : f32 to vector<8x32xf32>
    %269 = arith.addf %268, %267 : vector<8x32xf32>
    %270 = arith.divf %268, %269 : vector<8x32xf32>
    %271 = vector.extract_strided_slice %261 {offsets = [0, 32], sizes = [8, 32], strides = [1, 1]} : vector<8x128xf32> to vector<8x32xf32>
    %272 = vector.extract_strided_slice %262 {offsets = [0, 32], sizes = [8, 32], strides = [1, 1]} : vector<8x128xf32> to vector<8x32xf32>
    %273 = arith.addf %271, %272 : vector<8x32xf32>
    %274 = arith.negf %273 : vector<8x32xf32>
    %275 = math.exp %274 : vector<8x32xf32>
    %cst_55 = arith.constant 1.000000e+00 : f32
    %276 = vector.broadcast %cst_55 : f32 to vector<8x32xf32>
    %277 = arith.addf %276, %275 : vector<8x32xf32>
    %278 = arith.divf %276, %277 : vector<8x32xf32>
    %279 = vector.extract_strided_slice %261 {offsets = [0, 64], sizes = [8, 32], strides = [1, 1]} : vector<8x128xf32> to vector<8x32xf32>
    %280 = vector.extract_strided_slice %262 {offsets = [0, 64], sizes = [8, 32], strides = [1, 1]} : vector<8x128xf32> to vector<8x32xf32>
    %281 = vector.broadcast %1 : vector<1x32xf32> to vector<8x32xf32>
    %282 = arith.addf %280, %281 : vector<8x32xf32>
    %283 = arith.mulf %270, %282 : vector<8x32xf32>
    %284 = arith.addf %279, %283 : vector<8x32xf32>
    %285 = math.tanh %284 : vector<8x32xf32>
    %cst_56 = arith.constant 1.000000e+00 : f32
    %286 = vector.broadcast %cst_56 : f32 to vector<8x32xf32>
    %287 = arith.subf %286, %278 : vector<8x32xf32>
    %288 = arith.mulf %287, %285 : vector<8x32xf32>
    %289 = arith.mulf %278, %258 : vector<8x32xf32>
    %290 = arith.addf %288, %289 : vector<8x32xf32>
    %c9_i32 = arith.constant 9 : i32
    %291 = arith.index_cast %c9_i32 : i32 to index
    %c0_57 = arith.constant 0 : index
    %c0_58 = arith.constant 0 : index
    %292 = vector.load %arg1[%291, %c0_57, %c0_58] : memref<16x8x128xf32, #tpu.memory_space<vmem>>, vector<1x8x128xf32>
    %293 = vector.shape_cast %292 : vector<1x8x128xf32> to vector<8x128xf32>
    %cst_59 = arith.constant dense<0.000000e+00> : vector<8x128xf32>
    %294 = tpu.matmul %290, %0, %cst_59 {dimension_numbers = #tpu.dot_dimension_numbers<[1], [0], [0], [1], [0, 0, 1, 1], [], []>} : vector<8x32xf32>, vector<32x128xf32>, vector<8x128xf32> -> vector<8x128xf32>
    %295 = vector.extract_strided_slice %293 {offsets = [0, 0], sizes = [8, 32], strides = [1, 1]} : vector<8x128xf32> to vector<8x32xf32>
    %296 = vector.extract_strided_slice %294 {offsets = [0, 0], sizes = [8, 32], strides = [1, 1]} : vector<8x128xf32> to vector<8x32xf32>
    %297 = arith.addf %295, %296 : vector<8x32xf32>
    %298 = arith.negf %297 : vector<8x32xf32>
    %299 = math.exp %298 : vector<8x32xf32>
    %cst_60 = arith.constant 1.000000e+00 : f32
    %300 = vector.broadcast %cst_60 : f32 to vector<8x32xf32>
    %301 = arith.addf %300, %299 : vector<8x32xf32>
    %302 = arith.divf %300, %301 : vector<8x32xf32>
    %303 = vector.extract_strided_slice %293 {offsets = [0, 32], sizes = [8, 32], strides = [1, 1]} : vector<8x128xf32> to vector<8x32xf32>
    %304 = vector.extract_strided_slice %294 {offsets = [0, 32], sizes = [8, 32], strides = [1, 1]} : vector<8x128xf32> to vector<8x32xf32>
    %305 = arith.addf %303, %304 : vector<8x32xf32>
    %306 = arith.negf %305 : vector<8x32xf32>
    %307 = math.exp %306 : vector<8x32xf32>
    %cst_61 = arith.constant 1.000000e+00 : f32
    %308 = vector.broadcast %cst_61 : f32 to vector<8x32xf32>
    %309 = arith.addf %308, %307 : vector<8x32xf32>
    %310 = arith.divf %308, %309 : vector<8x32xf32>
    %311 = vector.extract_strided_slice %293 {offsets = [0, 64], sizes = [8, 32], strides = [1, 1]} : vector<8x128xf32> to vector<8x32xf32>
    %312 = vector.extract_strided_slice %294 {offsets = [0, 64], sizes = [8, 32], strides = [1, 1]} : vector<8x128xf32> to vector<8x32xf32>
    %313 = vector.broadcast %1 : vector<1x32xf32> to vector<8x32xf32>
    %314 = arith.addf %312, %313 : vector<8x32xf32>
    %315 = arith.mulf %302, %314 : vector<8x32xf32>
    %316 = arith.addf %311, %315 : vector<8x32xf32>
    %317 = math.tanh %316 : vector<8x32xf32>
    %cst_62 = arith.constant 1.000000e+00 : f32
    %318 = vector.broadcast %cst_62 : f32 to vector<8x32xf32>
    %319 = arith.subf %318, %310 : vector<8x32xf32>
    %320 = arith.mulf %319, %317 : vector<8x32xf32>
    %321 = arith.mulf %310, %290 : vector<8x32xf32>
    %322 = arith.addf %320, %321 : vector<8x32xf32>
    %c10_i32 = arith.constant 10 : i32
    %323 = arith.index_cast %c10_i32 : i32 to index
    %c0_63 = arith.constant 0 : index
    %c0_64 = arith.constant 0 : index
    %324 = vector.load %arg1[%323, %c0_63, %c0_64] : memref<16x8x128xf32, #tpu.memory_space<vmem>>, vector<1x8x128xf32>
    %325 = vector.shape_cast %324 : vector<1x8x128xf32> to vector<8x128xf32>
    %cst_65 = arith.constant dense<0.000000e+00> : vector<8x128xf32>
    %326 = tpu.matmul %322, %0, %cst_65 {dimension_numbers = #tpu.dot_dimension_numbers<[1], [0], [0], [1], [0, 0, 1, 1], [], []>} : vector<8x32xf32>, vector<32x128xf32>, vector<8x128xf32> -> vector<8x128xf32>
    %327 = vector.extract_strided_slice %325 {offsets = [0, 0], sizes = [8, 32], strides = [1, 1]} : vector<8x128xf32> to vector<8x32xf32>
    %328 = vector.extract_strided_slice %326 {offsets = [0, 0], sizes = [8, 32], strides = [1, 1]} : vector<8x128xf32> to vector<8x32xf32>
    %329 = arith.addf %327, %328 : vector<8x32xf32>
    %330 = arith.negf %329 : vector<8x32xf32>
    %331 = math.exp %330 : vector<8x32xf32>
    %cst_66 = arith.constant 1.000000e+00 : f32
    %332 = vector.broadcast %cst_66 : f32 to vector<8x32xf32>
    %333 = arith.addf %332, %331 : vector<8x32xf32>
    %334 = arith.divf %332, %333 : vector<8x32xf32>
    %335 = vector.extract_strided_slice %325 {offsets = [0, 32], sizes = [8, 32], strides = [1, 1]} : vector<8x128xf32> to vector<8x32xf32>
    %336 = vector.extract_strided_slice %326 {offsets = [0, 32], sizes = [8, 32], strides = [1, 1]} : vector<8x128xf32> to vector<8x32xf32>
    %337 = arith.addf %335, %336 : vector<8x32xf32>
    %338 = arith.negf %337 : vector<8x32xf32>
    %339 = math.exp %338 : vector<8x32xf32>
    %cst_67 = arith.constant 1.000000e+00 : f32
    %340 = vector.broadcast %cst_67 : f32 to vector<8x32xf32>
    %341 = arith.addf %340, %339 : vector<8x32xf32>
    %342 = arith.divf %340, %341 : vector<8x32xf32>
    %343 = vector.extract_strided_slice %325 {offsets = [0, 64], sizes = [8, 32], strides = [1, 1]} : vector<8x128xf32> to vector<8x32xf32>
    %344 = vector.extract_strided_slice %326 {offsets = [0, 64], sizes = [8, 32], strides = [1, 1]} : vector<8x128xf32> to vector<8x32xf32>
    %345 = vector.broadcast %1 : vector<1x32xf32> to vector<8x32xf32>
    %346 = arith.addf %344, %345 : vector<8x32xf32>
    %347 = arith.mulf %334, %346 : vector<8x32xf32>
    %348 = arith.addf %343, %347 : vector<8x32xf32>
    %349 = math.tanh %348 : vector<8x32xf32>
    %cst_68 = arith.constant 1.000000e+00 : f32
    %350 = vector.broadcast %cst_68 : f32 to vector<8x32xf32>
    %351 = arith.subf %350, %342 : vector<8x32xf32>
    %352 = arith.mulf %351, %349 : vector<8x32xf32>
    %353 = arith.mulf %342, %322 : vector<8x32xf32>
    %354 = arith.addf %352, %353 : vector<8x32xf32>
    %c11_i32 = arith.constant 11 : i32
    %355 = arith.index_cast %c11_i32 : i32 to index
    %c0_69 = arith.constant 0 : index
    %c0_70 = arith.constant 0 : index
    %356 = vector.load %arg1[%355, %c0_69, %c0_70] : memref<16x8x128xf32, #tpu.memory_space<vmem>>, vector<1x8x128xf32>
    %357 = vector.shape_cast %356 : vector<1x8x128xf32> to vector<8x128xf32>
    %cst_71 = arith.constant dense<0.000000e+00> : vector<8x128xf32>
    %358 = tpu.matmul %354, %0, %cst_71 {dimension_numbers = #tpu.dot_dimension_numbers<[1], [0], [0], [1], [0, 0, 1, 1], [], []>} : vector<8x32xf32>, vector<32x128xf32>, vector<8x128xf32> -> vector<8x128xf32>
    %359 = vector.extract_strided_slice %357 {offsets = [0, 0], sizes = [8, 32], strides = [1, 1]} : vector<8x128xf32> to vector<8x32xf32>
    %360 = vector.extract_strided_slice %358 {offsets = [0, 0], sizes = [8, 32], strides = [1, 1]} : vector<8x128xf32> to vector<8x32xf32>
    %361 = arith.addf %359, %360 : vector<8x32xf32>
    %362 = arith.negf %361 : vector<8x32xf32>
    %363 = math.exp %362 : vector<8x32xf32>
    %cst_72 = arith.constant 1.000000e+00 : f32
    %364 = vector.broadcast %cst_72 : f32 to vector<8x32xf32>
    %365 = arith.addf %364, %363 : vector<8x32xf32>
    %366 = arith.divf %364, %365 : vector<8x32xf32>
    %367 = vector.extract_strided_slice %357 {offsets = [0, 32], sizes = [8, 32], strides = [1, 1]} : vector<8x128xf32> to vector<8x32xf32>
    %368 = vector.extract_strided_slice %358 {offsets = [0, 32], sizes = [8, 32], strides = [1, 1]} : vector<8x128xf32> to vector<8x32xf32>
    %369 = arith.addf %367, %368 : vector<8x32xf32>
    %370 = arith.negf %369 : vector<8x32xf32>
    %371 = math.exp %370 : vector<8x32xf32>
    %cst_73 = arith.constant 1.000000e+00 : f32
    %372 = vector.broadcast %cst_73 : f32 to vector<8x32xf32>
    %373 = arith.addf %372, %371 : vector<8x32xf32>
    %374 = arith.divf %372, %373 : vector<8x32xf32>
    %375 = vector.extract_strided_slice %357 {offsets = [0, 64], sizes = [8, 32], strides = [1, 1]} : vector<8x128xf32> to vector<8x32xf32>
    %376 = vector.extract_strided_slice %358 {offsets = [0, 64], sizes = [8, 32], strides = [1, 1]} : vector<8x128xf32> to vector<8x32xf32>
    %377 = vector.broadcast %1 : vector<1x32xf32> to vector<8x32xf32>
    %378 = arith.addf %376, %377 : vector<8x32xf32>
    %379 = arith.mulf %366, %378 : vector<8x32xf32>
    %380 = arith.addf %375, %379 : vector<8x32xf32>
    %381 = math.tanh %380 : vector<8x32xf32>
    %cst_74 = arith.constant 1.000000e+00 : f32
    %382 = vector.broadcast %cst_74 : f32 to vector<8x32xf32>
    %383 = arith.subf %382, %374 : vector<8x32xf32>
    %384 = arith.mulf %383, %381 : vector<8x32xf32>
    %385 = arith.mulf %374, %354 : vector<8x32xf32>
    %386 = arith.addf %384, %385 : vector<8x32xf32>
    %c12_i32 = arith.constant 12 : i32
    %387 = arith.index_cast %c12_i32 : i32 to index
    %c0_75 = arith.constant 0 : index
    %c0_76 = arith.constant 0 : index
    %388 = vector.load %arg1[%387, %c0_75, %c0_76] : memref<16x8x128xf32, #tpu.memory_space<vmem>>, vector<1x8x128xf32>
    %389 = vector.shape_cast %388 : vector<1x8x128xf32> to vector<8x128xf32>
    %cst_77 = arith.constant dense<0.000000e+00> : vector<8x128xf32>
    %390 = tpu.matmul %386, %0, %cst_77 {dimension_numbers = #tpu.dot_dimension_numbers<[1], [0], [0], [1], [0, 0, 1, 1], [], []>} : vector<8x32xf32>, vector<32x128xf32>, vector<8x128xf32> -> vector<8x128xf32>
    %391 = vector.extract_strided_slice %389 {offsets = [0, 0], sizes = [8, 32], strides = [1, 1]} : vector<8x128xf32> to vector<8x32xf32>
    %392 = vector.extract_strided_slice %390 {offsets = [0, 0], sizes = [8, 32], strides = [1, 1]} : vector<8x128xf32> to vector<8x32xf32>
    %393 = arith.addf %391, %392 : vector<8x32xf32>
    %394 = arith.negf %393 : vector<8x32xf32>
    %395 = math.exp %394 : vector<8x32xf32>
    %cst_78 = arith.constant 1.000000e+00 : f32
    %396 = vector.broadcast %cst_78 : f32 to vector<8x32xf32>
    %397 = arith.addf %396, %395 : vector<8x32xf32>
    %398 = arith.divf %396, %397 : vector<8x32xf32>
    %399 = vector.extract_strided_slice %389 {offsets = [0, 32], sizes = [8, 32], strides = [1, 1]} : vector<8x128xf32> to vector<8x32xf32>
    %400 = vector.extract_strided_slice %390 {offsets = [0, 32], sizes = [8, 32], strides = [1, 1]} : vector<8x128xf32> to vector<8x32xf32>
    %401 = arith.addf %399, %400 : vector<8x32xf32>
    %402 = arith.negf %401 : vector<8x32xf32>
    %403 = math.exp %402 : vector<8x32xf32>
    %cst_79 = arith.constant 1.000000e+00 : f32
    %404 = vector.broadcast %cst_79 : f32 to vector<8x32xf32>
    %405 = arith.addf %404, %403 : vector<8x32xf32>
    %406 = arith.divf %404, %405 : vector<8x32xf32>
    %407 = vector.extract_strided_slice %389 {offsets = [0, 64], sizes = [8, 32], strides = [1, 1]} : vector<8x128xf32> to vector<8x32xf32>
    %408 = vector.extract_strided_slice %390 {offsets = [0, 64], sizes = [8, 32], strides = [1, 1]} : vector<8x128xf32> to vector<8x32xf32>
    %409 = vector.broadcast %1 : vector<1x32xf32> to vector<8x32xf32>
    %410 = arith.addf %408, %409 : vector<8x32xf32>
    %411 = arith.mulf %398, %410 : vector<8x32xf32>
    %412 = arith.addf %407, %411 : vector<8x32xf32>
    %413 = math.tanh %412 : vector<8x32xf32>
    %cst_80 = arith.constant 1.000000e+00 : f32
    %414 = vector.broadcast %cst_80 : f32 to vector<8x32xf32>
    %415 = arith.subf %414, %406 : vector<8x32xf32>
    %416 = arith.mulf %415, %413 : vector<8x32xf32>
    %417 = arith.mulf %406, %386 : vector<8x32xf32>
    %418 = arith.addf %416, %417 : vector<8x32xf32>
    %c13_i32 = arith.constant 13 : i32
    %419 = arith.index_cast %c13_i32 : i32 to index
    %c0_81 = arith.constant 0 : index
    %c0_82 = arith.constant 0 : index
    %420 = vector.load %arg1[%419, %c0_81, %c0_82] : memref<16x8x128xf32, #tpu.memory_space<vmem>>, vector<1x8x128xf32>
    %421 = vector.shape_cast %420 : vector<1x8x128xf32> to vector<8x128xf32>
    %cst_83 = arith.constant dense<0.000000e+00> : vector<8x128xf32>
    %422 = tpu.matmul %418, %0, %cst_83 {dimension_numbers = #tpu.dot_dimension_numbers<[1], [0], [0], [1], [0, 0, 1, 1], [], []>} : vector<8x32xf32>, vector<32x128xf32>, vector<8x128xf32> -> vector<8x128xf32>
    %423 = vector.extract_strided_slice %421 {offsets = [0, 0], sizes = [8, 32], strides = [1, 1]} : vector<8x128xf32> to vector<8x32xf32>
    %424 = vector.extract_strided_slice %422 {offsets = [0, 0], sizes = [8, 32], strides = [1, 1]} : vector<8x128xf32> to vector<8x32xf32>
    %425 = arith.addf %423, %424 : vector<8x32xf32>
    %426 = arith.negf %425 : vector<8x32xf32>
    %427 = math.exp %426 : vector<8x32xf32>
    %cst_84 = arith.constant 1.000000e+00 : f32
    %428 = vector.broadcast %cst_84 : f32 to vector<8x32xf32>
    %429 = arith.addf %428, %427 : vector<8x32xf32>
    %430 = arith.divf %428, %429 : vector<8x32xf32>
    %431 = vector.extract_strided_slice %421 {offsets = [0, 32], sizes = [8, 32], strides = [1, 1]} : vector<8x128xf32> to vector<8x32xf32>
    %432 = vector.extract_strided_slice %422 {offsets = [0, 32], sizes = [8, 32], strides = [1, 1]} : vector<8x128xf32> to vector<8x32xf32>
    %433 = arith.addf %431, %432 : vector<8x32xf32>
    %434 = arith.negf %433 : vector<8x32xf32>
    %435 = math.exp %434 : vector<8x32xf32>
    %cst_85 = arith.constant 1.000000e+00 : f32
    %436 = vector.broadcast %cst_85 : f32 to vector<8x32xf32>
    %437 = arith.addf %436, %435 : vector<8x32xf32>
    %438 = arith.divf %436, %437 : vector<8x32xf32>
    %439 = vector.extract_strided_slice %421 {offsets = [0, 64], sizes = [8, 32], strides = [1, 1]} : vector<8x128xf32> to vector<8x32xf32>
    %440 = vector.extract_strided_slice %422 {offsets = [0, 64], sizes = [8, 32], strides = [1, 1]} : vector<8x128xf32> to vector<8x32xf32>
    %441 = vector.broadcast %1 : vector<1x32xf32> to vector<8x32xf32>
    %442 = arith.addf %440, %441 : vector<8x32xf32>
    %443 = arith.mulf %430, %442 : vector<8x32xf32>
    %444 = arith.addf %439, %443 : vector<8x32xf32>
    %445 = math.tanh %444 : vector<8x32xf32>
    %cst_86 = arith.constant 1.000000e+00 : f32
    %446 = vector.broadcast %cst_86 : f32 to vector<8x32xf32>
    %447 = arith.subf %446, %438 : vector<8x32xf32>
    %448 = arith.mulf %447, %445 : vector<8x32xf32>
    %449 = arith.mulf %438, %418 : vector<8x32xf32>
    %450 = arith.addf %448, %449 : vector<8x32xf32>
    %c14_i32 = arith.constant 14 : i32
    %451 = arith.index_cast %c14_i32 : i32 to index
    %c0_87 = arith.constant 0 : index
    %c0_88 = arith.constant 0 : index
    %452 = vector.load %arg1[%451, %c0_87, %c0_88] : memref<16x8x128xf32, #tpu.memory_space<vmem>>, vector<1x8x128xf32>
    %453 = vector.shape_cast %452 : vector<1x8x128xf32> to vector<8x128xf32>
    %cst_89 = arith.constant dense<0.000000e+00> : vector<8x128xf32>
    %454 = tpu.matmul %450, %0, %cst_89 {dimension_numbers = #tpu.dot_dimension_numbers<[1], [0], [0], [1], [0, 0, 1, 1], [], []>} : vector<8x32xf32>, vector<32x128xf32>, vector<8x128xf32> -> vector<8x128xf32>
    %455 = vector.extract_strided_slice %453 {offsets = [0, 0], sizes = [8, 32], strides = [1, 1]} : vector<8x128xf32> to vector<8x32xf32>
    %456 = vector.extract_strided_slice %454 {offsets = [0, 0], sizes = [8, 32], strides = [1, 1]} : vector<8x128xf32> to vector<8x32xf32>
    %457 = arith.addf %455, %456 : vector<8x32xf32>
    %458 = arith.negf %457 : vector<8x32xf32>
    %459 = math.exp %458 : vector<8x32xf32>
    %cst_90 = arith.constant 1.000000e+00 : f32
    %460 = vector.broadcast %cst_90 : f32 to vector<8x32xf32>
    %461 = arith.addf %460, %459 : vector<8x32xf32>
    %462 = arith.divf %460, %461 : vector<8x32xf32>
    %463 = vector.extract_strided_slice %453 {offsets = [0, 32], sizes = [8, 32], strides = [1, 1]} : vector<8x128xf32> to vector<8x32xf32>
    %464 = vector.extract_strided_slice %454 {offsets = [0, 32], sizes = [8, 32], strides = [1, 1]} : vector<8x128xf32> to vector<8x32xf32>
    %465 = arith.addf %463, %464 : vector<8x32xf32>
    %466 = arith.negf %465 : vector<8x32xf32>
    %467 = math.exp %466 : vector<8x32xf32>
    %cst_91 = arith.constant 1.000000e+00 : f32
    %468 = vector.broadcast %cst_91 : f32 to vector<8x32xf32>
    %469 = arith.addf %468, %467 : vector<8x32xf32>
    %470 = arith.divf %468, %469 : vector<8x32xf32>
    %471 = vector.extract_strided_slice %453 {offsets = [0, 64], sizes = [8, 32], strides = [1, 1]} : vector<8x128xf32> to vector<8x32xf32>
    %472 = vector.extract_strided_slice %454 {offsets = [0, 64], sizes = [8, 32], strides = [1, 1]} : vector<8x128xf32> to vector<8x32xf32>
    %473 = vector.broadcast %1 : vector<1x32xf32> to vector<8x32xf32>
    %474 = arith.addf %472, %473 : vector<8x32xf32>
    %475 = arith.mulf %462, %474 : vector<8x32xf32>
    %476 = arith.addf %471, %475 : vector<8x32xf32>
    %477 = math.tanh %476 : vector<8x32xf32>
    %cst_92 = arith.constant 1.000000e+00 : f32
    %478 = vector.broadcast %cst_92 : f32 to vector<8x32xf32>
    %479 = arith.subf %478, %470 : vector<8x32xf32>
    %480 = arith.mulf %479, %477 : vector<8x32xf32>
    %481 = arith.mulf %470, %450 : vector<8x32xf32>
    %482 = arith.addf %480, %481 : vector<8x32xf32>
    %c15_i32 = arith.constant 15 : i32
    %483 = arith.index_cast %c15_i32 : i32 to index
    %c0_93 = arith.constant 0 : index
    %c0_94 = arith.constant 0 : index
    %484 = vector.load %arg1[%483, %c0_93, %c0_94] : memref<16x8x128xf32, #tpu.memory_space<vmem>>, vector<1x8x128xf32>
    %485 = vector.shape_cast %484 : vector<1x8x128xf32> to vector<8x128xf32>
    %cst_95 = arith.constant dense<0.000000e+00> : vector<8x128xf32>
    %486 = tpu.matmul %482, %0, %cst_95 {dimension_numbers = #tpu.dot_dimension_numbers<[1], [0], [0], [1], [0, 0, 1, 1], [], []>} : vector<8x32xf32>, vector<32x128xf32>, vector<8x128xf32> -> vector<8x128xf32>
    %487 = vector.extract_strided_slice %485 {offsets = [0, 0], sizes = [8, 32], strides = [1, 1]} : vector<8x128xf32> to vector<8x32xf32>
    %488 = vector.extract_strided_slice %486 {offsets = [0, 0], sizes = [8, 32], strides = [1, 1]} : vector<8x128xf32> to vector<8x32xf32>
    %489 = arith.addf %487, %488 : vector<8x32xf32>
    %490 = arith.negf %489 : vector<8x32xf32>
    %491 = math.exp %490 : vector<8x32xf32>
    %cst_96 = arith.constant 1.000000e+00 : f32
    %492 = vector.broadcast %cst_96 : f32 to vector<8x32xf32>
    %493 = arith.addf %492, %491 : vector<8x32xf32>
    %494 = arith.divf %492, %493 : vector<8x32xf32>
    %495 = vector.extract_strided_slice %485 {offsets = [0, 32], sizes = [8, 32], strides = [1, 1]} : vector<8x128xf32> to vector<8x32xf32>
    %496 = vector.extract_strided_slice %486 {offsets = [0, 32], sizes = [8, 32], strides = [1, 1]} : vector<8x128xf32> to vector<8x32xf32>
    %497 = arith.addf %495, %496 : vector<8x32xf32>
    %498 = arith.negf %497 : vector<8x32xf32>
    %499 = math.exp %498 : vector<8x32xf32>
    %cst_97 = arith.constant 1.000000e+00 : f32
    %500 = vector.broadcast %cst_97 : f32 to vector<8x32xf32>
    %501 = arith.addf %500, %499 : vector<8x32xf32>
    %502 = arith.divf %500, %501 : vector<8x32xf32>
    %503 = vector.extract_strided_slice %485 {offsets = [0, 64], sizes = [8, 32], strides = [1, 1]} : vector<8x128xf32> to vector<8x32xf32>
    %504 = vector.extract_strided_slice %486 {offsets = [0, 64], sizes = [8, 32], strides = [1, 1]} : vector<8x128xf32> to vector<8x32xf32>
    %505 = vector.broadcast %1 : vector<1x32xf32> to vector<8x32xf32>
    %506 = arith.addf %504, %505 : vector<8x32xf32>
    %507 = arith.mulf %494, %506 : vector<8x32xf32>
    %508 = arith.addf %503, %507 : vector<8x32xf32>
    %509 = math.tanh %508 : vector<8x32xf32>
    %cst_98 = arith.constant 1.000000e+00 : f32
    %510 = vector.broadcast %cst_98 : f32 to vector<8x32xf32>
    %511 = arith.subf %510, %502 : vector<8x32xf32>
    %512 = arith.mulf %511, %509 : vector<8x32xf32>
    %513 = arith.mulf %502, %482 : vector<8x32xf32>
    %514 = arith.addf %512, %513 : vector<8x32xf32>
    %c16_i32 = arith.constant 16 : i32
    %c0_99 = arith.constant 0 : index
    %c0_100 = arith.constant 0 : index
    %515 = vector.load %arg4[%c0_99, %c0_100] : memref<8x32xf32, #tpu.memory_space<vmem>>, vector<8x32xf32>
    tpu.vector_store %arg4[%c0_99, %c0_100], %514 {strides = array<i32>} : memref<8x32xf32, #tpu.memory_space<vmem>>, vector<8x32xf32>,
    return
  }
  func.func @transform_0(%arg0: i32) -> (i32, i32, i32) {
    %c0_i32 = arith.constant 0 : i32
    %c0_i32_0 = arith.constant 0 : i32
    %c0_i32_1 = arith.constant 0 : i32
    %c0_i32_2 = arith.constant 0 : i32
    return %c0_i32, %c0_i32_0, %c0_i32_1 : i32, i32, i32
  }
  func.func @transform_1(%arg0: i32) -> (i32, i32) {
    %c0_i32 = arith.constant 0 : i32
    %c0_i32_0 = arith.constant 0 : i32
    %c0_i32_1 = arith.constant 0 : i32
    return %c0_i32, %c0_i32_0 : i32, i32
  }
  func.func @transform_2(%arg0: i32) -> (i32, i32) {
    %c0_i32 = arith.constant 0 : i32
    %c0_i32_0 = arith.constant 0 : i32
    %c0_i32_1 = arith.constant 0 : i32
    return %c0_i32, %c0_i32_0 : i32, i32
  }
  func.func @transform_3(%arg0: i32) -> (i32, i32) {
    %c0_i32 = arith.constant 0 : i32
    %c0_i32_0 = arith.constant 0 : i32
    %c0_i32_1 = arith.constant 0 : i32
    return %c0_i32, %c0_i32_0 : i32, i32
  }
}

</mosaic_0001>

<llo_original>
// kernel: genc_gar_forward.2
$region0: #{genc_gar_forward.2}
  #allocation0 [shape = 'u32[]', space=smem, size = 0x4, offset = 0x4, fixed_abs, tag = 'smem constant byte address 0x4 - core index']
  #allocation1 [shape = 'u32[144,128]{1,0:T(1,128)}', space=vmem, size = 0x12000, scoped, tag = 'internal scratch']
  %s0 = inlined_call_operand.vmem [shape: f32[144,6], index: 0, kind: input, shape index: {}]
  %s1 = inlined_call_operand.vmem [shape: f32[3,6,32], index: 1, kind: input, shape index: {}]
  %s2 = inlined_call_operand.vmem [shape: f32[1,32], index: 2, kind: input, shape index: {}]
  %s3 = inlined_call_operand.vmem [shape: f32[32,128], index: 3, kind: input, shape index: {}]
  %s4 = inlined_call_operand.vmem [shape: f32[1,128], index: 4, kind: input, shape index: {}]
  %s5 = inlined_call_operand.vmem [shape: f32[128,128], index: 5, kind: output, shape index: {}]
  %s6 = sld [smem:[#allocation0]]
  $region30: #{genc_gar_forward.2} parent=0
    _
  %s8 = ssub.s32 1, %s6
  %s9 = scalar_select 0, %s8, %s6
  // Predicated region
  $region2: #{genc_gar_forward.2} parent=0 // pred_check
    _
  $region3: #{genc_gar_forward.2} parent=0 // pred_check_branch
    %11 = sbr.rel (0) target = $region5
  $region4: #{genc_gar_forward.2} parent=0 // pred_region
    _
  $region5: #{genc_gar_forward.2} parent=0 // pred_fallthru
    _
  // Predicated region
  $region6: #{genc_gar_forward.2} parent=0 // pred_check
    _
  $region7: #{genc_gar_forward.2} parent=0 // pred_check_branch
    %13 = sbr.rel (0) target = $region9
  $region8: #{genc_gar_forward.2} parent=0 // pred_region
    _
  $region9: #{genc_gar_forward.2} parent=0 // pred_fallthru
    _
  // Predicated region
  $region10: #{genc_gar_forward.2} parent=0 // pred_check
    _
  $region11: #{genc_gar_forward.2} parent=0 // pred_check_branch
    %15 = sbr.rel (0) target = $region13
  $region12: #{genc_gar_forward.2} parent=0 // pred_region
    _
  $region13: #{genc_gar_forward.2} parent=0 // pred_fallthru
    _
  // Predicated region
  $region14: #{genc_gar_forward.2} parent=0 // pred_check
    _
  $region15: #{genc_gar_forward.2} parent=0 // pred_check_branch
    %17 = sbr.rel (0) target = $region17
  $region16: #{genc_gar_forward.2} parent=0 // pred_region
    _
  $region17: #{genc_gar_forward.2} parent=0 // pred_fallthru
    _
  // Predicated region
  $region18: #{genc_gar_forward.2} parent=0 // pred_check
    _
  $region19: #{genc_gar_forward.2} parent=0 // pred_check_branch
    %19 = sbr.rel (0) target = $region21
  $region20: #{genc_gar_forward.2} parent=0 // pred_region
    _
  $region21: #{genc_gar_forward.2} parent=0 // pred_fallthru
    _
  %s20 = smul.u32 0, 128
  %s21 = scalar_lea.vmem %s0, %s20
  %v22 = vld [vmem:[%s21] sm:$0xff]
  %v23 = vld [vmem:[%s21 + $0x8] sm:$0xff]
  %v24 = vld [vmem:[%s21 + $0x10] sm:$0xff]
  %v25 = vld [vmem:[%s21 + $0x18] sm:$0xff]
  %v26 = vld [vmem:[%s21 + $0x20] sm:$0xff]
  %v27 = vld [vmem:[%s21 + $0x28] sm:$0xff]
  %v28 = vld [vmem:[%s21 + $0x30] sm:$0xff]
  %v29 = vld [vmem:[%s21 + $0x38] sm:$0xff]
  %v30 = vld [vmem:[%s21 + $0x40] sm:$0xff]
  %v31 = vld [vmem:[%s21 + $0x48] sm:$0xff]
  %v32 = vld [vmem:[%s21 + $0x50] sm:$0xff]
  %v33 = vld [vmem:[%s21 + $0x58] sm:$0xff]
  %v34 = vld [vmem:[%s21 + $0x60] sm:$0xff]
  %v35 = vld [vmem:[%s21 + $0x68] sm:$0xff]
  %v36 = vld [vmem:[%s21 + $0x70] sm:$0xff]
  %v37 = vld [vmem:[%s21 + $0x78] sm:$0xff]
  %v38 = vld [vmem:[%s1] sm:$0x3f]
  %s39 = sadd.s32 %s20, 8
  %s40 = scalar_lea.vmem %s0, %s39
  %v41 = vld [vmem:[%s40] sm:$0xff]
  %v42 = vld [vmem:[%s40 + $0x8] sm:$0xff]
  %v43 = vld [vmem:[%s40 + $0x10] sm:$0xff]
  %v44 = vld [vmem:[%s40 + $0x18] sm:$0xff]
  %v45 = vld [vmem:[%s40 + $0x20] sm:$0xff]
  %v46 = vld [vmem:[%s40 + $0x28] sm:$0xff]
  %v47 = vld [vmem:[%s40 + $0x30] sm:$0xff]
  %v48 = vld [vmem:[%s40 + $0x38] sm:$0xff]
  %v49 = vld [vmem:[%s40 + $0x40] sm:$0xff]
  %v50 = vld [vmem:[%s40 + $0x48] sm:$0xff]
  %v51 = vld [vmem:[%s40 + $0x50] sm:$0xff]
  %v52 = vld [vmem:[%s40 + $0x58] sm:$0xff]
  %v53 = vld [vmem:[%s40 + $0x60] sm:$0xff]
  %v54 = vld [vmem:[%s40 + $0x68] sm:$0xff]
  %v55 = vld [vmem:[%s40 + $0x70] sm:$0xff]
  %v56 = vld [vmem:[%s40 + $0x78] sm:$0xff]
  %s57 = scalar_lea.vmem %s1, 8
  %v58 = vld [vmem:[%s57] sm:$0x3f]
  %vm59 = vcmask 48128
  %v61 = vsel %vm59, %v41, 0
  %v64 = vsel %vm59, %v42, 0
  %v67 = vsel %vm59, %v43, 0
  %v70 = vsel %vm59, %v44, 0
  %v73 = vsel %vm59, %v45, 0
  %v76 = vsel %vm59, %v46, 0
  %v79 = vsel %vm59, %v47, 0
  %v82 = vsel %vm59, %v48, 0
  %v85 = vsel %vm59, %v49, 0
  %v88 = vsel %vm59, %v50, 0
  %v91 = vsel %vm59, %v51, 0
  %v94 = vsel %vm59, %v52, 0
  %v97 = vsel %vm59, %v53, 0
  %v100 = vsel %vm59, %v54, 0
  %v103 = vsel %vm59, %v55, 0
  %v106 = vsel %vm59, %v56, 0
  %vm108 = vcmask 1045504
  %v110 = vsel %vm108, %v58, 0
  %112 = vmatprep.subr.mxu0 0.0
  %113 = vmatpush1.msra.mxu0 %v110
  %114 = vmatprep.subr.mxu0 0.0
  %115 = vmatpush1.msra.mxu0 0.0
  %116 = vmatprep.subr.mxu0 0.0
  %117 = vmatpush1.msra.mxu0 0.0
  %118 = vmatprep.subr.mxu0 0.0
  %119 = vmatpush1.msra.mxu0 0.0
  %120 = vmatprep.subr.mxu0 0.0
  %121 = vmatpush1.msra.mxu0 0.0
  %122 = vmatprep.subr.mxu0 0.0
  %123 = vmatpush1.msra.mxu0 0.0
  %124 = vmatprep.subr.mxu0 0.0
  %125 = vmatpush1.msra.mxu0 0.0
  %126 = vmatprep.subr.mxu0 0.0
  %127 = vmatpush1.msra.mxu0 0.0
  %128 = vmatprep.subr.mxu0 0.0
  %129 = vmatpush1.msra.mxu0 0.0
  %130 = vmatprep.subr.mxu0 0.0
  %131 = vmatpush1.msra.mxu0 0.0
  %132 = vmatprep.subr.mxu0 0.0
  %133 = vmatpush1.msra.mxu0 0.0
  %134 = vmatprep.subr.mxu0 0.0
  %135 = vmatpush1.msra.mxu0 0.0
  %136 = vmatprep.subr.mxu0 0.0
  %137 = vmatpush1.msra.mxu0 0.0
  %138 = vmatprep.subr.mxu0 0.0
  %139 = vmatpush1.msra.mxu0 0.0
  %140 = vmatprep.subr.mxu0 0.0
  %141 = vmatpush1.msra.mxu0 0.0
  %142 = vmatprep.subr.mxu0 0.0
  %143 = vmatpush1.msra.mxu0 0.0
  %144 = vmatprep.subr.mxu0 0.0
  %145 = vmatpush1.msra.mxu0 0.0
  %146 = vmatprep.subr.mxu0 0.0
  %147 = vmatpush1.msra.mxu0 0.0
  %148 = vmatprep.subr.mxu0 0.0
  %149 = vmatpush1.msra.mxu0 0.0
  %150 = vmatprep.subr.mxu0 0.0
  %151 = vmatpush1.msra.mxu0 0.0
  %152 = vmatprep.subr.mxu0 0.0
  %153 = vmatpush1.msra.mxu0 0.0
  %154 = vmatprep.subr.mxu0 0.0
  %155 = vmatpush1.msra.mxu0 0.0
  %156 = vmatprep.subr.mxu0 0.0
  %157 = vmatpush1.msra.mxu0 0.0
  %158 = vmatprep.subr.mxu0 0.0
  %159 = vmatpush1.msra.mxu0 0.0
  %160 = vmatprep.subr.mxu0 0.0
  %161 = vmatpush1.msra.mxu0 0.0
  %162 = vmatprep.subr.mxu0 0.0
  %163 = vmatpush1.msra.mxu0 0.0
  %164 = vmatprep.subr.mxu0 0.0
  %165 = vmatpush1.msra.mxu0 0.0
  %166 = vmatprep.subr.mxu0 0.0
  %167 = vmatpush1.msra.mxu0 0.0
  %168 = vmatprep.subr.mxu0 0.0
  %169 = vmatpush1.msra.mxu0 0.0
  %170 = vmatprep.subr.mxu0 0.0
  %171 = vmatpush1.msra.mxu0 0.0
  %172 = vmatprep.subr.mxu0 0.0
  %173 = vmatpush1.msra.mxu0 0.0
  %174 = vmatprep.subr.mxu0 0.0
  %175 = vmatpush1.msra.mxu0 0.0
  %176 = vmatprep.mubr.f32.mxu0 0.0
  %177 = vmatmul.mubr.f32.gmra.mrb[0].mxu0 %v61
  %v178 = vpop.f32.mrb[0].mxu0
  %v179 = vadd.f32 0.0, %v178
  %v180 = vpop.f32.mrb[0].mxu0
  %181 = vmatprep.mubr.f32.mxu0 0.0
  %182 = vmatmul.mubr.f32.gmra.mrb[0].mxu0 %v64
  %v183 = vpop.f32.mrb[0].mxu0
  %v184 = vadd.f32 0.0, %v183
  %v185 = vpop.f32.mrb[0].mxu0
  %186 = vmatprep.mubr.f32.mxu0 0.0
  %187 = vmatmul.mubr.f32.gmra.mrb[0].mxu0 %v67
  %v188 = vpop.f32.mrb[0].mxu0
  %v189 = vadd.f32 0.0, %v188
  %v190 = vpop.f32.mrb[0].mxu0
  %191 = vmatprep.mubr.f32.mxu0 0.0
  %192 = vmatmul.mubr.f32.gmra.mrb[0].mxu0 %v70
  %v193 = vpop.f32.mrb[0].mxu0
  %v194 = vadd.f32 0.0, %v193
  %v195 = vpop.f32.mrb[0].mxu0
  %196 = vmatprep.mubr.f32.mxu0 0.0
  %197 = vmatmul.mubr.f32.gmra.mrb[0].mxu0 %v73
  %v198 = vpop.f32.mrb[0].mxu0
  %v199 = vadd.f32 0.0, %v198
  %v200 = vpop.f32.mrb[0].mxu0
  %201 = vmatprep.mubr.f32.mxu0 0.0
  %202 = vmatmul.mubr.f32.gmra.mrb[0].mxu0 %v76
  %v203 = vpop.f32.mrb[0].mxu0
  %v204 = vadd.f32 0.0, %v203
  %v205 = vpop.f32.mrb[0].mxu0
  %206 = vmatprep.mubr.f32.mxu0 0.0
  %207 = vmatmul.mubr.f32.gmra.mrb[0].mxu0 %v79
  %v208 = vpop.f32.mrb[0].mxu0
  %v209 = vadd.f32 0.0, %v208
  %v210 = vpop.f32.mrb[0].mxu0
  %211 = vmatprep.mubr.f32.mxu0 0.0
  %212 = vmatmul.mubr.f32.gmra.mrb[0].mxu0 %v82
  %v213 = vpop.f32.mrb[0].mxu0
  %v214 = vadd.f32 0.0, %v213
  %v215 = vpop.f32.mrb[0].mxu0
  %216 = vmatprep.mubr.f32.mxu0 0.0
  %217 = vmatmul.mubr.f32.gmra.mrb[0].mxu0 %v85
  %v218 = vpop.f32.mrb[0].mxu0
  %v219 = vadd.f32 0.0, %v218
  %v220 = vpop.f32.mrb[0].mxu0
  %221 = vmatprep.mubr.f32.mxu0 0.0
  %222 = vmatmul.mubr.f32.gmra.mrb[0].mxu0 %v88
  %v223 = vpop.f32.mrb[0].mxu0
  %v224 = vadd.f32 0.0, %v223
  %v225 = vpop.f32.mrb[0].mxu0
  %226 = vmatprep.mubr.f32.mxu0 0.0
  %227 = vmatmul.mubr.f32.gmra.mrb[0].mxu0 %v91
  %v228 = vpop.f32.mrb[0].mxu0
  %v229 = vadd.f32 0.0, %v228
  %v230 = vpop.f32.mrb[0].mxu0
  %231 = vmatprep.mubr.f32.mxu0 0.0
  %232 = vmatmul.mubr.f32.gmra.mrb[0].mxu0 %v94
  %v233 = vpop.f32.mrb[0].mxu0
  %v234 = vadd.f32 0.0, %v233
  %v235 = vpop.f32.mrb[0].mxu0
  %236 = vmatprep.mubr.f32.mxu0 0.0
  %237 = vmatmul.mubr.f32.gmra.mrb[0].mxu0 %v97
  %v238 = vpop.f32.mrb[0].mxu0
  %v239 = vadd.f32 0.0, %v238
  %v240 = vpop.f32.mrb[0].mxu0
  %241 = vmatprep.mubr.f32.mxu0 0.0
  %242 = vmatmul.mubr.f32.gmra.mrb[0].mxu0 %v100
  %v243 = vpop.f32.mrb[0].mxu0
  %v244 = vadd.f32 0.0, %v243
  %v245 = vpop.f32.mrb[0].mxu0
  %246 = vmatprep.mubr.f32.mxu0 0.0
  %247 = vmatmul.mubr.f32.gmra.mrb[0].mxu0 %v103
  %v248 = vpop.f32.mrb[0].mxu0
  %v249 = vadd.f32 0.0, %v248
  %v250 = vpop.f32.mrb[0].mxu0
  %251 = vmatprep.mubr.f32.mxu0 0.0
  %252 = vmatmul.mubr.f32.gmra.mrb[0].mxu0 %v106
  %v253 = vpop.f32.mrb[0].mxu0
  %v254 = vadd.f32 0.0, %v253
  %v255 = vpop.f32.mrb[0].mxu0
  %256 = vdwg.mxu0
  %v258 = vsel %vm59, %v22, 0
  %v261 = vsel %vm59, %v23, 0
  %v264 = vsel %vm59, %v24, 0
  %v267 = vsel %vm59, %v25, 0
  %v270 = vsel %vm59, %v26, 0
  %v273 = vsel %vm59, %v27, 0
  %v276 = vsel %vm59, %v28, 0
  %v279 = vsel %vm59, %v29, 0
  %v282 = vsel %vm59, %v30, 0
  %v285 = vsel %vm59, %v31, 0
  %v288 = vsel %vm59, %v32, 0
  %v291 = vsel %vm59, %v33, 0
  %v294 = vsel %vm59, %v34, 0
  %v297 = vsel %vm59, %v35, 0
  %v300 = vsel %vm59, %v36, 0
  %v303 = vsel %vm59, %v37, 0
  %v306 = vsel %vm108, %v38, 0
  %308 = vmatprep.subr.mxu0 0.0
  %309 = vmatpush1.msra.mxu0 %v306
  %310 = vmatprep.subr.mxu0 0.0
  %311 = vmatpush1.msra.mxu0 0.0
  %312 = vmatprep.subr.mxu0 0.0
  %313 = vmatpush1.msra.mxu0 0.0
  %314 = vmatprep.subr.mxu0 0.0
  %315 = vmatpush1.msra.mxu0 0.0
  %316 = vmatprep.subr.mxu0 0.0
  %317 = vmatpush1.msra.mxu0 0.0
  %318 = vmatprep.subr.mxu0 0.0
  %319 = vmatpush1.msra.mxu0 0.0
  %320 = vmatprep.subr.mxu0 0.0
  %321 = vmatpush1.msra.mxu0 0.0
  %322 = vmatprep.subr.mxu0 0.0
  %323 = vmatpush1.msra.mxu0 0.0
  %324 = vmatprep.subr.mxu0 0.0
  %325 = vmatpush1.msra.mxu0 0.0
  %326 = vmatprep.subr.mxu0 0.0
  %327 = vmatpush1.msra.mxu0 0.0
  %328 = vmatprep.subr.mxu0 0.0
  %329 = vmatpush1.msra.mxu0 0.0
  %330 = vmatprep.subr.mxu0 0.0
  %331 = vmatpush1.msra.mxu0 0.0
  %332 = vmatprep.subr.mxu0 0.0
  %333 = vmatpush1.msra.mxu0 0.0
  %334 = vmatprep.subr.mxu0 0.0
  %335 = vmatpush1.msra.mxu0 0.0
  %336 = vmatprep.subr.mxu0 0.0
  %337 = vmatpush1.msra.mxu0 0.0
  %338 = vmatprep.subr.mxu0 0.0
  %339 = vmatpush1.msra.mxu0 0.0
  %340 = vmatprep.subr.mxu0 0.0
  %341 = vmatpush1.msra.mxu0 0.0
  %342 = vmatprep.subr.mxu0 0.0
  %343 = vmatpush1.msra.mxu0 0.0
  %344 = vmatprep.subr.mxu0 0.0
  %345 = vmatpush1.msra.mxu0 0.0
  %346 = vmatprep.subr.mxu0 0.0
  %347 = vmatpush1.msra.mxu0 0.0
  %348 = vmatprep.subr.mxu0 0.0
  %349 = vmatpush1.msra.mxu0 0.0
  %350 = vmatprep.subr.mxu0 0.0
  %351 = vmatpush1.msra.mxu0 0.0
  %352 = vmatprep.subr.mxu0 0.0
  %353 = vmatpush1.msra.mxu0 0.0
  %354 = vmatprep.subr.mxu0 0.0
  %355 = vmatpush1.msra.mxu0 0.0
  %356 = vmatprep.subr.mxu0 0.0
  %357 = vmatpush1.msra.mxu0 0.0
  %358 = vmatprep.subr.mxu0 0.0
  %359 = vmatpush1.msra.mxu0 0.0
  %360 = vmatprep.subr.mxu0 0.0
  %361 = vmatpush1.msra.mxu0 0.0
  %362 = vmatprep.subr.mxu0 0.0
  %363 = vmatpush1.msra.mxu0 0.0
  %364 = vmatprep.subr.mxu0 0.0
  %365 = vmatpush1.msra.mxu0 0.0
  %366 = vmatprep.subr.mxu0 0.0
  %367 = vmatpush1.msra.mxu0 0.0
  %368 = vmatprep.subr.mxu0 0.0
  %369 = vmatpush1.msra.mxu0 0.0
  %370 = vmatprep.subr.mxu0 0.0
  %371 = vmatpush1.msra.mxu0 0.0
  %372 = vmatprep.mubr.f32.mxu0 0.0
  %373 = vmatmul.mubr.f32.gmra.mrb[0].mxu0 %v258
  %v374 = vpop.f32.mrb[0].mxu0
  %v375 = vadd.f32 %v179, %v374
  %v376 = vpop.f32.mrb[0].mxu0
  %377 = vmatprep.mubr.f32.mxu0 0.0
  %378 = vmatmul.mubr.f32.gmra.mrb[0].mxu0 %v261
  %v379 = vpop.f32.mrb[0].mxu0
  %v380 = vadd.f32 %v184, %v379
  %v381 = vpop.f32.mrb[0].mxu0
  %382 = vmatprep.mubr.f32.mxu0 0.0
  %383 = vmatmul.mubr.f32.gmra.mrb[0].mxu0 %v264
  %v384 = vpop.f32.mrb[0].mxu0
  %v385 = vadd.f32 %v189, %v384
  %v386 = vpop.f32.mrb[0].mxu0
  %387 = vmatprep.mubr.f32.mxu0 0.0
  %388 = vmatmul.mubr.f32.gmra.mrb[0].mxu0 %v267
  %v389 = vpop.f32.mrb[0].mxu0
  %v390 = vadd.f32 %v194, %v389
  %v391 = vpop.f32.mrb[0].mxu0
  %392 = vmatprep.mubr.f32.mxu0 0.0
  %393 = vmatmul.mubr.f32.gmra.mrb[0].mxu0 %v270
  %v394 = vpop.f32.mrb[0].mxu0
  %v395 = vadd.f32 %v199, %v394
  %v396 = vpop.f32.mrb[0].mxu0
  %397 = vmatprep.mubr.f32.mxu0 0.0
  %398 = vmatmul.mubr.f32.gmra.mrb[0].mxu0 %v273
  %v399 = vpop.f32.mrb[0].mxu0
  %v400 = vadd.f32 %v204, %v399
  %v401 = vpop.f32.mrb[0].mxu0
  %402 = vmatprep.mubr.f32.mxu0 0.0
  %403 = vmatmul.mubr.f32.gmra.mrb[0].mxu0 %v276
  %v404 = vpop.f32.mrb[0].mxu0
  %v405 = vadd.f32 %v209, %v404
  %v406 = vpop.f32.mrb[0].mxu0
  %407 = vmatprep.mubr.f32.mxu0 0.0
  %408 = vmatmul.mubr.f32.gmra.mrb[0].mxu0 %v279
  %v409 = vpop.f32.mrb[0].mxu0
  %v410 = vadd.f32 %v214, %v409
  %v411 = vpop.f32.mrb[0].mxu0
  %412 = vmatprep.mubr.f32.mxu0 0.0
  %413 = vmatmul.mubr.f32.gmra.mrb[0].mxu0 %v282
  %v414 = vpop.f32.mrb[0].mxu0
  %v415 = vadd.f32 %v219, %v414
  %v416 = vpop.f32.mrb[0].mxu0
  %417 = vmatprep.mubr.f32.mxu0 0.0
  %418 = vmatmul.mubr.f32.gmra.mrb[0].mxu0 %v285
  %v419 = vpop.f32.mrb[0].mxu0
  %v420 = vadd.f32 %v224, %v419
  %v421 = vpop.f32.mrb[0].mxu0
  %422 = vmatprep.mubr.f32.mxu0 0.0
  %423 = vmatmul.mubr.f32.gmra.mrb[0].mxu0 %v288
  %v424 = vpop.f32.mrb[0].mxu0
  %v425 = vadd.f32 %v229, %v424
  %v426 = vpop.f32.mrb[0].mxu0
  %427 = vmatprep.mubr.f32.mxu0 0.0
  %428 = vmatmul.mubr.f32.gmra.mrb[0].mxu0 %v291
  %v429 = vpop.f32.mrb[0].mxu0
  %v430 = vadd.f32 %v234, %v429
  %v431 = vpop.f32.mrb[0].mxu0
  %432 = vmatprep.mubr.f32.mxu0 0.0
  %433 = vmatmul.mubr.f32.gmra.mrb[0].mxu0 %v294
  %v434 = vpop.f32.mrb[0].mxu0
  %v435 = vadd.f32 %v239, %v434
  %v436 = vpop.f32.mrb[0].mxu0
  %437 = vmatprep.mubr.f32.mxu0 0.0
  %438 = vmatmul.mubr.f32.gmra.mrb[0].mxu0 %v297
  %v439 = vpop.f32.mrb[0].mxu0
  %v440 = vadd.f32 %v244, %v439
  %v441 = vpop.f32.mrb[0].mxu0
  %442 = vmatprep.mubr.f32.mxu0 0.0
  %443 = vmatmul.mubr.f32.gmra.mrb[0].mxu0 %v300
  %v444 = vpop.f32.mrb[0].mxu0
  %v445 = vadd.f32 %v249, %v444
  %v446 = vpop.f32.mrb[0].mxu0
  %447 = vmatprep.mubr.f32.mxu0 0.0
  %448 = vmatmul.mubr.f32.gmra.mrb[0].mxu0 %v303
  %v449 = vpop.f32.mrb[0].mxu0
  %v450 = vadd.f32 %v254, %v449
  %v451 = vpop.f32.mrb[0].mxu0
  %452 = vdwg.mxu0
  %s453 = sadd.s32 %s20, 16
  %s454 = scalar_lea.vmem %s0, %s453
  %v455 = vld [vmem:[%s454] sm:$0xff]
  %v456 = vld [vmem:[%s454 + $0x8] sm:$0xff]
  %v457 = vld [vmem:[%s454 + $0x10] sm:$0xff]
  %v458 = vld [vmem:[%s454 + $0x18] sm:$0xff]
  %v459 = vld [vmem:[%s454 + $0x20] sm:$0xff]
  %v460 = vld [vmem:[%s454 + $0x28] sm:$0xff]
  %v461 = vld [vmem:[%s454 + $0x30] sm:$0xff]
  %v462 = vld [vmem:[%s454 + $0x38] sm:$0xff]
  %v463 = vld [vmem:[%s454 + $0x40] sm:$0xff]
  %v464 = vld [vmem:[%s454 + $0x48] sm:$0xff]
  %v465 = vld [vmem:[%s454 + $0x50] sm:$0xff]
  %v466 = vld [vmem:[%s454 + $0x58] sm:$0xff]
  %v467 = vld [vmem:[%s454 + $0x60] sm:$0xff]
  %v468 = vld [vmem:[%s454 + $0x68] sm:$0xff]
  %v469 = vld [vmem:[%s454 + $0x70] sm:$0xff]
  %v470 = vld [vmem:[%s454 + $0x78] sm:$0xff]
  %s471 = scalar_lea.vmem %s1, 16
  %v472 = vld [vmem:[%s471] sm:$0x3f]
  %v474 = vsel %vm59, %v455, 0
  %v477 = vsel %vm59, %v456, 0
  %v480 = vsel %vm59, %v457, 0
  %v483 = vsel %vm59, %v458, 0
  %v486 = vsel %vm59, %v459, 0
  %v489 = vsel %vm59, %v460, 0
  %v492 = vsel %vm59, %v461, 0
  %v495 = vsel %vm59, %v462, 0
  %v498 = vsel %vm59, %v463, 0
  %v501 = vsel %vm59, %v464, 0
  %v504 = vsel %vm59, %v465, 0
  %v507 = vsel %vm59, %v466, 0
  %v510 = vsel %vm59, %v467, 0
  %v513 = vsel %vm59, %v468, 0
  %v516 = vsel %vm59, %v469, 0
  %v519 = vsel %vm59, %v470, 0
  %v522 = vsel %vm108, %v472, 0
  %524 = vmatprep.subr.mxu0 0.0
  %525 = vmatpush1.msra.mxu0 %v522
  %526 = vmatprep.subr.mxu0 0.0
  %527 = vmatpush1.msra.mxu0 0.0
  %528 = vmatprep.subr.mxu0 0.0
  %529 = vmatpush1.msra.mxu0 0.0
  %530 = vmatprep.subr.mxu0 0.0
  %531 = vmatpush1.msra.mxu0 0.0
  %532 = vmatprep.subr.mxu0 0.0
  %533 = vmatpush1.msra.mxu0 0.0
  %534 = vmatprep.subr.mxu0 0.0
  %535 = vmatpush1.msra.mxu0 0.0
  %536 = vmatprep.subr.mxu0 0.0
  %537 = vmatpush1.msra.mxu0 0.0
  %538 = vmatprep.subr.mxu0 0.0
  %539 = vmatpush1.msra.mxu0 0.0
  %540 = vmatprep.subr.mxu0 0.0
  %541 = vmatpush1.msra.mxu0 0.0
  %542 = vmatprep.subr.mxu0 0.0
  %543 = vmatpush1.msra.mxu0 0.0
  %544 = vmatprep.subr.mxu0 0.0
  %545 = vmatpush1.msra.mxu0 0.0
  %546 = vmatprep.subr.mxu0 0.0
  %547 = vmatpush1.msra.mxu0 0.0
  %548 = vmatprep.subr.mxu0 0.0
  %549 = vmatpush1.msra.mxu0 0.0
  %550 = vmatprep.subr.mxu0 0.0
  %551 = vmatpush1.msra.mxu0 0.0
  %552 = vmatprep.subr.mxu0 0.0
  %553 = vmatpush1.msra.mxu0 0.0
  %554 = vmatprep.subr.mxu0 0.0
  %555 = vmatpush1.msra.mxu0 0.0
  %556 = vmatprep.subr.mxu0 0.0
  %557 = vmatpush1.msra.mxu0 0.0
  %558 = vmatprep.subr.mxu0 0.0
  %559 = vmatpush1.msra.mxu0 0.0
  %560 = vmatprep.subr.mxu0 0.0
  %561 = vmatpush1.msra.mxu0 0.0
  %562 = vmatprep.subr.mxu0 0.0
  %563 = vmatpush1.msra.mxu0 0.0
  %564 = vmatprep.subr.mxu0 0.0
  %565 = vmatpush1.msra.mxu0 0.0
  %566 = vmatprep.subr.mxu0 0.0
  %567 = vmatpush1.msra.mxu0 0.0
  %568 = vmatprep.subr.mxu0 0.0
  %569 = vmatpush1.msra.mxu0 0.0
  %570 = vmatprep.subr.mxu0 0.0
  %571 = vmatpush1.msra.mxu0 0.0
  %572 = vmatprep.subr.mxu0 0.0
  %573 = vmatpush1.msra.mxu0 0.0
  %574 = vmatprep.subr.mxu0 0.0
  %575 = vmatpush1.msra.mxu0 0.0
  %576 = vmatprep.subr.mxu0 0.0
  %577 = vmatpush1.msra.mxu0 0.0
  %578 = vmatprep.subr.mxu0 0.0
  %579 = vmatpush1.msra.mxu0 0.0
  %580 = vmatprep.subr.mxu0 0.0
  %581 = vmatpush1.msra.mxu0 0.0
  %582 = vmatprep.subr.mxu0 0.0
  %583 = vmatpush1.msra.mxu0 0.0
  %584 = vmatprep.subr.mxu0 0.0
  %585 = vmatpush1.msra.mxu0 0.0
  %586 = vmatprep.subr.mxu0 0.0
  %587 = vmatpush1.msra.mxu0 0.0
  %588 = vmatprep.mubr.f32.mxu0 0.0
  %589 = vmatmul.mubr.f32.gmra.mrb[0].mxu0 %v474
  %v590 = vpop.f32.mrb[0].mxu0
  %v591 = vadd.f32 0.0, %v590
  %v592 = vpop.f32.mrb[0].mxu0
  %593 = vmatprep.mubr.f32.mxu0 0.0
  %594 = vmatmul.mubr.f32.gmra.mrb[0].mxu0 %v477
  %v595 = vpop.f32.mrb[0].mxu0
  %v596 = vadd.f32 0.0, %v595
  %v597 = vpop.f32.mrb[0].mxu0
  %598 = vmatprep.mubr.f32.mxu0 0.0
  %599 = vmatmul.mubr.f32.gmra.mrb[0].mxu0 %v480
  %v600 = vpop.f32.mrb[0].mxu0
  %v601 = vadd.f32 0.0, %v600
  %v602 = vpop.f32.mrb[0].mxu0
  %603 = vmatprep.mubr.f32.mxu0 0.0
  %604 = vmatmul.mubr.f32.gmra.mrb[0].mxu0 %v483
  %v605 = vpop.f32.mrb[0].mxu0
  %v606 = vadd.f32 0.0, %v605
  %v607 = vpop.f32.mrb[0].mxu0
  %608 = vmatprep.mubr.f32.mxu0 0.0
  %609 = vmatmul.mubr.f32.gmra.mrb[0].mxu0 %v486
  %v610 = vpop.f32.mrb[0].mxu0
  %v611 = vadd.f32 0.0, %v610
  %v612 = vpop.f32.mrb[0].mxu0
  %613 = vmatprep.mubr.f32.mxu0 0.0
  %614 = vmatmul.mubr.f32.gmra.mrb[0].mxu0 %v489
  %v615 = vpop.f32.mrb[0].mxu0
  %v616 = vadd.f32 0.0, %v615
  %v617 = vpop.f32.mrb[0].mxu0
  %618 = vmatprep.mubr.f32.mxu0 0.0
  %619 = vmatmul.mubr.f32.gmra.mrb[0].mxu0 %v492
  %v620 = vpop.f32.mrb[0].mxu0
  %v621 = vadd.f32 0.0, %v620
  %v622 = vpop.f32.mrb[0].mxu0
  %623 = vmatprep.mubr.f32.mxu0 0.0
  %624 = vmatmul.mubr.f32.gmra.mrb[0].mxu0 %v495
  %v625 = vpop.f32.mrb[0].mxu0
  %v626 = vadd.f32 0.0, %v625
  %v627 = vpop.f32.mrb[0].mxu0
  %628 = vmatprep.mubr.f32.mxu0 0.0
  %629 = vmatmul.mubr.f32.gmra.mrb[0].mxu0 %v498
  %v630 = vpop.f32.mrb[0].mxu0
  %v631 = vadd.f32 0.0, %v630
  %v632 = vpop.f32.mrb[0].mxu0
  %633 = vmatprep.mubr.f32.mxu0 0.0
  %634 = vmatmul.mubr.f32.gmra.mrb[0].mxu0 %v501
  %v635 = vpop.f32.mrb[0].mxu0
  %v636 = vadd.f32 0.0, %v635
  %v637 = vpop.f32.mrb[0].mxu0
  %638 = vmatprep.mubr.f32.mxu0 0.0
  %639 = vmatmul.mubr.f32.gmra.mrb[0].mxu0 %v504
  %v640 = vpop.f32.mrb[0].mxu0
  %v641 = vadd.f32 0.0, %v640
  %v642 = vpop.f32.mrb[0].mxu0
  %643 = vmatprep.mubr.f32.mxu0 0.0
  %644 = vmatmul.mubr.f32.gmra.mrb[0].mxu0 %v507
  %v645 = vpop.f32.mrb[0].mxu0
  %v646 = vadd.f32 0.0, %v645
  %v647 = vpop.f32.mrb[0].mxu0
  %648 = vmatprep.mubr.f32.mxu0 0.0
  %649 = vmatmul.mubr.f32.gmra.mrb[0].mxu0 %v510
  %v650 = vpop.f32.mrb[0].mxu0
  %v651 = vadd.f32 0.0, %v650
  %v652 = vpop.f32.mrb[0].mxu0
  %653 = vmatprep.mubr.f32.mxu0 0.0
  %654 = vmatmul.mubr.f32.gmra.mrb[0].mxu0 %v513
  %v655 = vpop.f32.mrb[0].mxu0
  %v656 = vadd.f32 0.0, %v655
  %v657 = vpop.f32.mrb[0].mxu0
  %658 = vmatprep.mubr.f32.mxu0 0.0
  %659 = vmatmul.mubr.f32.gmra.mrb[0].mxu0 %v516
  %v660 = vpop.f32.mrb[0].mxu0
  %v661 = vadd.f32 0.0, %v660
  %v662 = vpop.f32.mrb[0].mxu0
  %663 = vmatprep.mubr.f32.mxu0 0.0
  %664 = vmatmul.mubr.f32.gmra.mrb[0].mxu0 %v519
  %v665 = vpop.f32.mrb[0].mxu0
  %v666 = vadd.f32 0.0, %v665
  %v667 = vpop.f32.mrb[0].mxu0
  %668 = vdwg.mxu0
  %v669 = vadd.f32 %v375, %v591
  %v670 = vadd.f32 %v380, %v596
  %v671 = vadd.f32 %v385, %v601
  %v672 = vadd.f32 %v390, %v606
  %v673 = vadd.f32 %v395, %v611
  %v674 = vadd.f32 %v400, %v616
  %v675 = vadd.f32 %v405, %v621
  %v676 = vadd.f32 %v410, %v626
  %v677 = vadd.f32 %v415, %v631
  %v678 = vadd.f32 %v420, %v636
  %v679 = vadd.f32 %v425, %v641
  %v680 = vadd.f32 %v430, %v646
  %v681 = vadd.f32 %v435, %v651
  %v682 = vadd.f32 %v440, %v656
  %v683 = vadd.f32 %v445, %v661
  %v684 = vadd.f32 %v450, %v666
  %v685 = vld [vmem:[%s2] sm:$0x1]
  %v687 = vlaneseq
  %v688 = vshrl.u32 %v687, 7
  %v689 = vsub.s32 0, %v688
  %v690 = vrot.slane %v685, %v689
  %v692 = vadd.f32 %v669, %v690
  %v693 = vadd.f32 %v670, %v690
  %v694 = vadd.f32 %v671, %v690
  %v695 = vadd.f32 %v672, %v690
  %v696 = vadd.f32 %v673, %v690
  %v697 = vadd.f32 %v674, %v690
  %v698 = vadd.f32 %v675, %v690
  %v699 = vadd.f32 %v676, %v690
  %v700 = vadd.f32 %v677, %v690
  %v701 = vadd.f32 %v678, %v690
  %v702 = vadd.f32 %v679, %v690
  %v703 = vadd.f32 %v680, %v690
  %v704 = vadd.f32 %v681, %v690
  %v705 = vadd.f32 %v682, %v690
  %v706 = vadd.f32 %v683, %v690
  %v707 = vadd.f32 %v684, %v690
  %v708 = vmax.f32 %v692, 0.0
  %v709 = vmax.f32 %v693, 0.0
  %v710 = vmax.f32 %v694, 0.0
  %v711 = vmax.f32 %v695, 0.0
  %v712 = vmax.f32 %v696, 0.0
  %v713 = vmax.f32 %v697, 0.0
  %v714 = vmax.f32 %v698, 0.0
  %v715 = vmax.f32 %v699, 0.0
  %v716 = vmax.f32 %v700, 0.0
  %v717 = vmax.f32 %v701, 0.0
  %v718 = vmax.f32 %v702, 0.0
  %v719 = vmax.f32 %v703, 0.0
  %v720 = vmax.f32 %v704, 0.0
  %v721 = vmax.f32 %v705, 0.0
  %v722 = vmax.f32 %v706, 0.0
  %v723 = vmax.f32 %v707, 0.0
  %v724 = vld [vmem:[%s3] sm:$0xff]
  %v725 = vld [vmem:[%s3 + $0x8] sm:$0xff]
  %v726 = vld [vmem:[%s3 + $0x10] sm:$0xff]
  %v727 = vld [vmem:[%s3 + $0x18] sm:$0xff]
  %v728 = vld [vmem:[%s4] sm:$0x1]
  %v730 = vlaneseq
  %v731 = vshrl.u32 %v730, 7
  %v732 = vsub.s32 0, %v731
  %v733 = vrot.slane %v728, %v732
  %vm735 = vcmask 261120
  %v737 = vsel %vm735, %v708, 0
  %v740 = vsel %vm735, %v709, 0
  %v743 = vsel %vm735, %v710, 0
  %v746 = vsel %vm735, %v711, 0
  %v749 = vsel %vm735, %v712, 0
  %v752 = vsel %vm735, %v713, 0
  %v755 = vsel %vm735, %v714, 0
  %v758 = vsel %vm735, %v715, 0
  %v761 = vsel %vm735, %v716, 0
  %v764 = vsel %vm735, %v717, 0
  %v767 = vsel %vm735, %v718, 0
  %v770 = vsel %vm735, %v719, 0
  %v773 = vsel %vm735, %v720, 0
  %v776 = vsel %vm735, %v721, 0
  %v779 = vsel %vm735, %v722, 0
  %v782 = vsel %vm735, %v723, 0
  %784 = vmatprep.subr.mxu0 0.0
  %785 = vmatpush1.msra.mxu0 %v724
  %786 = vmatprep.subr.mxu0 0.0
  %787 = vmatpush1.msra.mxu0 %v725
  %788 = vmatprep.subr.mxu0 0.0
  %789 = vmatpush1.msra.mxu0 %v726
  %790 = vmatprep.subr.mxu0 0.0
  %791 = vmatpush1.msra.mxu0 %v727
  %792 = vmatprep.subr.mxu0 0.0
  %793 = vmatpush1.msra.mxu0 0.0
  %794 = vmatprep.subr.mxu0 0.0
  %795 = vmatpush1.msra.mxu0 0.0
  %796 = vmatprep.subr.mxu0 0.0
  %797 = vmatpush1.msra.mxu0 0.0
  %798 = vmatprep.subr.mxu0 0.0
  %799 = vmatpush1.msra.mxu0 0.0
  %800 = vmatprep.subr.mxu0 0.0
  %801 = vmatpush1.msra.mxu0 0.0
  %802 = vmatprep.subr.mxu0 0.0
  %803 = vmatpush1.msra.mxu0 0.0
  %804 = vmatprep.subr.mxu0 0.0
  %805 = vmatpush1.msra.mxu0 0.0
  %806 = vmatprep.subr.mxu0 0.0
  %807 = vmatpush1.msra.mxu0 0.0
  %808 = vmatprep.subr.mxu0 0.0
  %809 = vmatpush1.msra.mxu0 0.0
  %810 = vmatprep.subr.mxu0 0.0
  %811 = vmatpush1.msra.mxu0 0.0
  %812 = vmatprep.subr.mxu0 0.0
  %813 = vmatpush1.msra.mxu0 0.0
  %814 = vmatprep.subr.mxu0 0.0
  %815 = vmatpush1.msra.mxu0 0.0
  %816 = vmatprep.subr.mxu0 0.0
  %817 = vmatpush1.msra.mxu0 0.0
  %818 = vmatprep.subr.mxu0 0.0
  %819 = vmatpush1.msra.mxu0 0.0
  %820 = vmatprep.subr.mxu0 0.0
  %821 = vmatpush1.msra.mxu0 0.0
  %822 = vmatprep.subr.mxu0 0.0
  %823 = vmatpush1.msra.mxu0 0.0
  %824 = vmatprep.subr.mxu0 0.0
  %825 = vmatpush1.msra.mxu0 0.0
  %826 = vmatprep.subr.mxu0 0.0
  %827 = vmatpush1.msra.mxu0 0.0
  %828 = vmatprep.subr.mxu0 0.0
  %829 = vmatpush1.msra.mxu0 0.0
  %830 = vmatprep.subr.mxu0 0.0
  %831 = vmatpush1.msra.mxu0 0.0
  %832 = vmatprep.subr.mxu0 0.0
  %833 = vmatpush1.msra.mxu0 0.0
  %834 = vmatprep.subr.mxu0 0.0
  %835 = vmatpush1.msra.mxu0 0.0
  %836 = vmatprep.subr.mxu0 0.0
  %837 = vmatpush1.msra.mxu0 0.0
  %838 = vmatprep.subr.mxu0 0.0
  %839 = vmatpush1.msra.mxu0 0.0
  %840 = vmatprep.subr.mxu0 0.0
  %841 = vmatpush1.msra.mxu0 0.0
  %842 = vmatprep.subr.mxu0 0.0
  %843 = vmatpush1.msra.mxu0 0.0
  %844 = vmatprep.subr.mxu0 0.0
  %845 = vmatpush1.msra.mxu0 0.0
  %846 = vmatprep.subr.mxu0 0.0
  %847 = vmatpush1.msra.mxu0 0.0
  %848 = vmatprep.mubr.f32.mxu0 0.0
  %849 = vmatmul.mubr.f32.gmra.mrb[0].mxu0 %v737
  %v850 = vpop.f32.mrb[0].mxu0
  %v851 = vadd.f32 %v733, %v850
  %v852 = vpop.f32.mrb[0].mxu0
  %853 = vmatprep.mubr.f32.mxu0 0.0
  %854 = vmatmul.mubr.f32.gmra.mrb[0].mxu0 %v740
  %v855 = vpop.f32.mrb[0].mxu0
  %v856 = vadd.f32 %v733, %v855
  %v857 = vpop.f32.mrb[0].mxu0
  %858 = vmatprep.mubr.f32.mxu0 0.0
  %859 = vmatmul.mubr.f32.gmra.mrb[0].mxu0 %v743
  %v860 = vpop.f32.mrb[0].mxu0
  %v861 = vadd.f32 %v733, %v860
  %v862 = vpop.f32.mrb[0].mxu0
  %863 = vmatprep.mubr.f32.mxu0 0.0
  %864 = vmatmul.mubr.f32.gmra.mrb[0].mxu0 %v746
  %v865 = vpop.f32.mrb[0].mxu0
  %v866 = vadd.f32 %v733, %v865
  %v867 = vpop.f32.mrb[0].mxu0
  %868 = vmatprep.mubr.f32.mxu0 0.0
  %869 = vmatmul.mubr.f32.gmra.mrb[0].mxu0 %v749
  %v870 = vpop.f32.mrb[0].mxu0
  %v871 = vadd.f32 %v733, %v870
  %v872 = vpop.f32.mrb[0].mxu0
  %873 = vmatprep.mubr.f32.mxu0 0.0
  %874 = vmatmul.mubr.f32.gmra.mrb[0].mxu0 %v752
  %v875 = vpop.f32.mrb[0].mxu0
  %v876 = vadd.f32 %v733, %v875
  %v877 = vpop.f32.mrb[0].mxu0
  %878 = vmatprep.mubr.f32.mxu0 0.0
  %879 = vmatmul.mubr.f32.gmra.mrb[0].mxu0 %v755
  %v880 = vpop.f32.mrb[0].mxu0
  %v881 = vadd.f32 %v733, %v880
  %v882 = vpop.f32.mrb[0].mxu0
  %883 = vmatprep.mubr.f32.mxu0 0.0
  %884 = vmatmul.mubr.f32.gmra.mrb[0].mxu0 %v758
  %v885 = vpop.f32.mrb[0].mxu0
  %v886 = vadd.f32 %v733, %v885
  %v887 = vpop.f32.mrb[0].mxu0
  %888 = vmatprep.mubr.f32.mxu0 0.0
  %889 = vmatmul.mubr.f32.gmra.mrb[0].mxu0 %v761
  %v890 = vpop.f32.mrb[0].mxu0
  %v891 = vadd.f32 %v733, %v890
  %v892 = vpop.f32.mrb[0].mxu0
  %893 = vmatprep.mubr.f32.mxu0 0.0
  %894 = vmatmul.mubr.f32.gmra.mrb[0].mxu0 %v764
  %v895 = vpop.f32.mrb[0].mxu0
  %v896 = vadd.f32 %v733, %v895
  %v897 = vpop.f32.mrb[0].mxu0
  %898 = vmatprep.mubr.f32.mxu0 0.0
  %899 = vmatmul.mubr.f32.gmra.mrb[0].mxu0 %v767
  %v900 = vpop.f32.mrb[0].mxu0
  %v901 = vadd.f32 %v733, %v900
  %v902 = vpop.f32.mrb[0].mxu0
  %903 = vmatprep.mubr.f32.mxu0 0.0
  %904 = vmatmul.mubr.f32.gmra.mrb[0].mxu0 %v770
  %v905 = vpop.f32.mrb[0].mxu0
  %v906 = vadd.f32 %v733, %v905
  %v907 = vpop.f32.mrb[0].mxu0
  %908 = vmatprep.mubr.f32.mxu0 0.0
  %909 = vmatmul.mubr.f32.gmra.mrb[0].mxu0 %v773
  %v910 = vpop.f32.mrb[0].mxu0
  %v911 = vadd.f32 %v733, %v910
  %v912 = vpop.f32.mrb[0].mxu0
  %913 = vmatprep.mubr.f32.mxu0 0.0
  %914 = vmatmul.mubr.f32.gmra.mrb[0].mxu0 %v776
  %v915 = vpop.f32.mrb[0].mxu0
  %v916 = vadd.f32 %v733, %v915
  %v917 = vpop.f32.mrb[0].mxu0
  %918 = vmatprep.mubr.f32.mxu0 0.0
  %919 = vmatmul.mubr.f32.gmra.mrb[0].mxu0 %v779
  %v920 = vpop.f32.mrb[0].mxu0
  %v921 = vadd.f32 %v733, %v920
  %v922 = vpop.f32.mrb[0].mxu0
  %923 = vmatprep.mubr.f32.mxu0 0.0
  %924 = vmatmul.mubr.f32.gmra.mrb[0].mxu0 %v782
  %v925 = vpop.f32.mrb[0].mxu0
  %v926 = vadd.f32 %v733, %v925
  %v927 = vpop.f32.mrb[0].mxu0
  %928 = vdwg.mxu0
  %929 = vst [vmem:[%s5] sm:$0xff] %v851
  %930 = vst [vmem:[%s5 + $0x8] sm:$0xff] %v856
  %931 = vst [vmem:[%s5 + $0x10] sm:$0xff] %v861
  %932 = vst [vmem:[%s5 + $0x18] sm:$0xff] %v866
  %933 = vst [vmem:[%s5 + $0x20] sm:$0xff] %v871
  %934 = vst [vmem:[%s5 + $0x28] sm:$0xff] %v876
  %935 = vst [vmem:[%s5 + $0x30] sm:$0xff] %v881
  %936 = vst [vmem:[%s5 + $0x38] sm:$0xff] %v886
  %937 = vst [vmem:[%s5 + $0x40] sm:$0xff] %v891
  %938 = vst [vmem:[%s5 + $0x48] sm:$0xff] %v896
  %939 = vst [vmem:[%s5 + $0x50] sm:$0xff] %v901
  %940 = vst [vmem:[%s5 + $0x58] sm:$0xff] %v906
  %941 = vst [vmem:[%s5 + $0x60] sm:$0xff] %v911
  %942 = vst [vmem:[%s5 + $0x68] sm:$0xff] %v916
  %943 = vst [vmem:[%s5 + $0x70] sm:$0xff] %v921
  %944 = vst [vmem:[%s5 + $0x78] sm:$0xff] %v926
  // Predicated region
  $region22: #{genc_gar_forward.2} parent=0 // pred_check
    _
  $region23: #{genc_gar_forward.2} parent=0 // pred_check_branch
    %946 = sbr.rel (0) target = $region25
  $region24: #{genc_gar_forward.2} parent=0 // pred_region
    _
  $region25: #{genc_gar_forward.2} parent=0 // pred_fallthru
    _
  // Predicated region
  $region26: #{genc_gar_forward.2} parent=0 // pred_check
    _
  $region27: #{genc_gar_forward.2} parent=0 // pred_check_branch
    %948 = sbr.rel (0) target = $region29
  $region28: #{genc_gar_forward.2} parent=0 // pred_region
    _
  $region29: #{genc_gar_forward.2} parent=0 // pred_fallthru
    _

// kernel: genc_gar_forward.3
$region0: #{genc_gar_forward.3}
  #allocation0 [shape = 'u32[]', space=smem, size = 0x4, offset = 0x4, fixed_abs, tag = 'smem constant byte address 0x4 - core index']
  #allocation1 [shape = 'u32[144,128]{1,0:T(1,128)}', space=vmem, size = 0x12000, scoped, tag = 'internal scratch']
  %s0 = inlined_call_operand.vmem [shape: f32[16,8,128], index: 0, kind: input, shape index: {}]
  %s1 = inlined_call_operand.vmem [shape: f32[32,128], index: 1, kind: input, shape index: {}]
  %s2 = inlined_call_operand.vmem [shape: f32[1,32], index: 2, kind: input, shape index: {}]
  %s3 = inlined_call_operand.vmem [shape: f32[8,32], index: 3, kind: output, shape index: {}]
  %s4 = sld [smem:[#allocation0]]
  $region22: #{genc_gar_forward.3} parent=0
    _
  %s6 = ssub.s32 1, %s4
  %s7 = scalar_select 0, %s6, %s4
  // Predicated region
  $region2: #{genc_gar_forward.3} parent=0 // pred_check
    _
  $region3: #{genc_gar_forward.3} parent=0 // pred_check_branch
    %9 = sbr.rel (0) target = $region5
  $region4: #{genc_gar_forward.3} parent=0 // pred_region
    _
  $region5: #{genc_gar_forward.3} parent=0 // pred_fallthru
    _
  // Predicated region
  $region6: #{genc_gar_forward.3} parent=0 // pred_check
    _
  $region7: #{genc_gar_forward.3} parent=0 // pred_check_branch
    %11 = sbr.rel (0) target = $region9
  $region8: #{genc_gar_forward.3} parent=0 // pred_region
    _
  $region9: #{genc_gar_forward.3} parent=0 // pred_fallthru
    _
  // Predicated region
  $region10: #{genc_gar_forward.3} parent=0 // pred_check
    _
  $region11: #{genc_gar_forward.3} parent=0 // pred_check_branch
    %13 = sbr.rel (0) target = $region13
  $region12: #{genc_gar_forward.3} parent=0 // pred_region
    _
  $region13: #{genc_gar_forward.3} parent=0 // pred_fallthru
    _
  %v14 = vld [vmem:[%s1] sm:$0xff]
  %v15 = vld [vmem:[%s1 + $0x8] sm:$0xff]
  %v16 = vld [vmem:[%s1 + $0x10] sm:$0xff]
  %v17 = vld [vmem:[%s1 + $0x18] sm:$0xff]
  %v18 = vld [vmem:[%s2] sm:$0x1]
  %v19 = vld [vmem:[%s0] sm:$0xff]
  %vm20 = vcmask 261120
  %v22 = vsel %vm20, 0.0, 0
  %24 = vmatprep.subr.mxu0 0.0
  %25 = vmatpush1.msra.mxu0 %v14
  %26 = vmatprep.subr.mxu0 0.0
  %27 = vmatpush1.msra.mxu0 %v15
  %28 = vmatprep.subr.mxu0 0.0
  %29 = vmatpush1.msra.mxu0 %v16
  %30 = vmatprep.subr.mxu0 0.0
  %31 = vmatpush1.msra.mxu0 %v17
  %32 = vmatprep.subr.mxu0 0.0
  %33 = vmatpush1.msra.mxu0 0.0
  %34 = vmatprep.subr.mxu0 0.0
  %35 = vmatpush1.msra.mxu0 0.0
  %36 = vmatprep.subr.mxu0 0.0
  %37 = vmatpush1.msra.mxu0 0.0
  %38 = vmatprep.subr.mxu0 0.0
  %39 = vmatpush1.msra.mxu0 0.0
  %40 = vmatprep.subr.mxu0 0.0
  %41 = vmatpush1.msra.mxu0 0.0
  %42 = vmatprep.subr.mxu0 0.0
  %43 = vmatpush1.msra.mxu0 0.0
  %44 = vmatprep.subr.mxu0 0.0
  %45 = vmatpush1.msra.mxu0 0.0
  %46 = vmatprep.subr.mxu0 0.0
  %47 = vmatpush1.msra.mxu0 0.0
  %48 = vmatprep.subr.mxu0 0.0
  %49 = vmatpush1.msra.mxu0 0.0
  %50 = vmatprep.subr.mxu0 0.0
  %51 = vmatpush1.msra.mxu0 0.0
  %52 = vmatprep.subr.mxu0 0.0
  %53 = vmatpush1.msra.mxu0 0.0
  %54 = vmatprep.subr.mxu0 0.0
  %55 = vmatpush1.msra.mxu0 0.0
  %56 = vmatprep.subr.mxu0 0.0
  %57 = vmatpush1.msra.mxu0 0.0
  %58 = vmatprep.subr.mxu0 0.0
  %59 = vmatpush1.msra.mxu0 0.0
  %60 = vmatprep.subr.mxu0 0.0
  %61 = vmatpush1.msra.mxu0 0.0
  %62 = vmatprep.subr.mxu0 0.0
  %63 = vmatpush1.msra.mxu0 0.0
  %64 = vmatprep.subr.mxu0 0.0
  %65 = vmatpush1.msra.mxu0 0.0
  %66 = vmatprep.subr.mxu0 0.0
  %67 = vmatpush1.msra.mxu0 0.0
  %68 = vmatprep.subr.mxu0 0.0
  %69 = vmatpush1.msra.mxu0 0.0
  %70 = vmatprep.subr.mxu0 0.0
  %71 = vmatpush1.msra.mxu0 0.0
  %72 = vmatprep.subr.mxu0 0.0
  %73 = vmatpush1.msra.mxu0 0.0
  %74 = vmatprep.subr.mxu0 0.0
  %75 = vmatpush1.msra.mxu0 0.0
  %76 = vmatprep.subr.mxu0 0.0
  %77 = vmatpush1.msra.mxu0 0.0
  %78 = vmatprep.subr.mxu0 0.0
  %79 = vmatpush1.msra.mxu0 0.0
  %80 = vmatprep.subr.mxu0 0.0
  %81 = vmatpush1.msra.mxu0 0.0
  %82 = vmatprep.subr.mxu0 0.0
  %83 = vmatpush1.msra.mxu0 0.0
  %84 = vmatprep.subr.mxu0 0.0
  %85 = vmatpush1.msra.mxu0 0.0
  %86 = vmatprep.subr.mxu0 0.0
  %87 = vmatpush1.msra.mxu0 0.0
  %88 = vmatprep.mubr.f32.mxu0 0.0
  %89 = vmatmul.mubr.f32.gmra.mrb[0].mxu0 %v22
  %v90 = vpop.f32.mrb[0].mxu0
  %v91 = vadd.f32 0.0, %v90
  %v92 = vpop.f32.mrb[0].mxu0
  %93 = vdwg.mxu0
  %v94 = vadd.f32 %v19, %v91
  %v95 = vxor.u32 %v94, 2147483648
  %v96 = vmul.f32 %v95, 1.442695
  %v97 = vpow.pop %v96
  %v98 = vadd.f32 %v97, 1.0
  %v99 = vrcp.pop %v98
  %v100 = vmul.f32 1.0, %v99
  %v102 = vlaneseq
  %v103 = vshrl.u32 %v102, 7
  %v104 = vsub.s32 0, %v103
  %v105 = vrot.slane %v18, %v104
  %106 = vrot.lane.b32.xlu0 %v105, 64
  %v107 = vpop.permute.xlu0 %106
  %v109 = vadd.f32 %v91, %v107
  %111 = vrot.lane.b32.xlu0 %v109, 64
  %v112 = vpop.permute.xlu0 %111
  %v114 = vmul.f32 %v100, %v112
  %116 = vrot.lane.b32.xlu0 %v114, 64
  %v117 = vpop.permute.xlu0 %116
  %v119 = vadd.f32 %v19, %v117
  %v120 = vtanh.pop %v119
  %v121 = vsub.f32 1.0, %v100
  %123 = vrot.lane.b32.xlu0 %v120, 96
  %v124 = vpop.permute.xlu0 %123
  %v126 = vmul.f32 %v121, %v124
  %v127 = vmul.f32 %v100, 0.0
  %v128 = vadd.f32 %v126, %v127
  %s129 = scalar_lea.vmem %s0, 8
  %v130 = vld [vmem:[%s129] sm:$0xff]
  %132 = vrot.lane.b32.xlu0 %v128, 96
  %v133 = vpop.permute.xlu0 %132
  %v134 = vsel %vm20, %v133, 0
  %136 = vmatprep.subr.mxu0 0.0
  %137 = vmatpush1.msra.mxu0 %v14
  %138 = vmatprep.subr.mxu0 0.0
  %139 = vmatpush1.msra.mxu0 %v15
  %140 = vmatprep.subr.mxu0 0.0
  %141 = vmatpush1.msra.mxu0 %v16
  %142 = vmatprep.subr.mxu0 0.0
  %143 = vmatpush1.msra.mxu0 %v17
  %144 = vmatprep.subr.mxu0 0.0
  %145 = vmatpush1.msra.mxu0 0.0
  %146 = vmatprep.subr.mxu0 0.0
  %147 = vmatpush1.msra.mxu0 0.0
  %148 = vmatprep.subr.mxu0 0.0
  %149 = vmatpush1.msra.mxu0 0.0
  %150 = vmatprep.subr.mxu0 0.0
  %151 = vmatpush1.msra.mxu0 0.0
  %152 = vmatprep.subr.mxu0 0.0
  %153 = vmatpush1.msra.mxu0 0.0
  %154 = vmatprep.subr.mxu0 0.0
  %155 = vmatpush1.msra.mxu0 0.0
  %156 = vmatprep.subr.mxu0 0.0
  %157 = vmatpush1.msra.mxu0 0.0
  %158 = vmatprep.subr.mxu0 0.0
  %159 = vmatpush1.msra.mxu0 0.0
  %160 = vmatprep.subr.mxu0 0.0
  %161 = vmatpush1.msra.mxu0 0.0
  %162 = vmatprep.subr.mxu0 0.0
  %163 = vmatpush1.msra.mxu0 0.0
  %164 = vmatprep.subr.mxu0 0.0
  %165 = vmatpush1.msra.mxu0 0.0
  %166 = vmatprep.subr.mxu0 0.0
  %167 = vmatpush1.msra.mxu0 0.0
  %168 = vmatprep.subr.mxu0 0.0
  %169 = vmatpush1.msra.mxu0 0.0
  %170 = vmatprep.subr.mxu0 0.0
  %171 = vmatpush1.msra.mxu0 0.0
  %172 = vmatprep.subr.mxu0 0.0
  %173 = vmatpush1.msra.mxu0 0.0
  %174 = vmatprep.subr.mxu0 0.0
  %175 = vmatpush1.msra.mxu0 0.0
  %176 = vmatprep.subr.mxu0 0.0
  %177 = vmatpush1.msra.mxu0 0.0
  %178 = vmatprep.subr.mxu0 0.0
  %179 = vmatpush1.msra.mxu0 0.0
  %180 = vmatprep.subr.mxu0 0.0
  %181 = vmatpush1.msra.mxu0 0.0
  %182 = vmatprep.subr.mxu0 0.0
  %183 = vmatpush1.msra.mxu0 0.0
  %184 = vmatprep.subr.mxu0 0.0
  %185 = vmatpush1.msra.mxu0 0.0
  %186 = vmatprep.subr.mxu0 0.0
  %187 = vmatpush1.msra.mxu0 0.0
  %188 = vmatprep.subr.mxu0 0.0
  %189 = vmatpush1.msra.mxu0 0.0
  %190 = vmatprep.subr.mxu0 0.0
  %191 = vmatpush1.msra.mxu0 0.0
  %192 = vmatprep.subr.mxu0 0.0
  %193 = vmatpush1.msra.mxu0 0.0
  %194 = vmatprep.subr.mxu0 0.0
  %195 = vmatpush1.msra.mxu0 0.0
  %196 = vmatprep.subr.mxu0 0.0
  %197 = vmatpush1.msra.mxu0 0.0
  %198 = vmatprep.subr.mxu0 0.0
  %199 = vmatpush1.msra.mxu0 0.0
  %200 = vmatprep.mubr.f32.mxu0 0.0
  %201 = vmatmul.mubr.f32.gmra.mrb[0].mxu0 %v134
  %v202 = vpop.f32.mrb[0].mxu0
  %v203 = vadd.f32 0.0, %v202
  %v204 = vpop.f32.mrb[0].mxu0
  %205 = vdwg.mxu0
  %v206 = vadd.f32 %v130, %v203
  %v207 = vxor.u32 %v206, 2147483648
  %v208 = vmul.f32 %v207, 1.442695
  %v209 = vpow.pop %v208
  %v210 = vadd.f32 %v209, 1.0
  %v211 = vrcp.pop %v210
  %v212 = vmul.f32 1.0, %v211
  %v213 = vadd.f32 %v203, %v107
  %215 = vrot.lane.b32.xlu0 %v213, 64
  %v216 = vpop.permute.xlu0 %215
  %v218 = vmul.f32 %v212, %v216
  %220 = vrot.lane.b32.xlu0 %v218, 64
  %v221 = vpop.permute.xlu0 %220
  %v223 = vadd.f32 %v130, %v221
  %v224 = vtanh.pop %v223
  %v225 = vsub.f32 1.0, %v212
  %227 = vrot.lane.b32.xlu0 %v224, 96
  %v228 = vpop.permute.xlu0 %227
  %v230 = vmul.f32 %v225, %v228
  %v231 = vmul.f32 %v212, %v128
  %v232 = vadd.f32 %v230, %v231
  %s233 = scalar_lea.vmem %s0, 16
  %v234 = vld [vmem:[%s233] sm:$0xff]
  %236 = vrot.lane.b32.xlu0 %v232, 96
  %v237 = vpop.permute.xlu0 %236
  %v238 = vsel %vm20, %v237, 0
  %240 = vmatprep.subr.mxu0 0.0
  %241 = vmatpush1.msra.mxu0 %v14
  %242 = vmatprep.subr.mxu0 0.0
  %243 = vmatpush1.msra.mxu0 %v15
  %244 = vmatprep.subr.mxu0 0.0
  %245 = vmatpush1.msra.mxu0 %v16
  %246 = vmatprep.subr.mxu0 0.0
  %247 = vmatpush1.msra.mxu0 %v17
  %248 = vmatprep.subr.mxu0 0.0
  %249 = vmatpush1.msra.mxu0 0.0
  %250 = vmatprep.subr.mxu0 0.0
  %251 = vmatpush1.msra.mxu0 0.0
  %252 = vmatprep.subr.mxu0 0.0
  %253 = vmatpush1.msra.mxu0 0.0
  %254 = vmatprep.subr.mxu0 0.0
  %255 = vmatpush1.msra.mxu0 0.0
  %256 = vmatprep.subr.mxu0 0.0
  %257 = vmatpush1.msra.mxu0 0.0
  %258 = vmatprep.subr.mxu0 0.0
  %259 = vmatpush1.msra.mxu0 0.0
  %260 = vmatprep.subr.mxu0 0.0
  %261 = vmatpush1.msra.mxu0 0.0
  %262 = vmatprep.subr.mxu0 0.0
  %263 = vmatpush1.msra.mxu0 0.0
  %264 = vmatprep.subr.mxu0 0.0
  %265 = vmatpush1.msra.mxu0 0.0
  %266 = vmatprep.subr.mxu0 0.0
  %267 = vmatpush1.msra.mxu0 0.0
  %268 = vmatprep.subr.mxu0 0.0
  %269 = vmatpush1.msra.mxu0 0.0
  %270 = vmatprep.subr.mxu0 0.0
  %271 = vmatpush1.msra.mxu0 0.0
  %272 = vmatprep.subr.mxu0 0.0
  %273 = vmatpush1.msra.mxu0 0.0
  %274 = vmatprep.subr.mxu0 0.0
  %275 = vmatpush1.msra.mxu0 0.0
  %276 = vmatprep.subr.mxu0 0.0
  %277 = vmatpush1.msra.mxu0 0.0
  %278 = vmatprep.subr.mxu0 0.0
  %279 = vmatpush1.msra.mxu0 0.0
  %280 = vmatprep.subr.mxu0 0.0
  %281 = vmatpush1.msra.mxu0 0.0
  %282 = vmatprep.subr.mxu0 0.0
  %283 = vmatpush1.msra.mxu0 0.0
  %284 = vmatprep.subr.mxu0 0.0
  %285 = vmatpush1.msra.mxu0 0.0
  %286 = vmatprep.subr.mxu0 0.0
  %287 = vmatpush1.msra.mxu0 0.0
  %288 = vmatprep.subr.mxu0 0.0
  %289 = vmatpush1.msra.mxu0 0.0
  %290 = vmatprep.subr.mxu0 0.0
  %291 = vmatpush1.msra.mxu0 0.0
  %292 = vmatprep.subr.mxu0 0.0
  %293 = vmatpush1.msra.mxu0 0.0
  %294 = vmatprep.subr.mxu0 0.0
  %295 = vmatpush1.msra.mxu0 0.0
  %296 = vmatprep.subr.mxu0 0.0
  %297 = vmatpush1.msra.mxu0 0.0
  %298 = vmatprep.subr.mxu0 0.0
  %299 = vmatpush1.msra.mxu0 0.0
  %300 = vmatprep.subr.mxu0 0.0
  %301 = vmatpush1.msra.mxu0 0.0
  %302 = vmatprep.subr.mxu0 0.0
  %303 = vmatpush1.msra.mxu0 0.0
  %304 = vmatprep.mubr.f32.mxu0 0.0
  %305 = vmatmul.mubr.f32.gmra.mrb[0].mxu0 %v238
  %v306 = vpop.f32.mrb[0].mxu0
  %v307 = vadd.f32 0.0, %v306
  %v308 = vpop.f32.mrb[0].mxu0
  %309 = vdwg.mxu0
  %v310 = vadd.f32 %v234, %v307
  %v311 = vxor.u32 %v310, 2147483648
  %v312 = vmul.f32 %v311, 1.442695
  %v313 = vpow.pop %v312
  %v314 = vadd.f32 %v313, 1.0
  %v315 = vrcp.pop %v314
  %v316 = vmul.f32 1.0, %v315
  %v317 = vadd.f32 %v307, %v107
  %319 = vrot.lane.b32.xlu0 %v317, 64
  %v320 = vpop.permute.xlu0 %319
  %v322 = vmul.f32 %v316, %v320
  %324 = vrot.lane.b32.xlu0 %v322, 64
  %v325 = vpop.permute.xlu0 %324
  %v327 = vadd.f32 %v234, %v325
  %v328 = vtanh.pop %v327
  %v329 = vsub.f32 1.0, %v316
  %331 = vrot.lane.b32.xlu0 %v328, 96
  %v332 = vpop.permute.xlu0 %331
  %v334 = vmul.f32 %v329, %v332
  %v335 = vmul.f32 %v316, %v232
  %v336 = vadd.f32 %v334, %v335
  %s337 = scalar_lea.vmem %s0, 24
  %v338 = vld [vmem:[%s337] sm:$0xff]
  %340 = vrot.lane.b32.xlu0 %v336, 96
  %v341 = vpop.permute.xlu0 %340
  %v342 = vsel %vm20, %v341, 0
  %344 = vmatprep.subr.mxu0 0.0
  %345 = vmatpush1.msra.mxu0 %v14
  %346 = vmatprep.subr.mxu0 0.0
  %347 = vmatpush1.msra.mxu0 %v15
  %348 = vmatprep.subr.mxu0 0.0
  %349 = vmatpush1.msra.mxu0 %v16
  %350 = vmatprep.subr.mxu0 0.0
  %351 = vmatpush1.msra.mxu0 %v17
  %352 = vmatprep.subr.mxu0 0.0
  %353 = vmatpush1.msra.mxu0 0.0
  %354 = vmatprep.subr.mxu0 0.0
  %355 = vmatpush1.msra.mxu0 0.0
  %356 = vmatprep.subr.mxu0 0.0
  %357 = vmatpush1.msra.mxu0 0.0
  %358 = vmatprep.subr.mxu0 0.0
  %359 = vmatpush1.msra.mxu0 0.0
  %360 = vmatprep.subr.mxu0 0.0
  %361 = vmatpush1.msra.mxu0 0.0
  %362 = vmatprep.subr.mxu0 0.0
  %363 = vmatpush1.msra.mxu0 0.0
  %364 = vmatprep.subr.mxu0 0.0
  %365 = vmatpush1.msra.mxu0 0.0
  %366 = vmatprep.subr.mxu0 0.0
  %367 = vmatpush1.msra.mxu0 0.0
  %368 = vmatprep.subr.mxu0 0.0
  %369 = vmatpush1.msra.mxu0 0.0
  %370 = vmatprep.subr.mxu0 0.0
  %371 = vmatpush1.msra.mxu0 0.0
  %372 = vmatprep.subr.mxu0 0.0
  %373 = vmatpush1.msra.mxu0 0.0
  %374 = vmatprep.subr.mxu0 0.0
  %375 = vmatpush1.msra.mxu0 0.0
  %376 = vmatprep.subr.mxu0 0.0
  %377 = vmatpush1.msra.mxu0 0.0
  %378 = vmatprep.subr.mxu0 0.0
  %379 = vmatpush1.msra.mxu0 0.0
  %380 = vmatprep.subr.mxu0 0.0
  %381 = vmatpush1.msra.mxu0 0.0
  %382 = vmatprep.subr.mxu0 0.0
  %383 = vmatpush1.msra.mxu0 0.0
  %384 = vmatprep.subr.mxu0 0.0
  %385 = vmatpush1.msra.mxu0 0.0
  %386 = vmatprep.subr.mxu0 0.0
  %387 = vmatpush1.msra.mxu0 0.0
  %388 = vmatprep.subr.mxu0 0.0
  %389 = vmatpush1.msra.mxu0 0.0
  %390 = vmatprep.subr.mxu0 0.0
  %391 = vmatpush1.msra.mxu0 0.0
  %392 = vmatprep.subr.mxu0 0.0
  %393 = vmatpush1.msra.mxu0 0.0
  %394 = vmatprep.subr.mxu0 0.0
  %395 = vmatpush1.msra.mxu0 0.0
  %396 = vmatprep.subr.mxu0 0.0
  %397 = vmatpush1.msra.mxu0 0.0
  %398 = vmatprep.subr.mxu0 0.0
  %399 = vmatpush1.msra.mxu0 0.0
  %400 = vmatprep.subr.mxu0 0.0
  %401 = vmatpush1.msra.mxu0 0.0
  %402 = vmatprep.subr.mxu0 0.0
  %403 = vmatpush1.msra.mxu0 0.0
  %404 = vmatprep.subr.mxu0 0.0
  %405 = vmatpush1.msra.mxu0 0.0
  %406 = vmatprep.subr.mxu0 0.0
  %407 = vmatpush1.msra.mxu0 0.0
  %408 = vmatprep.mubr.f32.mxu0 0.0
  %409 = vmatmul.mubr.f32.gmra.mrb[0].mxu0 %v342
  %v410 = vpop.f32.mrb[0].mxu0
  %v411 = vadd.f32 0.0, %v410
  %v412 = vpop.f32.mrb[0].mxu0
  %413 = vdwg.mxu0
  %v414 = vadd.f32 %v338, %v411
  %v415 = vxor.u32 %v414, 2147483648
  %v416 = vmul.f32 %v415, 1.442695
  %v417 = vpow.pop %v416
  %v418 = vadd.f32 %v417, 1.0
  %v419 = vrcp.pop %v418
  %v420 = vmul.f32 1.0, %v419
  %v421 = vadd.f32 %v411, %v107
  %423 = vrot.lane.b32.xlu0 %v421, 64
  %v424 = vpop.permute.xlu0 %423
  %v426 = vmul.f32 %v420, %v424
  %428 = vrot.lane.b32.xlu0 %v426, 64
  %v429 = vpop.permute.xlu0 %428
  %v431 = vadd.f32 %v338, %v429
  %v432 = vtanh.pop %v431
  %v433 = vsub.f32 1.0, %v420
  %435 = vrot.lane.b32.xlu0 %v432, 96
  %v436 = vpop.permute.xlu0 %435
  %v438 = vmul.f32 %v433, %v436
  %v439 = vmul.f32 %v420, %v336
  %v440 = vadd.f32 %v438, %v439
  %s441 = scalar_lea.vmem %s0, 32
  %v442 = vld [vmem:[%s441] sm:$0xff]
  %444 = vrot.lane.b32.xlu0 %v440, 96
  %v445 = vpop.permute.xlu0 %444
  %v446 = vsel %vm20, %v445, 0
  %448 = vmatprep.subr.mxu0 0.0
  %449 = vmatpush1.msra.mxu0 %v14
  %450 = vmatprep.subr.mxu0 0.0
  %451 = vmatpush1.msra.mxu0 %v15
  %452 = vmatprep.subr.mxu0 0.0
  %453 = vmatpush1.msra.mxu0 %v16
  %454 = vmatprep.subr.mxu0 0.0
  %455 = vmatpush1.msra.mxu0 %v17
  %456 = vmatprep.subr.mxu0 0.0
  %457 = vmatpush1.msra.mxu0 0.0
  %458 = vmatprep.subr.mxu0 0.0
  %459 = vmatpush1.msra.mxu0 0.0
  %460 = vmatprep.subr.mxu0 0.0
  %461 = vmatpush1.msra.mxu0 0.0
  %462 = vmatprep.subr.mxu0 0.0
  %463 = vmatpush1.msra.mxu0 0.0
  %464 = vmatprep.subr.mxu0 0.0
  %465 = vmatpush1.msra.mxu0 0.0
  %466 = vmatprep.subr.mxu0 0.0
  %467 = vmatpush1.msra.mxu0 0.0
  %468 = vmatprep.subr.mxu0 0.0
  %469 = vmatpush1.msra.mxu0 0.0
  %470 = vmatprep.subr.mxu0 0.0
  %471 = vmatpush1.msra.mxu0 0.0
  %472 = vmatprep.subr.mxu0 0.0
  %473 = vmatpush1.msra.mxu0 0.0
  %474 = vmatprep.subr.mxu0 0.0
  %475 = vmatpush1.msra.mxu0 0.0
  %476 = vmatprep.subr.mxu0 0.0
  %477 = vmatpush1.msra.mxu0 0.0
  %478 = vmatprep.subr.mxu0 0.0
  %479 = vmatpush1.msra.mxu0 0.0
  %480 = vmatprep.subr.mxu0 0.0
  %481 = vmatpush1.msra.mxu0 0.0
  %482 = vmatprep.subr.mxu0 0.0
  %483 = vmatpush1.msra.mxu0 0.0
  %484 = vmatprep.subr.mxu0 0.0
  %485 = vmatpush1.msra.mxu0 0.0
  %486 = vmatprep.subr.mxu0 0.0
  %487 = vmatpush1.msra.mxu0 0.0
  %488 = vmatprep.subr.mxu0 0.0
  %489 = vmatpush1.msra.mxu0 0.0
  %490 = vmatprep.subr.mxu0 0.0
  %491 = vmatpush1.msra.mxu0 0.0
  %492 = vmatprep.subr.mxu0 0.0
  %493 = vmatpush1.msra.mxu0 0.0
  %494 = vmatprep.subr.mxu0 0.0
  %495 = vmatpush1.msra.mxu0 0.0
  %496 = vmatprep.subr.mxu0 0.0
  %497 = vmatpush1.msra.mxu0 0.0
  %498 = vmatprep.subr.mxu0 0.0
  %499 = vmatpush1.msra.mxu0 0.0
  %500 = vmatprep.subr.mxu0 0.0
  %501 = vmatpush1.msra.mxu0 0.0
  %502 = vmatprep.subr.mxu0 0.0
  %503 = vmatpush1.msra.mxu0 0.0
  %504 = vmatprep.subr.mxu0 0.0
  %505 = vmatpush1.msra.mxu0 0.0
  %506 = vmatprep.subr.mxu0 0.0
  %507 = vmatpush1.msra.mxu0 0.0
  %508 = vmatprep.subr.mxu0 0.0
  %509 = vmatpush1.msra.mxu0 0.0
  %510 = vmatprep.subr.mxu0 0.0
  %511 = vmatpush1.msra.mxu0 0.0
  %512 = vmatprep.mubr.f32.mxu0 0.0
  %513 = vmatmul.mubr.f32.gmra.mrb[0].mxu0 %v446
  %v514 = vpop.f32.mrb[0].mxu0
  %v515 = vadd.f32 0.0, %v514
  %v516 = vpop.f32.mrb[0].mxu0
  %517 = vdwg.mxu0
  %v518 = vadd.f32 %v442, %v515
  %v519 = vxor.u32 %v518, 2147483648
  %v520 = vmul.f32 %v519, 1.442695
  %v521 = vpow.pop %v520
  %v522 = vadd.f32 %v521, 1.0
  %v523 = vrcp.pop %v522
  %v524 = vmul.f32 1.0, %v523
  %v525 = vadd.f32 %v515, %v107
  %527 = vrot.lane.b32.xlu0 %v525, 64
  %v528 = vpop.permute.xlu0 %527
  %v530 = vmul.f32 %v524, %v528
  %532 = vrot.lane.b32.xlu0 %v530, 64
  %v533 = vpop.permute.xlu0 %532
  %v535 = vadd.f32 %v442, %v533
  %v536 = vtanh.pop %v535
  %v537 = vsub.f32 1.0, %v524
  %539 = vrot.lane.b32.xlu0 %v536, 96
  %v540 = vpop.permute.xlu0 %539
  %v542 = vmul.f32 %v537, %v540
  %v543 = vmul.f32 %v524, %v440
  %v544 = vadd.f32 %v542, %v543
  %s545 = scalar_lea.vmem %s0, 40
  %v546 = vld [vmem:[%s545] sm:$0xff]
  %548 = vrot.lane.b32.xlu0 %v544, 96
  %v549 = vpop.permute.xlu0 %548
  %v550 = vsel %vm20, %v549, 0
  %552 = vmatprep.subr.mxu0 0.0
  %553 = vmatpush1.msra.mxu0 %v14
  %554 = vmatprep.subr.mxu0 0.0
  %555 = vmatpush1.msra.mxu0 %v15
  %556 = vmatprep.subr.mxu0 0.0
  %557 = vmatpush1.msra.mxu0 %v16
  %558 = vmatprep.subr.mxu0 0.0
  %559 = vmatpush1.msra.mxu0 %v17
  %560 = vmatprep.subr.mxu0 0.0
  %561 = vmatpush1.msra.mxu0 0.0
  %562 = vmatprep.subr.mxu0 0.0
  %563 = vmatpush1.msra.mxu0 0.0
  %564 = vmatprep.subr.mxu0 0.0
  %565 = vmatpush1.msra.mxu0 0.0
  %566 = vmatprep.subr.mxu0 0.0
  %567 = vmatpush1.msra.mxu0 0.0
  %568 = vmatprep.subr.mxu0 0.0
  %569 = vmatpush1.msra.mxu0 0.0
  %570 = vmatprep.subr.mxu0 0.0
  %571 = vmatpush1.msra.mxu0 0.0
  %572 = vmatprep.subr.mxu0 0.0
  %573 = vmatpush1.msra.mxu0 0.0
  %574 = vmatprep.subr.mxu0 0.0
  %575 = vmatpush1.msra.mxu0 0.0
  %576 = vmatprep.subr.mxu0 0.0
  %577 = vmatpush1.msra.mxu0 0.0
  %578 = vmatprep.subr.mxu0 0.0
  %579 = vmatpush1.msra.mxu0 0.0
  %580 = vmatprep.subr.mxu0 0.0
  %581 = vmatpush1.msra.mxu0 0.0
  %582 = vmatprep.subr.mxu0 0.0
  %583 = vmatpush1.msra.mxu0 0.0
  %584 = vmatprep.subr.mxu0 0.0
  %585 = vmatpush1.msra.mxu0 0.0
  %586 = vmatprep.subr.mxu0 0.0
  %587 = vmatpush1.msra.mxu0 0.0
  %588 = vmatprep.subr.mxu0 0.0
  %589 = vmatpush1.msra.mxu0 0.0
  %590 = vmatprep.subr.mxu0 0.0
  %591 = vmatpush1.msra.mxu0 0.0
  %592 = vmatprep.subr.mxu0 0.0
  %593 = vmatpush1.msra.mxu0 0.0
  %594 = vmatprep.subr.mxu0 0.0
  %595 = vmatpush1.msra.mxu0 0.0
  %596 = vmatprep.subr.mxu0 0.0
  %597 = vmatpush1.msra.mxu0 0.0
  %598 = vmatprep.subr.mxu0 0.0
  %599 = vmatpush1.msra.mxu0 0.0
  %600 = vmatprep.subr.mxu0 0.0
  %601 = vmatpush1.msra.mxu0 0.0
  %602 = vmatprep.subr.mxu0 0.0
  %603 = vmatpush1.msra.mxu0 0.0
  %604 = vmatprep.subr.mxu0 0.0
  %605 = vmatpush1.msra.mxu0 0.0
  %606 = vmatprep.subr.mxu0 0.0
  %607 = vmatpush1.msra.mxu0 0.0
  %608 = vmatprep.subr.mxu0 0.0
  %609 = vmatpush1.msra.mxu0 0.0
  %610 = vmatprep.subr.mxu0 0.0
  %611 = vmatpush1.msra.mxu0 0.0
  %612 = vmatprep.subr.mxu0 0.0
  %613 = vmatpush1.msra.mxu0 0.0
  %614 = vmatprep.subr.mxu0 0.0
  %615 = vmatpush1.msra.mxu0 0.0
  %616 = vmatprep.mubr.f32.mxu0 0.0
  %617 = vmatmul.mubr.f32.gmra.mrb[0].mxu0 %v550
  %v618 = vpop.f32.mrb[0].mxu0
  %v619 = vadd.f32 0.0, %v618
  %v620 = vpop.f32.mrb[0].mxu0
  %621 = vdwg.mxu0
  %v622 = vadd.f32 %v546, %v619
  %v623 = vxor.u32 %v622, 2147483648
  %v624 = vmul.f32 %v623, 1.442695
  %v625 = vpow.pop %v624
  %v626 = vadd.f32 %v625, 1.0
  %v627 = vrcp.pop %v626
  %v628 = vmul.f32 1.0, %v627
  %v629 = vadd.f32 %v619, %v107
  %631 = vrot.lane.b32.xlu0 %v629, 64
  %v632 = vpop.permute.xlu0 %631
  %v634 = vmul.f32 %v628, %v632
  %636 = vrot.lane.b32.xlu0 %v634, 64
  %v637 = vpop.permute.xlu0 %636
  %v639 = vadd.f32 %v546, %v637
  %v640 = vtanh.pop %v639
  %v641 = vsub.f32 1.0, %v628
  %643 = vrot.lane.b32.xlu0 %v640, 96
  %v644 = vpop.permute.xlu0 %643
  %v646 = vmul.f32 %v641, %v644
  %v647 = vmul.f32 %v628, %v544
  %v648 = vadd.f32 %v646, %v647
  %s649 = scalar_lea.vmem %s0, 48
  %v650 = vld [vmem:[%s649] sm:$0xff]
  %652 = vrot.lane.b32.xlu0 %v648, 96
  %v653 = vpop.permute.xlu0 %652
  %v654 = vsel %vm20, %v653, 0
  %656 = vmatprep.subr.mxu0 0.0
  %657 = vmatpush1.msra.mxu0 %v14
  %658 = vmatprep.subr.mxu0 0.0
  %659 = vmatpush1.msra.mxu0 %v15
  %660 = vmatprep.subr.mxu0 0.0
  %661 = vmatpush1.msra.mxu0 %v16
  %662 = vmatprep.subr.mxu0 0.0
  %663 = vmatpush1.msra.mxu0 %v17
  %664 = vmatprep.subr.mxu0 0.0
  %665 = vmatpush1.msra.mxu0 0.0
  %666 = vmatprep.subr.mxu0 0.0
  %667 = vmatpush1.msra.mxu0 0.0
  %668 = vmatprep.subr.mxu0 0.0
  %669 = vmatpush1.msra.mxu0 0.0
  %670 = vmatprep.subr.mxu0 0.0
  %671 = vmatpush1.msra.mxu0 0.0
  %672 = vmatprep.subr.mxu0 0.0
  %673 = vmatpush1.msra.mxu0 0.0
  %674 = vmatprep.subr.mxu0 0.0
  %675 = vmatpush1.msra.mxu0 0.0
  %676 = vmatprep.subr.mxu0 0.0
  %677 = vmatpush1.msra.mxu0 0.0
  %678 = vmatprep.subr.mxu0 0.0
  %679 = vmatpush1.msra.mxu0 0.0
  %680 = vmatprep.subr.mxu0 0.0
  %681 = vmatpush1.msra.mxu0 0.0
  %682 = vmatprep.subr.mxu0 0.0
  %683 = vmatpush1.msra.mxu0 0.0
  %684 = vmatprep.subr.mxu0 0.0
  %685 = vmatpush1.msra.mxu0 0.0
  %686 = vmatprep.subr.mxu0 0.0
  %687 = vmatpush1.msra.mxu0 0.0
  %688 = vmatprep.subr.mxu0 0.0
  %689 = vmatpush1.msra.mxu0 0.0
  %690 = vmatprep.subr.mxu0 0.0
  %691 = vmatpush1.msra.mxu0 0.0
  %692 = vmatprep.subr.mxu0 0.0
  %693 = vmatpush1.msra.mxu0 0.0
  %694 = vmatprep.subr.mxu0 0.0
  %695 = vmatpush1.msra.mxu0 0.0
  %696 = vmatprep.subr.mxu0 0.0
  %697 = vmatpush1.msra.mxu0 0.0
  %698 = vmatprep.subr.mxu0 0.0
  %699 = vmatpush1.msra.mxu0 0.0
  %700 = vmatprep.subr.mxu0 0.0
  %701 = vmatpush1.msra.mxu0 0.0
  %702 = vmatprep.subr.mxu0 0.0
  %703 = vmatpush1.msra.mxu0 0.0
  %704 = vmatprep.subr.mxu0 0.0
  %705 = vmatpush1.msra.mxu0 0.0
  %706 = vmatprep.subr.mxu0 0.0
  %707 = vmatpush1.msra.mxu0 0.0
  %708 = vmatprep.subr.mxu0 0.0
  %709 = vmatpush1.msra.mxu0 0.0
  %710 = vmatprep.subr.mxu0 0.0
  %711 = vmatpush1.msra.mxu0 0.0
  %712 = vmatprep.subr.mxu0 0.0
  %713 = vmatpush1.msra.mxu0 0.0
  %714 = vmatprep.subr.mxu0 0.0
  %715 = vmatpush1.msra.mxu0 0.0
  %716 = vmatprep.subr.mxu0 0.0
  %717 = vmatpush1.msra.mxu0 0.0
  %718 = vmatprep.subr.mxu0 0.0
  %719 = vmatpush1.msra.mxu0 0.0
  %720 = vmatprep.mubr.f32.mxu0 0.0
  %721 = vmatmul.mubr.f32.gmra.mrb[0].mxu0 %v654
  %v722 = vpop.f32.mrb[0].mxu0
  %v723 = vadd.f32 0.0, %v722
  %v724 = vpop.f32.mrb[0].mxu0
  %725 = vdwg.mxu0
  %v726 = vadd.f32 %v650, %v723
  %v727 = vxor.u32 %v726, 2147483648
  %v728 = vmul.f32 %v727, 1.442695
  %v729 = vpow.pop %v728
  %v730 = vadd.f32 %v729, 1.0
  %v731 = vrcp.pop %v730
  %v732 = vmul.f32 1.0, %v731
  %v733 = vadd.f32 %v723, %v107
  %735 = vrot.lane.b32.xlu0 %v733, 64
  %v736 = vpop.permute.xlu0 %735
  %v738 = vmul.f32 %v732, %v736
  %740 = vrot.lane.b32.xlu0 %v738, 64
  %v741 = vpop.permute.xlu0 %740
  %v743 = vadd.f32 %v650, %v741
  %v744 = vtanh.pop %v743
  %v745 = vsub.f32 1.0, %v732
  %747 = vrot.lane.b32.xlu0 %v744, 96
  %v748 = vpop.permute.xlu0 %747
  %v750 = vmul.f32 %v745, %v748
  %v751 = vmul.f32 %v732, %v648
  %v752 = vadd.f32 %v750, %v751
  %s753 = scalar_lea.vmem %s0, 56
  %v754 = vld [vmem:[%s753] sm:$0xff]
  %756 = vrot.lane.b32.xlu0 %v752, 96
  %v757 = vpop.permute.xlu0 %756
  %v758 = vsel %vm20, %v757, 0
  %760 = vmatprep.subr.mxu0 0.0
  %761 = vmatpush1.msra.mxu0 %v14
  %762 = vmatprep.subr.mxu0 0.0
  %763 = vmatpush1.msra.mxu0 %v15
  %764 = vmatprep.subr.mxu0 0.0
  %765 = vmatpush1.msra.mxu0 %v16
  %766 = vmatprep.subr.mxu0 0.0
  %767 = vmatpush1.msra.mxu0 %v17
  %768 = vmatprep.subr.mxu0 0.0
  %769 = vmatpush1.msra.mxu0 0.0
  %770 = vmatprep.subr.mxu0 0.0
  %771 = vmatpush1.msra.mxu0 0.0
  %772 = vmatprep.subr.mxu0 0.0
  %773 = vmatpush1.msra.mxu0 0.0
  %774 = vmatprep.subr.mxu0 0.0
  %775 = vmatpush1.msra.mxu0 0.0
  %776 = vmatprep.subr.mxu0 0.0
  %777 = vmatpush1.msra.mxu0 0.0
  %778 = vmatprep.subr.mxu0 0.0
  %779 = vmatpush1.msra.mxu0 0.0
  %780 = vmatprep.subr.mxu0 0.0
  %781 = vmatpush1.msra.mxu0 0.0
  %782 = vmatprep.subr.mxu0 0.0
  %783 = vmatpush1.msra.mxu0 0.0
  %784 = vmatprep.subr.mxu0 0.0
  %785 = vmatpush1.msra.mxu0 0.0
  %786 = vmatprep.subr.mxu0 0.0
  %787 = vmatpush1.msra.mxu0 0.0
  %788 = vmatprep.subr.mxu0 0.0
  %789 = vmatpush1.msra.mxu0 0.0
  %790 = vmatprep.subr.mxu0 0.0
  %791 = vmatpush1.msra.mxu0 0.0
  %792 = vmatprep.subr.mxu0 0.0
  %793 = vmatpush1.msra.mxu0 0.0
  %794 = vmatprep.subr.mxu0 0.0
  %795 = vmatpush1.msra.mxu0 0.0
  %796 = vmatprep.subr.mxu0 0.0
  %797 = vmatpush1.msra.mxu0 0.0
  %798 = vmatprep.subr.mxu0 0.0
  %799 = vmatpush1.msra.mxu0 0.0
  %800 = vmatprep.subr.mxu0 0.0
  %801 = vmatpush1.msra.mxu0 0.0
  %802 = vmatprep.subr.mxu0 0.0
  %803 = vmatpush1.msra.mxu0 0.0
  %804 = vmatprep.subr.mxu0 0.0
  %805 = vmatpush1.msra.mxu0 0.0
  %806 = vmatprep.subr.mxu0 0.0
  %807 = vmatpush1.msra.mxu0 0.0
  %808 = vmatprep.subr.mxu0 0.0
  %809 = vmatpush1.msra.mxu0 0.0
  %810 = vmatprep.subr.mxu0 0.0
  %811 = vmatpush1.msra.mxu0 0.0
  %812 = vmatprep.subr.mxu0 0.0
  %813 = vmatpush1.msra.mxu0 0.0
  %814 = vmatprep.subr.mxu0 0.0
  %815 = vmatpush1.msra.mxu0 0.0
  %816 = vmatprep.subr.mxu0 0.0
  %817 = vmatpush1.msra.mxu0 0.0
  %818 = vmatprep.subr.mxu0 0.0
  %819 = vmatpush1.msra.mxu0 0.0
  %820 = vmatprep.subr.mxu0 0.0
  %821 = vmatpush1.msra.mxu0 0.0
  %822 = vmatprep.subr.mxu0 0.0
  %823 = vmatpush1.msra.mxu0 0.0
  %824 = vmatprep.mubr.f32.mxu0 0.0
  %825 = vmatmul.mubr.f32.gmra.mrb[0].mxu0 %v758
  %v826 = vpop.f32.mrb[0].mxu0
  %v827 = vadd.f32 0.0, %v826
  %v828 = vpop.f32.mrb[0].mxu0
  %829 = vdwg.mxu0
  %v830 = vadd.f32 %v754, %v827
  %v831 = vxor.u32 %v830, 2147483648
  %v832 = vmul.f32 %v831, 1.442695
  %v833 = vpow.pop %v832
  %v834 = vadd.f32 %v833, 1.0
  %v835 = vrcp.pop %v834
  %v836 = vmul.f32 1.0, %v835
  %v837 = vadd.f32 %v827, %v107
  %839 = vrot.lane.b32.xlu0 %v837, 64
  %v840 = vpop.permute.xlu0 %839
  %v842 = vmul.f32 %v836, %v840
  %844 = vrot.lane.b32.xlu0 %v842, 64
  %v845 = vpop.permute.xlu0 %844
  %v847 = vadd.f32 %v754, %v845
  %v848 = vtanh.pop %v847
  %v849 = vsub.f32 1.0, %v836
  %851 = vrot.lane.b32.xlu0 %v848, 96
  %v852 = vpop.permute.xlu0 %851
  %v854 = vmul.f32 %v849, %v852
  %v855 = vmul.f32 %v836, %v752
  %v856 = vadd.f32 %v854, %v855
  %s857 = scalar_lea.vmem %s0, 64
  %v858 = vld [vmem:[%s857] sm:$0xff]
  %860 = vrot.lane.b32.xlu0 %v856, 96
  %v861 = vpop.permute.xlu0 %860
  %v862 = vsel %vm20, %v861, 0
  %864 = vmatprep.subr.mxu0 0.0
  %865 = vmatpush1.msra.mxu0 %v14
  %866 = vmatprep.subr.mxu0 0.0
  %867 = vmatpush1.msra.mxu0 %v15
  %868 = vmatprep.subr.mxu0 0.0
  %869 = vmatpush1.msra.mxu0 %v16
  %870 = vmatprep.subr.mxu0 0.0
  %871 = vmatpush1.msra.mxu0 %v17
  %872 = vmatprep.subr.mxu0 0.0
  %873 = vmatpush1.msra.mxu0 0.0
  %874 = vmatprep.subr.mxu0 0.0
  %875 = vmatpush1.msra.mxu0 0.0
  %876 = vmatprep.subr.mxu0 0.0
  %877 = vmatpush1.msra.mxu0 0.0
  %878 = vmatprep.subr.mxu0 0.0
  %879 = vmatpush1.msra.mxu0 0.0
  %880 = vmatprep.subr.mxu0 0.0
  %881 = vmatpush1.msra.mxu0 0.0
  %882 = vmatprep.subr.mxu0 0.0
  %883 = vmatpush1.msra.mxu0 0.0
  %884 = vmatprep.subr.mxu0 0.0
  %885 = vmatpush1.msra.mxu0 0.0
  %886 = vmatprep.subr.mxu0 0.0
  %887 = vmatpush1.msra.mxu0 0.0
  %888 = vmatprep.subr.mxu0 0.0
  %889 = vmatpush1.msra.mxu0 0.0
  %890 = vmatprep.subr.mxu0 0.0
  %891 = vmatpush1.msra.mxu0 0.0
  %892 = vmatprep.subr.mxu0 0.0
  %893 = vmatpush1.msra.mxu0 0.0
  %894 = vmatprep.subr.mxu0 0.0
  %895 = vmatpush1.msra.mxu0 0.0
  %896 = vmatprep.subr.mxu0 0.0
  %897 = vmatpush1.msra.mxu0 0.0
  %898 = vmatprep.subr.mxu0 0.0
  %899 = vmatpush1.msra.mxu0 0.0
  %900 = vmatprep.subr.mxu0 0.0
  %901 = vmatpush1.msra.mxu0 0.0
  %902 = vmatprep.subr.mxu0 0.0
  %903 = vmatpush1.msra.mxu0 0.0
  %904 = vmatprep.subr.mxu0 0.0
  %905 = vmatpush1.msra.mxu0 0.0
  %906 = vmatprep.subr.mxu0 0.0
  %907 = vmatpush1.msra.mxu0 0.0
  %908 = vmatprep.subr.mxu0 0.0
  %909 = vmatpush1.msra.mxu0 0.0
  %910 = vmatprep.subr.mxu0 0.0
  %911 = vmatpush1.msra.mxu0 0.0
  %912 = vmatprep.subr.mxu0 0.0
  %913 = vmatpush1.msra.mxu0 0.0
  %914 = vmatprep.subr.mxu0 0.0
  %915 = vmatpush1.msra.mxu0 0.0
  %916 = vmatprep.subr.mxu0 0.0
  %917 = vmatpush1.msra.mxu0 0.0
  %918 = vmatprep.subr.mxu0 0.0
  %919 = vmatpush1.msra.mxu0 0.0
  %920 = vmatprep.subr.mxu0 0.0
  %921 = vmatpush1.msra.mxu0 0.0
  %922 = vmatprep.subr.mxu0 0.0
  %923 = vmatpush1.msra.mxu0 0.0
  %924 = vmatprep.subr.mxu0 0.0
  %925 = vmatpush1.msra.mxu0 0.0
  %926 = vmatprep.subr.mxu0 0.0
  %927 = vmatpush1.msra.mxu0 0.0
  %928 = vmatprep.mubr.f32.mxu0 0.0
  %929 = vmatmul.mubr.f32.gmra.mrb[0].mxu0 %v862
  %v930 = vpop.f32.mrb[0].mxu0
  %v931 = vadd.f32 0.0, %v930
  %v932 = vpop.f32.mrb[0].mxu0
  %933 = vdwg.mxu0
  %v934 = vadd.f32 %v858, %v931
  %v935 = vxor.u32 %v934, 2147483648
  %v936 = vmul.f32 %v935, 1.442695
  %v937 = vpow.pop %v936
  %v938 = vadd.f32 %v937, 1.0
  %v939 = vrcp.pop %v938
  %v940 = vmul.f32 1.0, %v939
  %v941 = vadd.f32 %v931, %v107
  %943 = vrot.lane.b32.xlu0 %v941, 64
  %v944 = vpop.permute.xlu0 %943
  %v946 = vmul.f32 %v940, %v944
  %948 = vrot.lane.b32.xlu0 %v946, 64
  %v949 = vpop.permute.xlu0 %948
  %v951 = vadd.f32 %v858, %v949
  %v952 = vtanh.pop %v951
  %v953 = vsub.f32 1.0, %v940
  %955 = vrot.lane.b32.xlu0 %v952, 96
  %v956 = vpop.permute.xlu0 %955
  %v958 = vmul.f32 %v953, %v956
  %v959 = vmul.f32 %v940, %v856
  %v960 = vadd.f32 %v958, %v959
  %s961 = scalar_lea.vmem %s0, 72
  %v962 = vld [vmem:[%s961] sm:$0xff]
  %964 = vrot.lane.b32.xlu0 %v960, 96
  %v965 = vpop.permute.xlu0 %964
  %v966 = vsel %vm20, %v965, 0
  %968 = vmatprep.subr.mxu0 0.0
  %969 = vmatpush1.msra.mxu0 %v14
  %970 = vmatprep.subr.mxu0 0.0
  %971 = vmatpush1.msra.mxu0 %v15
  %972 = vmatprep.subr.mxu0 0.0
  %973 = vmatpush1.msra.mxu0 %v16
  %974 = vmatprep.subr.mxu0 0.0
  %975 = vmatpush1.msra.mxu0 %v17
  %976 = vmatprep.subr.mxu0 0.0
  %977 = vmatpush1.msra.mxu0 0.0
  %978 = vmatprep.subr.mxu0 0.0
  %979 = vmatpush1.msra.mxu0 0.0
  %980 = vmatprep.subr.mxu0 0.0
  %981 = vmatpush1.msra.mxu0 0.0
  %982 = vmatprep.subr.mxu0 0.0
  %983 = vmatpush1.msra.mxu0 0.0
  %984 = vmatprep.subr.mxu0 0.0
  %985 = vmatpush1.msra.mxu0 0.0
  %986 = vmatprep.subr.mxu0 0.0
  %987 = vmatpush1.msra.mxu0 0.0
  %988 = vmatprep.subr.mxu0 0.0
  %989 = vmatpush1.msra.mxu0 0.0
  %990 = vmatprep.subr.mxu0 0.0
  %991 = vmatpush1.msra.mxu0 0.0
  %992 = vmatprep.subr.mxu0 0.0
  %993 = vmatpush1.msra.mxu0 0.0
  %994 = vmatprep.subr.mxu0 0.0
  %995 = vmatpush1.msra.mxu0 0.0
  %996 = vmatprep.subr.mxu0 0.0
  %997 = vmatpush1.msra.mxu0 0.0
  %998 = vmatprep.subr.mxu0 0.0
  %999 = vmatpush1.msra.mxu0 0.0
  %1000 = vmatprep.subr.mxu0 0.0
  %1001 = vmatpush1.msra.mxu0 0.0
  %1002 = vmatprep.subr.mxu0 0.0
  %1003 = vmatpush1.msra.mxu0 0.0
  %1004 = vmatprep.subr.mxu0 0.0
  %1005 = vmatpush1.msra.mxu0 0.0
  %1006 = vmatprep.subr.mxu0 0.0
  %1007 = vmatpush1.msra.mxu0 0.0
  %1008 = vmatprep.subr.mxu0 0.0
  %1009 = vmatpush1.msra.mxu0 0.0
  %1010 = vmatprep.subr.mxu0 0.0
  %1011 = vmatpush1.msra.mxu0 0.0
  %1012 = vmatprep.subr.mxu0 0.0
  %1013 = vmatpush1.msra.mxu0 0.0
  %1014 = vmatprep.subr.mxu0 0.0
  %1015 = vmatpush1.msra.mxu0 0.0
  %1016 = vmatprep.subr.mxu0 0.0
  %1017 = vmatpush1.msra.mxu0 0.0
  %1018 = vmatprep.subr.mxu0 0.0
  %1019 = vmatpush1.msra.mxu0 0.0
  %1020 = vmatprep.subr.mxu0 0.0
  %1021 = vmatpush1.msra.mxu0 0.0
  %1022 = vmatprep.subr.mxu0 0.0
  %1023 = vmatpush1.msra.mxu0 0.0
  %1024 = vmatprep.subr.mxu0 0.0
  %1025 = vmatpush1.msra.mxu0 0.0
  %1026 = vmatprep.subr.mxu0 0.0
  %1027 = vmatpush1.msra.mxu0 0.0
  %1028 = vmatprep.subr.mxu0 0.0
  %1029 = vmatpush1.msra.mxu0 0.0
  %1030 = vmatprep.subr.mxu0 0.0
  %1031 = vmatpush1.msra.mxu0 0.0
  %1032 = vmatprep.mubr.f32.mxu0 0.0
  %1033 = vmatmul.mubr.f32.gmra.mrb[0].mxu0 %v966
  %v1034 = vpop.f32.mrb[0].mxu0
  %v1035 = vadd.f32 0.0, %v1034
  %v1036 = vpop.f32.mrb[0].mxu0
  %1037 = vdwg.mxu0
  %v1038 = vadd.f32 %v962, %v1035
  %v1039 = vxor.u32 %v1038, 2147483648
  %v1040 = vmul.f32 %v1039, 1.442695
  %v1041 = vpow.pop %v1040
  %v1042 = vadd.f32 %v1041, 1.0
  %v1043 = vrcp.pop %v1042
  %v1044 = vmul.f32 1.0, %v1043
  %v1045 = vadd.f32 %v1035, %v107
  %1047 = vrot.lane.b32.xlu0 %v1045, 64
  %v1048 = vpop.permute.xlu0 %1047
  %v1050 = vmul.f32 %v1044, %v1048
  %1052 = vrot.lane.b32.xlu0 %v1050, 64
  %v1053 = vpop.permute.xlu0 %1052
  %v1055 = vadd.f32 %v962, %v1053
  %v1056 = vtanh.pop %v1055
  %v1057 = vsub.f32 1.0, %v1044
  %1059 = vrot.lane.b32.xlu0 %v1056, 96
  %v1060 = vpop.permute.xlu0 %1059
  %v1062 = vmul.f32 %v1057, %v1060
  %v1063 = vmul.f32 %v1044, %v960
  %v1064 = vadd.f32 %v1062, %v1063
  %s1065 = scalar_lea.vmem %s0, 80
  %v1066 = vld [vmem:[%s1065] sm:$0xff]
  %1068 = vrot.lane.b32.xlu0 %v1064, 96
  %v1069 = vpop.permute.xlu0 %1068
  %v1070 = vsel %vm20, %v1069, 0
  %1072 = vmatprep.subr.mxu0 0.0
  %1073 = vmatpush1.msra.mxu0 %v14
  %1074 = vmatprep.subr.mxu0 0.0
  %1075 = vmatpush1.msra.mxu0 %v15
  %1076 = vmatprep.subr.mxu0 0.0
  %1077 = vmatpush1.msra.mxu0 %v16
  %1078 = vmatprep.subr.mxu0 0.0
  %1079 = vmatpush1.msra.mxu0 %v17
  %1080 = vmatprep.subr.mxu0 0.0
  %1081 = vmatpush1.msra.mxu0 0.0
  %1082 = vmatprep.subr.mxu0 0.0
  %1083 = vmatpush1.msra.mxu0 0.0
  %1084 = vmatprep.subr.mxu0 0.0
  %1085 = vmatpush1.msra.mxu0 0.0
  %1086 = vmatprep.subr.mxu0 0.0
  %1087 = vmatpush1.msra.mxu0 0.0
  %1088 = vmatprep.subr.mxu0 0.0
  %1089 = vmatpush1.msra.mxu0 0.0
  %1090 = vmatprep.subr.mxu0 0.0
  %1091 = vmatpush1.msra.mxu0 0.0
  %1092 = vmatprep.subr.mxu0 0.0
  %1093 = vmatpush1.msra.mxu0 0.0
  %1094 = vmatprep.subr.mxu0 0.0
  %1095 = vmatpush1.msra.mxu0 0.0
  %1096 = vmatprep.subr.mxu0 0.0
  %1097 = vmatpush1.msra.mxu0 0.0
  %1098 = vmatprep.subr.mxu0 0.0
  %1099 = vmatpush1.msra.mxu0 0.0
  %1100 = vmatprep.subr.mxu0 0.0
  %1101 = vmatpush1.msra.mxu0 0.0
  %1102 = vmatprep.subr.mxu0 0.0
  %1103 = vmatpush1.msra.mxu0 0.0
  %1104 = vmatprep.subr.mxu0 0.0
  %1105 = vmatpush1.msra.mxu0 0.0
  %1106 = vmatprep.subr.mxu0 0.0
  %1107 = vmatpush1.msra.mxu0 0.0
  %1108 = vmatprep.subr.mxu0 0.0
  %1109 = vmatpush1.msra.mxu0 0.0
  %1110 = vmatprep.subr.mxu0 0.0
  %1111 = vmatpush1.msra.mxu0 0.0
  %1112 = vmatprep.subr.mxu0 0.0
  %1113 = vmatpush1.msra.mxu0 0.0
  %1114 = vmatprep.subr.mxu0 0.0
  %1115 = vmatpush1.msra.mxu0 0.0
  %1116 = vmatprep.subr.mxu0 0.0
  %1117 = vmatpush1.msra.mxu0 0.0
  %1118 = vmatprep.subr.mxu0 0.0
  %1119 = vmatpush1.msra.mxu0 0.0
  %1120 = vmatprep.subr.mxu0 0.0
  %1121 = vmatpush1.msra.mxu0 0.0
  %1122 = vmatprep.subr.mxu0 0.0
  %1123 = vmatpush1.msra.mxu0 0.0
  %1124 = vmatprep.subr.mxu0 0.0
  %1125 = vmatpush1.msra.mxu0 0.0
  %1126 = vmatprep.subr.mxu0 0.0
  %1127 = vmatpush1.msra.mxu0 0.0
  %1128 = vmatprep.subr.mxu0 0.0
  %1129 = vmatpush1.msra.mxu0 0.0
  %1130 = vmatprep.subr.mxu0 0.0
  %1131 = vmatpush1.msra.mxu0 0.0
  %1132 = vmatprep.subr.mxu0 0.0
  %1133 = vmatpush1.msra.mxu0 0.0
  %1134 = vmatprep.subr.mxu0 0.0
  %1135 = vmatpush1.msra.mxu0 0.0
  %1136 = vmatprep.mubr.f32.mxu0 0.0
  %1137 = vmatmul.mubr.f32.gmra.mrb[0].mxu0 %v1070
  %v1138 = vpop.f32.mrb[0].mxu0
  %v1139 = vadd.f32 0.0, %v1138
  %v1140 = vpop.f32.mrb[0].mxu0
  %1141 = vdwg.mxu0
  %v1142 = vadd.f32 %v1066, %v1139
  %v1143 = vxor.u32 %v1142, 2147483648
  %v1144 = vmul.f32 %v1143, 1.442695
  %v1145 = vpow.pop %v1144
  %v1146 = vadd.f32 %v1145, 1.0
  %v1147 = vrcp.pop %v1146
  %v1148 = vmul.f32 1.0, %v1147
  %v1149 = vadd.f32 %v1139, %v107
  %1151 = vrot.lane.b32.xlu0 %v1149, 64
  %v1152 = vpop.permute.xlu0 %1151
  %v1154 = vmul.f32 %v1148, %v1152
  %1156 = vrot.lane.b32.xlu0 %v1154, 64
  %v1157 = vpop.permute.xlu0 %1156
  %v1159 = vadd.f32 %v1066, %v1157
  %v1160 = vtanh.pop %v1159
  %v1161 = vsub.f32 1.0, %v1148
  %1163 = vrot.lane.b32.xlu0 %v1160, 96
  %v1164 = vpop.permute.xlu0 %1163
  %v1166 = vmul.f32 %v1161, %v1164
  %v1167 = vmul.f32 %v1148, %v1064
  %v1168 = vadd.f32 %v1166, %v1167
  %s1169 = scalar_lea.vmem %s0, 88
  %v1170 = vld [vmem:[%s1169] sm:$0xff]
  %1172 = vrot.lane.b32.xlu0 %v1168, 96
  %v1173 = vpop.permute.xlu0 %1172
  %v1174 = vsel %vm20, %v1173, 0
  %1176 = vmatprep.subr.mxu0 0.0
  %1177 = vmatpush1.msra.mxu0 %v14
  %1178 = vmatprep.subr.mxu0 0.0
  %1179 = vmatpush1.msra.mxu0 %v15
  %1180 = vmatprep.subr.mxu0 0.0
  %1181 = vmatpush1.msra.mxu0 %v16
  %1182 = vmatprep.subr.mxu0 0.0
  %1183 = vmatpush1.msra.mxu0 %v17
  %1184 = vmatprep.subr.mxu0 0.0
  %1185 = vmatpush1.msra.mxu0 0.0
  %1186 = vmatprep.subr.mxu0 0.0
  %1187 = vmatpush1.msra.mxu0 0.0
  %1188 = vmatprep.subr.mxu0 0.0
  %1189 = vmatpush1.msra.mxu0 0.0
  %1190 = vmatprep.subr.mxu0 0.0
  %1191 = vmatpush1.msra.mxu0 0.0
  %1192 = vmatprep.subr.mxu0 0.0
  %1193 = vmatpush1.msra.mxu0 0.0
  %1194 = vmatprep.subr.mxu0 0.0
  %1195 = vmatpush1.msra.mxu0 0.0
  %1196 = vmatprep.subr.mxu0 0.0
  %1197 = vmatpush1.msra.mxu0 0.0
  %1198 = vmatprep.subr.mxu0 0.0
  %1199 = vmatpush1.msra.mxu0 0.0
  %1200 = vmatprep.subr.mxu0 0.0
  %1201 = vmatpush1.msra.mxu0 0.0
  %1202 = vmatprep.subr.mxu0 0.0
  %1203 = vmatpush1.msra.mxu0 0.0
  %1204 = vmatprep.subr.mxu0 0.0
  %1205 = vmatpush1.msra.mxu0 0.0
  %1206 = vmatprep.subr.mxu0 0.0
  %1207 = vmatpush1.msra.mxu0 0.0
  %1208 = vmatprep.subr.mxu0 0.0
  %1209 = vmatpush1.msra.mxu0 0.0
  %1210 = vmatprep.subr.mxu0 0.0
  %1211 = vmatpush1.msra.mxu0 0.0
  %1212 = vmatprep.subr.mxu0 0.0
  %1213 = vmatpush1.msra.mxu0 0.0
  %1214 = vmatprep.subr.mxu0 0.0
  %1215 = vmatpush1.msra.mxu0 0.0
  %1216 = vmatprep.subr.mxu0 0.0
  %1217 = vmatpush1.msra.mxu0 0.0
  %1218 = vmatprep.subr.mxu0 0.0
  %1219 = vmatpush1.msra.mxu0 0.0
  %1220 = vmatprep.subr.mxu0 0.0
  %1221 = vmatpush1.msra.mxu0 0.0
  %1222 = vmatprep.subr.mxu0 0.0
  %1223 = vmatpush1.msra.mxu0 0.0
  %1224 = vmatprep.subr.mxu0 0.0
  %1225 = vmatpush1.msra.mxu0 0.0
  %1226 = vmatprep.subr.mxu0 0.0
  %1227 = vmatpush1.msra.mxu0 0.0
  %1228 = vmatprep.subr.mxu0 0.0
  %1229 = vmatpush1.msra.mxu0 0.0
  %1230 = vmatprep.subr.mxu0 0.0
  %1231 = vmatpush1.msra.mxu0 0.0
  %1232 = vmatprep.subr.mxu0 0.0
  %1233 = vmatpush1.msra.mxu0 0.0
  %1234 = vmatprep.subr.mxu0 0.0
  %1235 = vmatpush1.msra.mxu0 0.0
  %1236 = vmatprep.subr.mxu0 0.0
  %1237 = vmatpush1.msra.mxu0 0.0
  %1238 = vmatprep.subr.mxu0 0.0
  %1239 = vmatpush1.msra.mxu0 0.0
  %1240 = vmatprep.mubr.f32.mxu0 0.0
  %1241 = vmatmul.mubr.f32.gmra.mrb[0].mxu0 %v1174
  %v1242 = vpop.f32.mrb[0].mxu0
  %v1243 = vadd.f32 0.0, %v1242
  %v1244 = vpop.f32.mrb[0].mxu0
  %1245 = vdwg.mxu0
  %v1246 = vadd.f32 %v1170, %v1243
  %v1247 = vxor.u32 %v1246, 2147483648
  %v1248 = vmul.f32 %v1247, 1.442695
  %v1249 = vpow.pop %v1248
  %v1250 = vadd.f32 %v1249, 1.0
  %v1251 = vrcp.pop %v1250
  %v1252 = vmul.f32 1.0, %v1251
  %v1253 = vadd.f32 %v1243, %v107
  %1255 = vrot.lane.b32.xlu0 %v1253, 64
  %v1256 = vpop.permute.xlu0 %1255
  %v1258 = vmul.f32 %v1252, %v1256
  %1260 = vrot.lane.b32.xlu0 %v1258, 64
  %v1261 = vpop.permute.xlu0 %1260
  %v1263 = vadd.f32 %v1170, %v1261
  %v1264 = vtanh.pop %v1263
  %v1265 = vsub.f32 1.0, %v1252
  %1267 = vrot.lane.b32.xlu0 %v1264, 96
  %v1268 = vpop.permute.xlu0 %1267
  %v1270 = vmul.f32 %v1265, %v1268
  %v1271 = vmul.f32 %v1252, %v1168
  %v1272 = vadd.f32 %v1270, %v1271
  %s1273 = scalar_lea.vmem %s0, 96
  %v1274 = vld [vmem:[%s1273] sm:$0xff]
  %1276 = vrot.lane.b32.xlu0 %v1272, 96
  %v1277 = vpop.permute.xlu0 %1276
  %v1278 = vsel %vm20, %v1277, 0
  %1280 = vmatprep.subr.mxu0 0.0
  %1281 = vmatpush1.msra.mxu0 %v14
  %1282 = vmatprep.subr.mxu0 0.0
  %1283 = vmatpush1.msra.mxu0 %v15
  %1284 = vmatprep.subr.mxu0 0.0
  %1285 = vmatpush1.msra.mxu0 %v16
  %1286 = vmatprep.subr.mxu0 0.0
  %1287 = vmatpush1.msra.mxu0 %v17
  %1288 = vmatprep.subr.mxu0 0.0
  %1289 = vmatpush1.msra.mxu0 0.0
  %1290 = vmatprep.subr.mxu0 0.0
  %1291 = vmatpush1.msra.mxu0 0.0
  %1292 = vmatprep.subr.mxu0 0.0
  %1293 = vmatpush1.msra.mxu0 0.0
  %1294 = vmatprep.subr.mxu0 0.0
  %1295 = vmatpush1.msra.mxu0 0.0
  %1296 = vmatprep.subr.mxu0 0.0
  %1297 = vmatpush1.msra.mxu0 0.0
  %1298 = vmatprep.subr.mxu0 0.0
  %1299 = vmatpush1.msra.mxu0 0.0
  %1300 = vmatprep.subr.mxu0 0.0
  %1301 = vmatpush1.msra.mxu0 0.0
  %1302 = vmatprep.subr.mxu0 0.0
  %1303 = vmatpush1.msra.mxu0 0.0
  %1304 = vmatprep.subr.mxu0 0.0
  %1305 = vmatpush1.msra.mxu0 0.0
  %1306 = vmatprep.subr.mxu0 0.0
  %1307 = vmatpush1.msra.mxu0 0.0
  %1308 = vmatprep.subr.mxu0 0.0
  %1309 = vmatpush1.msra.mxu0 0.0
  %1310 = vmatprep.subr.mxu0 0.0
  %1311 = vmatpush1.msra.mxu0 0.0
  %1312 = vmatprep.subr.mxu0 0.0
  %1313 = vmatpush1.msra.mxu0 0.0
  %1314 = vmatprep.subr.mxu0 0.0
  %1315 = vmatpush1.msra.mxu0 0.0
  %1316 = vmatprep.subr.mxu0 0.0
  %1317 = vmatpush1.msra.mxu0 0.0
  %1318 = vmatprep.subr.mxu0 0.0
  %1319 = vmatpush1.msra.mxu0 0.0
  %1320 = vmatprep.subr.mxu0 0.0
  %1321 = vmatpush1.msra.mxu0 0.0
  %1322 = vmatprep.subr.mxu0 0.0
  %1323 = vmatpush1.msra.mxu0 0.0
  %1324 = vmatprep.subr.mxu0 0.0
  %1325 = vmatpush1.msra.mxu0 0.0
  %1326 = vmatprep.subr.mxu0 0.0
  %1327 = vmatpush1.msra.mxu0 0.0
  %1328 = vmatprep.subr.mxu0 0.0
  %1329 = vmatpush1.msra.mxu0 0.0
  %1330 = vmatprep.subr.mxu0 0.0
  %1331 = vmatpush1.msra.mxu0 0.0
  %1332 = vmatprep.subr.mxu0 0.0
  %1333 = vmatpush1.msra.mxu0 0.0
  %1334 = vmatprep.subr.mxu0 0.0
  %1335 = vmatpush1.msra.mxu0 0.0
  %1336 = vmatprep.subr.mxu0 0.0
  %1337 = vmatpush1.msra.mxu0 0.0
  %1338 = vmatprep.subr.mxu0 0.0
  %1339 = vmatpush1.msra.mxu0 0.0
  %1340 = vmatprep.subr.mxu0 0.0
  %1341 = vmatpush1.msra.mxu0 0.0
  %1342 = vmatprep.subr.mxu0 0.0
  %1343 = vmatpush1.msra.mxu0 0.0
  %1344 = vmatprep.mubr.f32.mxu0 0.0
  %1345 = vmatmul.mubr.f32.gmra.mrb[0].mxu0 %v1278
  %v1346 = vpop.f32.mrb[0].mxu0
  %v1347 = vadd.f32 0.0, %v1346
  %v1348 = vpop.f32.mrb[0].mxu0
  %1349 = vdwg.mxu0
  %v1350 = vadd.f32 %v1274, %v1347
  %v1351 = vxor.u32 %v1350, 2147483648
  %v1352 = vmul.f32 %v1351, 1.442695
  %v1353 = vpow.pop %v1352
  %v1354 = vadd.f32 %v1353, 1.0
  %v1355 = vrcp.pop %v1354
  %v1356 = vmul.f32 1.0, %v1355
  %v1357 = vadd.f32 %v1347, %v107
  %1359 = vrot.lane.b32.xlu0 %v1357, 64
  %v1360 = vpop.permute.xlu0 %1359
  %v1362 = vmul.f32 %v1356, %v1360
  %1364 = vrot.lane.b32.xlu0 %v1362, 64
  %v1365 = vpop.permute.xlu0 %1364
  %v1367 = vadd.f32 %v1274, %v1365
  %v1368 = vtanh.pop %v1367
  %v1369 = vsub.f32 1.0, %v1356
  %1371 = vrot.lane.b32.xlu0 %v1368, 96
  %v1372 = vpop.permute.xlu0 %1371
  %v1374 = vmul.f32 %v1369, %v1372
  %v1375 = vmul.f32 %v1356, %v1272
  %v1376 = vadd.f32 %v1374, %v1375
  %s1377 = scalar_lea.vmem %s0, 104
  %v1378 = vld [vmem:[%s1377] sm:$0xff]
  %1380 = vrot.lane.b32.xlu0 %v1376, 96
  %v1381 = vpop.permute.xlu0 %1380
  %v1382 = vsel %vm20, %v1381, 0
  %1384 = vmatprep.subr.mxu0 0.0
  %1385 = vmatpush1.msra.mxu0 %v14
  %1386 = vmatprep.subr.mxu0 0.0
  %1387 = vmatpush1.msra.mxu0 %v15
  %1388 = vmatprep.subr.mxu0 0.0
  %1389 = vmatpush1.msra.mxu0 %v16
  %1390 = vmatprep.subr.mxu0 0.0
  %1391 = vmatpush1.msra.mxu0 %v17
  %1392 = vmatprep.subr.mxu0 0.0
  %1393 = vmatpush1.msra.mxu0 0.0
  %1394 = vmatprep.subr.mxu0 0.0
  %1395 = vmatpush1.msra.mxu0 0.0
  %1396 = vmatprep.subr.mxu0 0.0
  %1397 = vmatpush1.msra.mxu0 0.0
  %1398 = vmatprep.subr.mxu0 0.0
  %1399 = vmatpush1.msra.mxu0 0.0
  %1400 = vmatprep.subr.mxu0 0.0
  %1401 = vmatpush1.msra.mxu0 0.0
  %1402 = vmatprep.subr.mxu0 0.0
  %1403 = vmatpush1.msra.mxu0 0.0
  %1404 = vmatprep.subr.mxu0 0.0
  %1405 = vmatpush1.msra.mxu0 0.0
  %1406 = vmatprep.subr.mxu0 0.0
  %1407 = vmatpush1.msra.mxu0 0.0
  %1408 = vmatprep.subr.mxu0 0.0
  %1409 = vmatpush1.msra.mxu0 0.0
  %1410 = vmatprep.subr.mxu0 0.0
  %1411 = vmatpush1.msra.mxu0 0.0
  %1412 = vmatprep.subr.mxu0 0.0
  %1413 = vmatpush1.msra.mxu0 0.0
  %1414 = vmatprep.subr.mxu0 0.0
  %1415 = vmatpush1.msra.mxu0 0.0
  %1416 = vmatprep.subr.mxu0 0.0
  %1417 = vmatpush1.msra.mxu0 0.0
  %1418 = vmatprep.subr.mxu0 0.0
  %1419 = vmatpush1.msra.mxu0 0.0
  %1420 = vmatprep.subr.mxu0 0.0
  %1421 = vmatpush1.msra.mxu0 0.0
  %1422 = vmatprep.subr.mxu0 0.0
  %1423 = vmatpush1.msra.mxu0 0.0
  %1424 = vmatprep.subr.mxu0 0.0
  %1425 = vmatpush1.msra.mxu0 0.0
  %1426 = vmatprep.subr.mxu0 0.0
  %1427 = vmatpush1.msra.mxu0 0.0
  %1428 = vmatprep.subr.mxu0 0.0
  %1429 = vmatpush1.msra.mxu0 0.0
  %1430 = vmatprep.subr.mxu0 0.0
  %1431 = vmatpush1.msra.mxu0 0.0
  %1432 = vmatprep.subr.mxu0 0.0
  %1433 = vmatpush1.msra.mxu0 0.0
  %1434 = vmatprep.subr.mxu0 0.0
  %1435 = vmatpush1.msra.mxu0 0.0
  %1436 = vmatprep.subr.mxu0 0.0
  %1437 = vmatpush1.msra.mxu0 0.0
  %1438 = vmatprep.subr.mxu0 0.0
  %1439 = vmatpush1.msra.mxu0 0.0
  %1440 = vmatprep.subr.mxu0 0.0
  %1441 = vmatpush1.msra.mxu0 0.0
  %1442 = vmatprep.subr.mxu0 0.0
  %1443 = vmatpush1.msra.mxu0 0.0
  %1444 = vmatprep.subr.mxu0 0.0
  %1445 = vmatpush1.msra.mxu0 0.0
  %1446 = vmatprep.subr.mxu0 0.0
  %1447 = vmatpush1.msra.mxu0 0.0
  %1448 = vmatprep.mubr.f32.mxu0 0.0
  %1449 = vmatmul.mubr.f32.gmra.mrb[0].mxu0 %v1382
  %v1450 = vpop.f32.mrb[0].mxu0
  %v1451 = vadd.f32 0.0, %v1450
  %v1452 = vpop.f32.mrb[0].mxu0
  %1453 = vdwg.mxu0
  %v1454 = vadd.f32 %v1378, %v1451
  %v1455 = vxor.u32 %v1454, 2147483648
  %v1456 = vmul.f32 %v1455, 1.442695
  %v1457 = vpow.pop %v1456
  %v1458 = vadd.f32 %v1457, 1.0
  %v1459 = vrcp.pop %v1458
  %v1460 = vmul.f32 1.0, %v1459
  %v1461 = vadd.f32 %v1451, %v107
  %1463 = vrot.lane.b32.xlu0 %v1461, 64
  %v1464 = vpop.permute.xlu0 %1463
  %v1466 = vmul.f32 %v1460, %v1464
  %1468 = vrot.lane.b32.xlu0 %v1466, 64
  %v1469 = vpop.permute.xlu0 %1468
  %v1471 = vadd.f32 %v1378, %v1469
  %v1472 = vtanh.pop %v1471
  %v1473 = vsub.f32 1.0, %v1460
  %1475 = vrot.lane.b32.xlu0 %v1472, 96
  %v1476 = vpop.permute.xlu0 %1475
  %v1478 = vmul.f32 %v1473, %v1476
  %v1479 = vmul.f32 %v1460, %v1376
  %v1480 = vadd.f32 %v1478, %v1479
  %s1481 = scalar_lea.vmem %s0, 112
  %v1482 = vld [vmem:[%s1481] sm:$0xff]
  %1484 = vrot.lane.b32.xlu0 %v1480, 96
  %v1485 = vpop.permute.xlu0 %1484
  %v1486 = vsel %vm20, %v1485, 0
  %1488 = vmatprep.subr.mxu0 0.0
  %1489 = vmatpush1.msra.mxu0 %v14
  %1490 = vmatprep.subr.mxu0 0.0
  %1491 = vmatpush1.msra.mxu0 %v15
  %1492 = vmatprep.subr.mxu0 0.0
  %1493 = vmatpush1.msra.mxu0 %v16
  %1494 = vmatprep.subr.mxu0 0.0
  %1495 = vmatpush1.msra.mxu0 %v17
  %1496 = vmatprep.subr.mxu0 0.0
  %1497 = vmatpush1.msra.mxu0 0.0
  %1498 = vmatprep.subr.mxu0 0.0
  %1499 = vmatpush1.msra.mxu0 0.0
  %1500 = vmatprep.subr.mxu0 0.0
  %1501 = vmatpush1.msra.mxu0 0.0
  %1502 = vmatprep.subr.mxu0 0.0
  %1503 = vmatpush1.msra.mxu0 0.0
  %1504 = vmatprep.subr.mxu0 0.0
  %1505 = vmatpush1.msra.mxu0 0.0
  %1506 = vmatprep.subr.mxu0 0.0
  %1507 = vmatpush1.msra.mxu0 0.0
  %1508 = vmatprep.subr.mxu0 0.0
  %1509 = vmatpush1.msra.mxu0 0.0
  %1510 = vmatprep.subr.mxu0 0.0
  %1511 = vmatpush1.msra.mxu0 0.0
  %1512 = vmatprep.subr.mxu0 0.0
  %1513 = vmatpush1.msra.mxu0 0.0
  %1514 = vmatprep.subr.mxu0 0.0
  %1515 = vmatpush1.msra.mxu0 0.0
  %1516 = vmatprep.subr.mxu0 0.0
  %1517 = vmatpush1.msra.mxu0 0.0
  %1518 = vmatprep.subr.mxu0 0.0
  %1519 = vmatpush1.msra.mxu0 0.0
  %1520 = vmatprep.subr.mxu0 0.0
  %1521 = vmatpush1.msra.mxu0 0.0
  %1522 = vmatprep.subr.mxu0 0.0
  %1523 = vmatpush1.msra.mxu0 0.0
  %1524 = vmatprep.subr.mxu0 0.0
  %1525 = vmatpush1.msra.mxu0 0.0
  %1526 = vmatprep.subr.mxu0 0.0
  %1527 = vmatpush1.msra.mxu0 0.0
  %1528 = vmatprep.subr.mxu0 0.0
  %1529 = vmatpush1.msra.mxu0 0.0
  %1530 = vmatprep.subr.mxu0 0.0
  %1531 = vmatpush1.msra.mxu0 0.0
  %1532 = vmatprep.subr.mxu0 0.0
  %1533 = vmatpush1.msra.mxu0 0.0
  %1534 = vmatprep.subr.mxu0 0.0
  %1535 = vmatpush1.msra.mxu0 0.0
  %1536 = vmatprep.subr.mxu0 0.0
  %1537 = vmatpush1.msra.mxu0 0.0
  %1538 = vmatprep.subr.mxu0 0.0
  %1539 = vmatpush1.msra.mxu0 0.0
  %1540 = vmatprep.subr.mxu0 0.0
  %1541 = vmatpush1.msra.mxu0 0.0
  %1542 = vmatprep.subr.mxu0 0.0
  %1543 = vmatpush1.msra.mxu0 0.0
  %1544 = vmatprep.subr.mxu0 0.0
  %1545 = vmatpush1.msra.mxu0 0.0
  %1546 = vmatprep.subr.mxu0 0.0
  %1547 = vmatpush1.msra.mxu0 0.0
  %1548 = vmatprep.subr.mxu0 0.0
  %1549 = vmatpush1.msra.mxu0 0.0
  %1550 = vmatprep.subr.mxu0 0.0
  %1551 = vmatpush1.msra.mxu0 0.0
  %1552 = vmatprep.mubr.f32.mxu0 0.0
  %1553 = vmatmul.mubr.f32.gmra.mrb[0].mxu0 %v1486
  %v1554 = vpop.f32.mrb[0].mxu0
  %v1555 = vadd.f32 0.0, %v1554
  %v1556 = vpop.f32.mrb[0].mxu0
  %1557 = vdwg.mxu0
  %v1558 = vadd.f32 %v1482, %v1555
  %v1559 = vxor.u32 %v1558, 2147483648
  %v1560 = vmul.f32 %v1559, 1.442695
  %v1561 = vpow.pop %v1560
  %v1562 = vadd.f32 %v1561, 1.0
  %v1563 = vrcp.pop %v1562
  %v1564 = vmul.f32 1.0, %v1563
  %v1565 = vadd.f32 %v1555, %v107
  %1567 = vrot.lane.b32.xlu0 %v1565, 64
  %v1568 = vpop.permute.xlu0 %1567
  %v1570 = vmul.f32 %v1564, %v1568
  %1572 = vrot.lane.b32.xlu0 %v1570, 64
  %v1573 = vpop.permute.xlu0 %1572
  %v1575 = vadd.f32 %v1482, %v1573
  %v1576 = vtanh.pop %v1575
  %v1577 = vsub.f32 1.0, %v1564
  %1579 = vrot.lane.b32.xlu0 %v1576, 96
  %v1580 = vpop.permute.xlu0 %1579
  %v1582 = vmul.f32 %v1577, %v1580
  %v1583 = vmul.f32 %v1564, %v1480
  %v1584 = vadd.f32 %v1582, %v1583
  %s1585 = scalar_lea.vmem %s0, 120
  %v1586 = vld [vmem:[%s1585] sm:$0xff]
  %1588 = vrot.lane.b32.xlu0 %v1584, 96
  %v1589 = vpop.permute.xlu0 %1588
  %v1590 = vsel %vm20, %v1589, 0
  %1592 = vmatprep.subr.mxu0 0.0
  %1593 = vmatpush1.msra.mxu0 %v14
  %1594 = vmatprep.subr.mxu0 0.0
  %1595 = vmatpush1.msra.mxu0 %v15
  %1596 = vmatprep.subr.mxu0 0.0
  %1597 = vmatpush1.msra.mxu0 %v16
  %1598 = vmatprep.subr.mxu0 0.0
  %1599 = vmatpush1.msra.mxu0 %v17
  %1600 = vmatprep.subr.mxu0 0.0
  %1601 = vmatpush1.msra.mxu0 0.0
  %1602 = vmatprep.subr.mxu0 0.0
  %1603 = vmatpush1.msra.mxu0 0.0
  %1604 = vmatprep.subr.mxu0 0.0
  %1605 = vmatpush1.msra.mxu0 0.0
  %1606 = vmatprep.subr.mxu0 0.0
  %1607 = vmatpush1.msra.mxu0 0.0
  %1608 = vmatprep.subr.mxu0 0.0
  %1609 = vmatpush1.msra.mxu0 0.0
  %1610 = vmatprep.subr.mxu0 0.0
  %1611 = vmatpush1.msra.mxu0 0.0
  %1612 = vmatprep.subr.mxu0 0.0
  %1613 = vmatpush1.msra.mxu0 0.0
  %1614 = vmatprep.subr.mxu0 0.0
  %1615 = vmatpush1.msra.mxu0 0.0
  %1616 = vmatprep.subr.mxu0 0.0
  %1617 = vmatpush1.msra.mxu0 0.0
  %1618 = vmatprep.subr.mxu0 0.0
  %1619 = vmatpush1.msra.mxu0 0.0
  %1620 = vmatprep.subr.mxu0 0.0
  %1621 = vmatpush1.msra.mxu0 0.0
  %1622 = vmatprep.subr.mxu0 0.0
  %1623 = vmatpush1.msra.mxu0 0.0
  %1624 = vmatprep.subr.mxu0 0.0
  %1625 = vmatpush1.msra.mxu0 0.0
  %1626 = vmatprep.subr.mxu0 0.0
  %1627 = vmatpush1.msra.mxu0 0.0
  %1628 = vmatprep.subr.mxu0 0.0
  %1629 = vmatpush1.msra.mxu0 0.0
  %1630 = vmatprep.subr.mxu0 0.0
  %1631 = vmatpush1.msra.mxu0 0.0
  %1632 = vmatprep.subr.mxu0 0.0
  %1633 = vmatpush1.msra.mxu0 0.0
  %1634 = vmatprep.subr.mxu0 0.0
  %1635 = vmatpush1.msra.mxu0 0.0
  %1636 = vmatprep.subr.mxu0 0.0
  %1637 = vmatpush1.msra.mxu0 0.0
  %1638 = vmatprep.subr.mxu0 0.0
  %1639 = vmatpush1.msra.mxu0 0.0
  %1640 = vmatprep.subr.mxu0 0.0
  %1641 = vmatpush1.msra.mxu0 0.0
  %1642 = vmatprep.subr.mxu0 0.0
  %1643 = vmatpush1.msra.mxu0 0.0
  %1644 = vmatprep.subr.mxu0 0.0
  %1645 = vmatpush1.msra.mxu0 0.0
  %1646 = vmatprep.subr.mxu0 0.0
  %1647 = vmatpush1.msra.mxu0 0.0
  %1648 = vmatprep.subr.mxu0 0.0
  %1649 = vmatpush1.msra.mxu0 0.0
  %1650 = vmatprep.subr.mxu0 0.0
  %1651 = vmatpush1.msra.mxu0 0.0
  %1652 = vmatprep.subr.mxu0 0.0
  %1653 = vmatpush1.msra.mxu0 0.0
  %1654 = vmatprep.subr.mxu0 0.0
  %1655 = vmatpush1.msra.mxu0 0.0
  %1656 = vmatprep.mubr.f32.mxu0 0.0
  %1657 = vmatmul.mubr.f32.gmra.mrb[0].mxu0 %v1590
  %v1658 = vpop.f32.mrb[0].mxu0
  %v1659 = vadd.f32 0.0, %v1658
  %v1660 = vpop.f32.mrb[0].mxu0
  %1661 = vdwg.mxu0
  %v1662 = vadd.f32 %v1586, %v1659
  %v1663 = vxor.u32 %v1662, 2147483648
  %v1664 = vmul.f32 %v1663, 1.442695
  %v1665 = vpow.pop %v1664
  %v1666 = vadd.f32 %v1665, 1.0
  %v1667 = vrcp.pop %v1666
  %v1668 = vmul.f32 1.0, %v1667
  %v1669 = vadd.f32 %v1659, %v107
  %1671 = vrot.lane.b32.xlu0 %v1669, 64
  %v1672 = vpop.permute.xlu0 %1671
  %v1674 = vmul.f32 %v1668, %v1672
  %1676 = vrot.lane.b32.xlu0 %v1674, 64
  %v1677 = vpop.permute.xlu0 %1676
  %v1679 = vadd.f32 %v1586, %v1677
  %v1680 = vtanh.pop %v1679
  %v1681 = vsub.f32 1.0, %v1668
  %1683 = vrot.lane.b32.xlu0 %v1680, 96
  %v1684 = vpop.permute.xlu0 %1683
  %v1686 = vmul.f32 %v1681, %v1684
  %v1687 = vmul.f32 %v1668, %v1584
  %v1688 = vadd.f32 %v1686, %v1687
  %1690 = vrot.lane.b32.xlu0 %v1688, 96
  %v1691 = vpop.permute.xlu0 %1690
  %1693 = vst.msk [vmem:[%s3] sm:$0xff] %vm20, %v1691
  // Predicated region
  $region14: #{genc_gar_forward.3} parent=0 // pred_check
    _
  $region15: #{genc_gar_forward.3} parent=0 // pred_check_branch
    %1695 = sbr.rel (0) target = $region17
  $region16: #{genc_gar_forward.3} parent=0 // pred_region
    _
  $region17: #{genc_gar_forward.3} parent=0 // pred_fallthru
    _
  // Predicated region
  $region18: #{genc_gar_forward.3} parent=0 // pred_check
    _
  $region19: #{genc_gar_forward.3} parent=0 // pred_check_branch
    %1697 = sbr.rel (0) target = $region21
  $region20: #{genc_gar_forward.3} parent=0 // pred_region
    _
  $region21: #{genc_gar_forward.3} parent=0 // pred_fallthru
    _

</llo_original>
